<compile_context>
chip_gen: v7x
topology: tpu7x:2x2x1
jax: 0.10.0
libtpu: 0.0.40
codegen_flags: <defaults>
</compile_context>

<pallas_src>
import jax
import jax.numpy as jnp
from jax.experimental import pallas as pl
from jax.experimental.pallas import tpu as pltpu

EPS = 1e-5
LANES = 128      # Cout (16 / 32) zero-padded to 128 lanes -> lane-dense MXU columns / stores
N_TILES = 2      # grid steps per pallas_call: even 2-way split for dual-TC v7x,
                 # only 2 (cheap) steps on single-TC v5e / v6e.

CONV1 = dict(ksize=(2, 8), stride=(1, 2), pad=(1, 3), cin=1, cout=16)
CONV2 = dict(ksize=(8, 8), stride=(1, 2), pad=(3, 3), cin=16, cout=32)


def _round_up(x, m):
    return (x + m - 1) // m * m


# ----------------------------------------------------------------------------
# Pallas kernels
# ----------------------------------------------------------------------------
def conv_stats_kernel(p_ref, w_ref, o_ref, s_ref):
    """(TILE, K) bf16 patches @ (K, 128) bf16 weights on the MXU (f32 accumulation).
    Raw conv output is stored in bf16; per-tile per-channel sum / sum-of-squares
    (f32) are emitted in the same pass for the streamed two-phase BatchNorm.
    The axis-0 stat reductions ride the MXU (ones @ acc): for conv1 the contraction
    is only K=16 deep so the MXU is nearly idle, while a VPU/XLU cross-sublane
    reduce would be the slot that saturates first."""
    acc = jnp.dot(p_ref[...], w_ref[...], preferred_element_type=jnp.float32)
    o_ref[...] = acc.astype(o_ref.dtype)

    ones = jnp.ones((8, acc.shape[0]), jnp.float32)
    ssum = jnp.dot(ones, acc, preferred_element_type=jnp.float32)[0:1, :]
    ssq = jnp.dot(ones, acc * acc, preferred_element_type=jnp.float32)[0:1, :]
    s_ref[0, 0:1, :] = ssum          # direct slice stores, no per-tile concat
    s_ref[0, 1:2, :] = ssq


def bn_relu_pool_kernel(x_ref, scale_ref, shift_ref, o_ref):
    """BatchNorm (precomputed per-channel scale/shift, f32) + ReLU fused with
    AvgPool2d((1,2)).  x_ref block is (tp, 2, LANES) bf16; the middle axis holds
    width-adjacent output rows."""
    y = jnp.maximum(x_ref[...].astype(jnp.float32) * scale_ref[...] + shift_ref[...], 0.0)
    o_ref[...] = 0.5 * (y[:, 0, :] + y[:, 1, :])


# ----------------------------------------------------------------------------
# pallas_call wrappers
# ----------------------------------------------------------------------------
def _conv_matmul_stats(patches_bf16, w_bf16, m_true):
    """Tiled conv-as-matmul (bf16 raw output) with per-tile partial BN statistics."""
    m_pad, k = patches_bf16.shape
    assert m_pad % N_TILES == 0
    tm = m_pad // N_TILES
    conv_raw, stats = pl.pallas_call(
        conv_stats_kernel,
        grid=(N_TILES,),
        in_specs=[
            pl.BlockSpec((tm, k), lambda i: (i, 0)),          # streamed patch tiles
            pl.BlockSpec((k, LANES), lambda i: (0, 0)),       # resident weight
        ],
        out_specs=(
            pl.BlockSpec((tm, LANES), lambda i: (i, 0)),      # raw conv (bf16, lane-dense)
            pl.BlockSpec((1, 2, LANES), lambda i: (i, 0, 0)), # per-tile sum / sumsq (f32)
        ),
        out_shape=(
            jax.ShapeDtypeStruct((m_pad, LANES), jnp.bfloat16),
            jax.ShapeDtypeStruct((N_TILES, 2, LANES), jnp.float32),
        ),
        compiler_params=pltpu.CompilerParams(dimension_semantics=("parallel",)),
    )(patches_bf16, w_bf16)

    # Finalize batch statistics (tiny).  Zero-padded rows/channels contribute 0 to
    # both sums, so dividing by the true row count gives exact batch stats.
    tot = jnp.sum(stats, axis=0)                 # (2, LANES) f32
    mean = tot[0] / m_true
    var = jnp.maximum(tot[1] / m_true - mean * mean, 0.0)   # biased var (train-mode BN)
    return conv_raw, mean, var


def _bn_relu_pool(conv_raw_bf16, mean, var, gamma_pad, beta_pad):
    """Final BN + ReLU fused with AvgPool2d((1,2)) over width-adjacent rows."""
    scale = gamma_pad * jax.lax.rsqrt(var + EPS)             # (LANES,) f32
    shift = beta_pad - mean * scale
    m_pad = conv_raw_bf16.shape[0]
    pairs = m_pad // 2
    nt = N_TILES if pairs % N_TILES == 0 else 1
    tp = pairs // nt
    x3 = conv_raw_bf16.reshape(pairs, 2, LANES)              # pair width-adjacent rows
    return pl.pallas_call(
        bn_relu_pool_kernel,
        grid=(nt,),
        in_specs=[
            pl.BlockSpec((tp, 2, LANES), lambda i: (i, 0, 0)),
            pl.BlockSpec((1, 1, LANES), lambda i: (0, 0, 0)),
            pl.BlockSpec((1, 1, LANES), lambda i: (0, 0, 0)),
        ],
        out_specs=pl.BlockSpec((tp, LANES), lambda i: (i, 0)),
        out_shape=jax.ShapeDtypeStruct((pairs, LANES), jnp.float32),
        compiler_params=pltpu.CompilerParams(dimension_semantics=("parallel",)),
    )(x3,
      scale.reshape(1, 1, LANES).astype(jnp.float32),
      shift.reshape(1, 1, LANES).astype(jnp.float32))


# ----------------------------------------------------------------------------
# JAX glue: im2col patch extraction (data movement only, no FLOPs)
# ----------------------------------------------------------------------------
def _extract_patches_nhwc(x, ksize, stride, pad):
    N, H, W, C = x.shape
    kh, kw = ksize
    sh, sw = stride
    ph, pw = pad
    xp = jnp.pad(x, ((0, 0), (ph, ph), (pw, pw), (0, 0)))
    Ho = (H + 2 * ph - kh) // sh + 1
    Wo = (W + 2 * pw - kw) // sw + 1
    cols = []
    for i in range(kh):
        for j in range(kw):
            patch = jax.lax.slice(
                xp,
                (0, i, j, 0),
                (N, i + (Ho - 1) * sh + 1, j + (Wo - 1) * sw + 1, C),
                (1, sh, sw, 1),
            )
            cols.append(patch)
    patches = jnp.concatenate(cols, axis=-1)       # (N,Ho,Wo, kh*kw*C), (i,j,c) order
    return patches.reshape(N * Ho * Wo, kh * kw * C), (Ho, Wo)


def _conv_stage(x_nhwc_bf16, w_hwio, cfg):
    """bf16 im2col + tiled Pallas matmul + streamed BN statistics."""
    N = x_nhwc_bf16.shape[0]
    kh, kw = cfg["ksize"]
    cin, cout = cfg["cin"], cfg["cout"]
    patches, (Ho, Wo) = _extract_patches_nhwc(
        x_nhwc_bf16, cfg["ksize"], cfg["stride"], cfg["pad"])   # bf16, built in bf16
    M = N * Ho * Wo
    tm = _round_up(-(-M // N_TILES), 8)
    m_pad = tm * N_TILES
    if m_pad > M:
        patches = jnp.pad(patches, ((0, m_pad - M), (0, 0)))    # zero rows -> 0 stats

    # Zero-pad the weight's N dim to 128 lanes (unmasked stores, lane-dense MXU cols).
    w2d = w_hwio.reshape(kh * kw * cin, cout)
    w_bf16 = jnp.pad(w2d, ((0, 0), (0, LANES - cout))).astype(jnp.bfloat16)

    conv_raw, mean, var = _conv_matmul_stats(patches, w_bf16, float(M))
    return conv_raw, mean, var, M, (Ho, Wo)


# ----------------------------------------------------------------------------
# Parameters (deterministic in-script init; shapes follow the PyTorch module)
# ----------------------------------------------------------------------------
def init_encoder_layer1_params(key):
    ks = jax.random.split(key, 6)

    def conv_init(k, kh, kw, cin, cout):
        fan_in = kh * kw * cin
        return jax.random.normal(k, (kh, kw, cin, cout), jnp.float32) * (2.0 / fan_in) ** 0.5

    return dict(
        w1=conv_init(ks[0], 2, 8, 1, 16),
        g1=1.0 + 0.1 * jax.random.normal(ks[1], (16,), jnp.float32),
        b1=0.1 * jax.random.normal(ks[2], (16,), jnp.float32),
        w2=conv_init(ks[3], 8, 8, 16, 32),
        g2=1.0 + 0.1 * jax.random.normal(ks[4], (32,), jnp.float32),
        b2=0.1 * jax.random.normal(ks[5], (32,), jnp.float32),
    )


# ----------------------------------------------------------------------------
# encoder_layer1 forward ('one_hot') using the Pallas kernels
# ----------------------------------------------------------------------------
def encoder_layer1_forward(params, x_nchw):
    N = x_nchw.shape[0]
    x = jnp.transpose(x_nchw, (0, 2, 3, 1)).astype(jnp.bfloat16)     # NHWC, C=1, bf16 operand

    # ---- stage 1: conv1 + streamed BN1 statistics (one pallas_call) ------------
    c1_raw, mean1, var1, M1, (H1, W1) = _conv_stage(x, params["w1"], CONV1)

    # BN1 affine + ReLU folded into the conv2 patch producer: applied to the small
    # 16-channel tensor before the 64x im2col expansion (cheaper than per-column
    # application inside the conv2 kernel; conv2 zero padding stays exact, relu(0)=0).
    # Dropout(0.3) = identity (see TODO at top).  Stats/BN math stays f32.
    scale1 = params["g1"] * jax.lax.rsqrt(var1[:CONV1["cout"]] + EPS)
    shift1 = params["b1"] - mean1[:CONV1["cout"]] * scale1
    act1 = jnp.maximum(
        c1_raw[:M1, :CONV1["cout"]].astype(jnp.float32) * scale1 + shift1, 0.0
    ).astype(jnp.bfloat16).reshape(N, H1, W1, CONV1["cout"])

    # ---- stage 2: conv2 + BN2 stats, then fused BN2 + ReLU + AvgPool((1,2)) ----
    c2_raw, mean2, var2, M2, (H2, W2) = _conv_stage(act1, params["w2"], CONV2)
    assert W2 % 2 == 0, "fused AvgPool2d((1,2)) pairing assumes an even output width"
    g2 = jnp.pad(params["g2"], (0, LANES - CONV2["cout"]))
    b2 = jnp.pad(params["b2"], (0, LANES - CONV2["cout"]))
    pooled = _bn_relu_pool(c2_raw, mean2, var2, g2, b2)              # (m2_pad//2, 128) f32
    pooled = pooled[:M2 // 2, :CONV2["cout"]].reshape(N, H2, W2 // 2, CONV2["cout"])

    return jnp.transpose(pooled, (0, 3, 1, 2))                       # NCHW


# ----------------------------------------------------------------------------
# Pure-JAX reference (f32, HIGHEST precision) for correctness check
# ----------------------------------------------------------------------------
def _reference_forward(params, x_nchw):
    x = jnp.transpose(x_nchw, (0, 2, 3, 1)).astype(jnp.float32)

    def conv(a, w, strides, pad):
        return jax.lax.conv_general_dilated(
            a, w, window_strides=strides, padding=pad,
            dimension_numbers=("NHWC", "HWIO", "NHWC"),
            precision=jax.lax.Precision.HIGHEST)

    def bn(a, g, b):
        mean = jnp.mean(a, axis=(0, 1, 2), keepdims=True)
        var = jnp.mean((a - mean) ** 2, axis=(0, 1, 2), keepdims=True)
        return (a - mean) * jax.lax.rsqrt(var + EPS) * g.reshape(1, 1, 1, -1) + b.reshape(1, 1, 1, -1)

    h = jax.nn.relu(bn(conv(x, params["w1"], (1, 2), [(1, 1), (3, 3)]), params["g1"], params["b1"]))
    h = jax.nn.relu(bn(conv(h, params["w2"], (1, 2), [(3, 3), (3, 3)]), params["g2"], params["b2"]))
    Nb, H2, W2, C = h.shape
    h = h.reshape(Nb, H2, W2 // 2, 2, C).mean(axis=3)                # AvgPool2d((1,2))
    return jnp.transpose(h, (0, 3, 1, 2))


if __name__ == "__main__":
    key = jax.random.PRNGKey(0)
    kp, kx = jax.random.split(key)
    params = init_encoder_layer1_params(kp)

    # (N, C=1, H, W) — one_hot encoder input
    x = jax.random.normal(kx, (2, 1, 16, 32), jnp.float32)

    y = jax.block_until_ready(jax.jit(encoder_layer1_forward)(params, x))
    y_ref = _reference_forward(params, x)

    assert y.shape == (2, 32, 16, 4), y.shape
    # bf16 MXU operands + bf16-stored conv intermediates vs f32 HIGHEST reference
    # -> loose tolerance (BN statistics and all accumulation remain f32).
    max_err = float(jnp.max(jnp.abs(y - y_ref)))
    assert max_err < 7e-2, max_err

    print("KERNEL_OK")
</pallas_src>

<mosaic_0001>
module attributes {stable_mosaic.version = 11 : i64} {
  func.func @conv_stats_kernel(%arg0: i32, %arg1: memref<272x16xbf16, #tpu.memory_space<vmem>>, %arg2: memref<16x128xbf16, #tpu.memory_space<vmem>>, %arg3: memref<272x128xbf16, #tpu.memory_space<vmem>>, %arg4: memref<1x2x128xf32, #tpu.memory_space<vmem>>) attributes {dimension_semantics = [#tpu.dimension_semantics<parallel>], iteration_bounds = array<i64: 2>, scalar_prefetch = 0 : i64, scratch_operands = 0 : i64, tpu.core_type = #tpu.core_type<tc>, window_params = [{transform_indices = @transform_0, window_bounds = array<i64: 272, 16>}, {pipeline_mode = #tpu.pipeline_mode<synchronous>, transform_indices = @transform_1, window_bounds = array<i64: 16, 128>}, {transform_indices = @transform_2, window_bounds = array<i64: 272, 128>}, {transform_indices = @transform_3, window_bounds = array<i64: 1, 2, 128>}]} {
    %c0 = arith.constant 0 : index
    %c0_0 = arith.constant 0 : index
    %0 = vector.load %arg1[%c0, %c0_0] : memref<272x16xbf16, #tpu.memory_space<vmem>>, vector<272x16xbf16>
    %c0_1 = arith.constant 0 : index
    %c0_2 = arith.constant 0 : index
    %1 = vector.load %arg2[%c0_1, %c0_2] : memref<16x128xbf16, #tpu.memory_space<vmem>>, vector<16x128xbf16>
    %cst = arith.constant dense<0.000000e+00> : vector<272x128xf32>
    %2 = tpu.matmul %0, %1, %cst {dimension_numbers = #tpu.dot_dimension_numbers<[1], [0], [0], [1], [0, 0, 1, 1], [], []>} : vector<272x16xbf16>, vector<16x128xbf16>, vector<272x128xf32> -> vector<272x128xf32>
    %3 = arith.truncf %2 : vector<272x128xf32> to vector<272x128xbf16>
    %c0_3 = arith.constant 0 : index
    %c0_4 = arith.constant 0 : index
    %4 = vector.load %arg3[%c0_3, %c0_4] : memref<272x128xbf16, #tpu.memory_space<vmem>>, vector<272x128xbf16>
    tpu.vector_store %arg3[%c0_3, %c0_4], %3 {strides = array<i32>} : memref<272x128xbf16, #tpu.memory_space<vmem>>, vector<272x128xbf16>,
    %cst_5 = arith.constant 1.000000e+00 : f32
    %5 = vector.broadcast %cst_5 : f32 to vector<8x272xf32>
    %cst_6 = arith.constant dense<0.000000e+00> : vector<8x128xf32>
    %6 = tpu.matmul %5, %2, %cst_6 {dimension_numbers = #tpu.dot_dimension_numbers<[1], [0], [0], [1], [0, 0, 1, 1], [], []>} : vector<8x272xf32>, vector<272x128xf32>, vector<8x128xf32> -> vector<8x128xf32>
    %7 = vector.extract_strided_slice %6 {offsets = [0, 0], sizes = [1, 128], strides = [1, 1]} : vector<8x128xf32> to vector<1x128xf32>
    %8 = arith.mulf %2, %2 : vector<272x128xf32>
    %cst_7 = arith.constant dense<0.000000e+00> : vector<8x128xf32>
    %9 = tpu.matmul %5, %8, %cst_7 {dimension_numbers = #tpu.dot_dimension_numbers<[1], [0], [0], [1], [0, 0, 1, 1], [], []>} : vector<8x272xf32>, vector<272x128xf32>, vector<8x128xf32> -> vector<8x128xf32>
    %10 = vector.extract_strided_slice %9 {offsets = [0, 0], sizes = [1, 128], strides = [1, 1]} : vector<8x128xf32> to vector<1x128xf32>
    %c0_8 = arith.constant 0 : index
    %c0_9 = arith.constant 0 : index
    %c0_10 = arith.constant 0 : index
    %11 = vector.load %arg4[%c0_8, %c0_9, %c0_10] : memref<1x2x128xf32, #tpu.memory_space<vmem>>, vector<1x1x128xf32>
    %12 = vector.shape_cast %11 : vector<1x1x128xf32> to vector<1x128xf32>
    %13 = vector.shape_cast %7 : vector<1x128xf32> to vector<1x1x128xf32>
    tpu.vector_store %arg4[%c0_8, %c0_9, %c0_10], %13 {strides = array<i32>} : memref<1x2x128xf32, #tpu.memory_space<vmem>>, vector<1x1x128xf32>,
    %c0_11 = arith.constant 0 : index
    %c1 = arith.constant 1 : index
    %c0_12 = arith.constant 0 : index
    %14 = vector.load %arg4[%c0_11, %c1, %c0_12] : memref<1x2x128xf32, #tpu.memory_space<vmem>>, vector<1x1x128xf32>
    %15 = vector.shape_cast %14 : vector<1x1x128xf32> to vector<1x128xf32>
    %16 = vector.shape_cast %10 : vector<1x128xf32> to vector<1x1x128xf32>
    tpu.vector_store %arg4[%c0_11, %c1, %c0_12], %16 {strides = array<i32>} : memref<1x2x128xf32, #tpu.memory_space<vmem>>, vector<1x1x128xf32>,
    return
  }
  func.func @transform_0(%arg0: i32) -> (i32, i32) {
    %c0_i32 = arith.constant 0 : i32
    %c0_i32_0 = arith.constant 0 : i32
    return %arg0, %c0_i32 : i32, i32
  }
  func.func @transform_1(%arg0: i32) -> (i32, i32) {
    %c0_i32 = arith.constant 0 : i32
    %c0_i32_0 = arith.constant 0 : i32
    %c0_i32_1 = arith.constant 0 : i32
    return %c0_i32, %c0_i32_0 : i32, i32
  }
  func.func @transform_2(%arg0: i32) -> (i32, i32) {
    %c0_i32 = arith.constant 0 : i32
    %c0_i32_0 = arith.constant 0 : i32
    return %arg0, %c0_i32 : i32, i32
  }
  func.func @transform_3(%arg0: i32) -> (i32, i32, i32) {
    %c0_i32 = arith.constant 0 : i32
    %c0_i32_0 = arith.constant 0 : i32
    %c0_i32_1 = arith.constant 0 : i32
    return %arg0, %c0_i32, %c0_i32_0 : i32, i32, i32
  }
}

module attributes {stable_mosaic.version = 11 : i64} {
  func.func @conv_stats_kernel(%arg0: i32, %arg1: memref<128x1024xbf16, #tpu.memory_space<vmem>>, %arg2: memref<1024x128xbf16, #tpu.memory_space<vmem>>, %arg3: memref<128x128xbf16, #tpu.memory_space<vmem>>, %arg4: memref<1x2x128xf32, #tpu.memory_space<vmem>>) attributes {dimension_semantics = [#tpu.dimension_semantics<parallel>], iteration_bounds = array<i64: 2>, scalar_prefetch = 0 : i64, scratch_operands = 0 : i64, tpu.core_type = #tpu.core_type<tc>, window_params = [{transform_indices = @transform_0, window_bounds = array<i64: 128, 1024>}, {pipeline_mode = #tpu.pipeline_mode<synchronous>, transform_indices = @transform_1, window_bounds = array<i64: 1024, 128>}, {transform_indices = @transform_2, window_bounds = array<i64: 128, 128>}, {transform_indices = @transform_3, window_bounds = array<i64: 1, 2, 128>}]} {
    %c0 = arith.constant 0 : index
    %c0_0 = arith.constant 0 : index
    %0 = vector.load %arg1[%c0, %c0_0] : memref<128x1024xbf16, #tpu.memory_space<vmem>>, vector<128x1024xbf16>
    %c0_1 = arith.constant 0 : index
    %c0_2 = arith.constant 0 : index
    %1 = vector.load %arg2[%c0_1, %c0_2] : memref<1024x128xbf16, #tpu.memory_space<vmem>>, vector<1024x128xbf16>
    %cst = arith.constant dense<0.000000e+00> : vector<128x128xf32>
    %2 = tpu.matmul %0, %1, %cst {dimension_numbers = #tpu.dot_dimension_numbers<[1], [0], [0], [1], [0, 0, 1, 1], [], []>} : vector<128x1024xbf16>, vector<1024x128xbf16>, vector<128x128xf32> -> vector<128x128xf32>
    %3 = arith.truncf %2 : vector<128x128xf32> to vector<128x128xbf16>
    %c0_3 = arith.constant 0 : index
    %c0_4 = arith.constant 0 : index
    %4 = vector.load %arg3[%c0_3, %c0_4] : memref<128x128xbf16, #tpu.memory_space<vmem>>, vector<128x128xbf16>
    tpu.vector_store %arg3[%c0_3, %c0_4], %3 {strides = array<i32>} : memref<128x128xbf16, #tpu.memory_space<vmem>>, vector<128x128xbf16>,
    %cst_5 = arith.constant 1.000000e+00 : f32
    %5 = vector.broadcast %cst_5 : f32 to vector<8x128xf32>
    %cst_6 = arith.constant dense<0.000000e+00> : vector<8x128xf32>
    %6 = tpu.matmul %5, %2, %cst_6 {dimension_numbers = #tpu.dot_dimension_numbers<[1], [0], [0], [1], [0, 0, 1, 1], [], []>} : vector<8x128xf32>, vector<128x128xf32>, vector<8x128xf32> -> vector<8x128xf32>
    %7 = vector.extract_strided_slice %6 {offsets = [0, 0], sizes = [1, 128], strides = [1, 1]} : vector<8x128xf32> to vector<1x128xf32>
    %8 = arith.mulf %2, %2 : vector<128x128xf32>
    %cst_7 = arith.constant dense<0.000000e+00> : vector<8x128xf32>
    %9 = tpu.matmul %5, %8, %cst_7 {dimension_numbers = #tpu.dot_dimension_numbers<[1], [0], [0], [1], [0, 0, 1, 1], [], []>} : vector<8x128xf32>, vector<128x128xf32>, vector<8x128xf32> -> vector<8x128xf32>
    %10 = vector.extract_strided_slice %9 {offsets = [0, 0], sizes = [1, 128], strides = [1, 1]} : vector<8x128xf32> to vector<1x128xf32>
    %c0_8 = arith.constant 0 : index
    %c0_9 = arith.constant 0 : index
    %c0_10 = arith.constant 0 : index
    %11 = vector.load %arg4[%c0_8, %c0_9, %c0_10] : memref<1x2x128xf32, #tpu.memory_space<vmem>>, vector<1x1x128xf32>
    %12 = vector.shape_cast %11 : vector<1x1x128xf32> to vector<1x128xf32>
    %13 = vector.shape_cast %7 : vector<1x128xf32> to vector<1x1x128xf32>
    tpu.vector_store %arg4[%c0_8, %c0_9, %c0_10], %13 {strides = array<i32>} : memref<1x2x128xf32, #tpu.memory_space<vmem>>, vector<1x1x128xf32>,
    %c0_11 = arith.constant 0 : index
    %c1 = arith.constant 1 : index
    %c0_12 = arith.constant 0 : index
    %14 = vector.load %arg4[%c0_11, %c1, %c0_12] : memref<1x2x128xf32, #tpu.memory_space<vmem>>, vector<1x1x128xf32>
    %15 = vector.shape_cast %14 : vector<1x1x128xf32> to vector<1x128xf32>
    %16 = vector.shape_cast %10 : vector<1x128xf32> to vector<1x1x128xf32>
    tpu.vector_store %arg4[%c0_11, %c1, %c0_12], %16 {strides = array<i32>} : memref<1x2x128xf32, #tpu.memory_space<vmem>>, vector<1x1x128xf32>,
    return
  }
  func.func @transform_0(%arg0: i32) -> (i32, i32) {
    %c0_i32 = arith.constant 0 : i32
    %c0_i32_0 = arith.constant 0 : i32
    return %arg0, %c0_i32 : i32, i32
  }
  func.func @transform_1(%arg0: i32) -> (i32, i32) {
    %c0_i32 = arith.constant 0 : i32
    %c0_i32_0 = arith.constant 0 : i32
    %c0_i32_1 = arith.constant 0 : i32
    return %c0_i32, %c0_i32_0 : i32, i32
  }
  func.func @transform_2(%arg0: i32) -> (i32, i32) {
    %c0_i32 = arith.constant 0 : i32
    %c0_i32_0 = arith.constant 0 : i32
    return %arg0, %c0_i32 : i32, i32
  }
  func.func @transform_3(%arg0: i32) -> (i32, i32, i32) {
    %c0_i32 = arith.constant 0 : i32
    %c0_i32_0 = arith.constant 0 : i32
    %c0_i32_1 = arith.constant 0 : i32
    return %arg0, %c0_i32, %c0_i32_0 : i32, i32, i32
  }
}

module attributes {stable_mosaic.version = 11 : i64} {
  func.func @bn_relu_pool_kernel(%arg0: i32, %arg1: memref<64x2x128xbf16, #tpu.memory_space<vmem>>, %arg2: memref<1x1x128xf32, #tpu.memory_space<vmem>>, %arg3: memref<1x1x128xf32, #tpu.memory_space<vmem>>, %arg4: memref<64x128xf32, #tpu.memory_space<vmem>>) attributes {dimension_semantics = [#tpu.dimension_semantics<parallel>], iteration_bounds = array<i64: 2>, scalar_prefetch = 0 : i64, scratch_operands = 0 : i64, tpu.core_type = #tpu.core_type<tc>, window_params = [{transform_indices = @transform_0, window_bounds = array<i64: 64, 2, 128>}, {pipeline_mode = #tpu.pipeline_mode<synchronous>, transform_indices = @transform_1, window_bounds = array<i64: 1, 1, 128>}, {pipeline_mode = #tpu.pipeline_mode<synchronous>, transform_indices = @transform_2, window_bounds = array<i64: 1, 1, 128>}, {transform_indices = @transform_3, window_bounds = array<i64: 64, 128>}]} {
    %c0 = arith.constant 0 : index
    %c0_0 = arith.constant 0 : index
    %c0_1 = arith.constant 0 : index
    %0 = vector.load %arg1[%c0, %c0_0, %c0_1] : memref<64x2x128xbf16, #tpu.memory_space<vmem>>, vector<64x2x128xbf16>
    %1 = arith.extf %0 : vector<64x2x128xbf16> to vector<64x2x128xf32>
    %c0_2 = arith.constant 0 : index
    %c0_3 = arith.constant 0 : index
    %c0_4 = arith.constant 0 : index
    %2 = vector.load %arg2[%c0_2, %c0_3, %c0_4] : memref<1x1x128xf32, #tpu.memory_space<vmem>>, vector<1x1x128xf32>
    %3 = vector.broadcast %2 : vector<1x1x128xf32> to vector<64x2x128xf32>
    %4 = arith.mulf %1, %3 : vector<64x2x128xf32>
    %c0_5 = arith.constant 0 : index
    %c0_6 = arith.constant 0 : index
    %c0_7 = arith.constant 0 : index
    %5 = vector.load %arg3[%c0_5, %c0_6, %c0_7] : memref<1x1x128xf32, #tpu.memory_space<vmem>>, vector<1x1x128xf32>
    %6 = vector.broadcast %5 : vector<1x1x128xf32> to vector<64x2x128xf32>
    %7 = arith.addf %4, %6 : vector<64x2x128xf32>
    %cst = arith.constant 0.000000e+00 : f32
    %8 = vector.broadcast %cst : f32 to vector<64x2x128xf32>
    %9 = arith.maximumf %7, %8 : vector<64x2x128xf32>
    %10 = vector.extract_strided_slice %9 {offsets = [0, 0, 0], sizes = [64, 1, 128], strides = [1, 1, 1]} : vector<64x2x128xf32> to vector<64x1x128xf32>
    %11 = vector.shape_cast %10 : vector<64x1x128xf32> to vector<64x128xf32>
    %12 = vector.extract_strided_slice %9 {offsets = [0, 1, 0], sizes = [64, 1, 128], strides = [1, 1, 1]} : vector<64x2x128xf32> to vector<64x1x128xf32>
    %13 = vector.shape_cast %12 : vector<64x1x128xf32> to vector<64x128xf32>
    %14 = arith.addf %11, %13 : vector<64x128xf32>
    %cst_8 = arith.constant 5.000000e-01 : f32
    %15 = vector.broadcast %cst_8 : f32 to vector<64x128xf32>
    %16 = arith.mulf %15, %14 : vector<64x128xf32>
    %c0_9 = arith.constant 0 : index
    %c0_10 = arith.constant 0 : index
    %17 = vector.load %arg4[%c0_9, %c0_10] : memref<64x128xf32, #tpu.memory_space<vmem>>, vector<64x128xf32>
    tpu.vector_store %arg4[%c0_9, %c0_10], %16 {strides = array<i32>} : memref<64x128xf32, #tpu.memory_space<vmem>>, vector<64x128xf32>,
    return
  }
  func.func @transform_0(%arg0: i32) -> (i32, i32, i32) {
    %c0_i32 = arith.constant 0 : i32
    %c0_i32_0 = arith.constant 0 : i32
    %c0_i32_1 = arith.constant 0 : i32
    return %arg0, %c0_i32, %c0_i32_0 : i32, i32, i32
  }
  func.func @transform_1(%arg0: i32) -> (i32, i32, i32) {
    %c0_i32 = arith.constant 0 : i32
    %c0_i32_0 = arith.constant 0 : i32
    %c0_i32_1 = arith.constant 0 : i32
    %c0_i32_2 = arith.constant 0 : i32
    return %c0_i32, %c0_i32_0, %c0_i32_1 : i32, i32, i32
  }
  func.func @transform_2(%arg0: i32) -> (i32, i32, i32) {
    %c0_i32 = arith.constant 0 : i32
    %c0_i32_0 = arith.constant 0 : i32
    %c0_i32_1 = arith.constant 0 : i32
    %c0_i32_2 = arith.constant 0 : i32
    return %c0_i32, %c0_i32_0, %c0_i32_1 : i32, i32, i32
  }
  func.func @transform_3(%arg0: i32) -> (i32, i32) {
    %c0_i32 = arith.constant 0 : i32
    %c0_i32_0 = arith.constant 0 : i32
    return %arg0, %c0_i32 : i32, i32
  }
}

</mosaic_0001>

<llo_original>
// kernel: encoder_layer1_forward.3
$region0: #{encoder_layer1_forward.3}
  #allocation0 [shape = 'u32[]', space=smem, size = 0x4, offset = 0x4, fixed_abs, tag = 'smem constant byte address 0x4 - core index']
  #allocation1 [shape = 'u32[144,128]{1,0:T(1,128)}', space=vmem, size = 0x12000, scoped, tag = 'internal scratch']
  %s0 = inlined_call_operand.vmem [shape: bf16[544,16], index: 0, kind: input, shape index: {}]
  %s1 = inlined_call_operand.vmem [shape: bf16[16,128], index: 1, kind: input, shape index: {}]
  %s2 = inlined_call_operand.vmem [shape: bf16[544,128], index: 2, kind: output, shape index: {0}]
  %s3 = inlined_call_operand.vmem [shape: f32[2,2,128], index: 3, kind: output, shape index: {1}]
  %4 = xla_tuple %s2, %s3
  %s5 = sld [smem:[#allocation0]]
  $region49: #{encoder_layer1_forward.3} parent=0
    _
  %s7 = ssub.s32 1, %s5
  %s8 = scalar_select 0, %s7, %s5
  loop: start=0, step=1, limit=4
  $region2: #{encoder_layer1_forward.3} parent=0 // loop_pre_header
    _
  $region3: #{encoder_layer1_forward.3} parent=0 // loop_header
    %s10 = sphi 0, %s14
    %p11 = scmp.ge.s32.totalorder %s10, 4
    %s20 = sphi 0, %s22
    %s23 = sphi 0, %s20
    %s24 = sphi 0, %s23
    %s40 = sphi 0, %s24
    %s44 = sphi 0, %s44
    %s46 = sphi 0, %s44
    %s47 = sphi 0, %s46
    %s61 = sphi 0, %s47
    %s67 = sphi 0, %s69
    %s70 = sphi 0, %s67
    %s71 = sphi 0, %s70
    %s87 = sphi 0, %s71
    %s93 = sphi 0, %s95
    %s96 = sphi 0, %s93
    %s97 = sphi 0, %s96
    %s113 = sphi 0, %s97
  $region4: #{encoder_layer1_forward.3} parent=0 // loop_header_branch
    %13 = sbr.rel (%p11) target = $region8
  $region5: #{encoder_layer1_forward.3} parent=0 // loop_body
    %s15 = ssub.s32 %s10, 1
    %s16 = ssub.s32 %s10, 2
    %s17 = sadd.s32 %s10, 1
    %s18 = ssub.s32 %s10, %s17
    %p19 = scmp.eq.s32.totalorder %s18, 0
    %s21 = sadd.s32 %s20, 1
    %s22 = scalar_select %p19, %s20, %s21
    %p25 = pneg %p19
    %p26 = scmp.eq.s32.totalorder %s10, 1
    %p27 = por %p25, %p26
    %p28 = scmp.ne.s32.totalorder %s20, %s23
    %p29 = scmp.eq.s32.totalorder %s10, 0
    %p30 = por %p28, %p29
    %p31 = scmp.ne.s32.totalorder %s20, %s23
    %p32 = scmp.eq.s32.totalorder %s15, 1
    %p33 = por %p31, %p32
    %p34 = scmp.ne.s32.totalorder %s23, %s24
    %p35 = scmp.eq.s32.totalorder %s15, 0
    %p36 = por %p34, %p35
    %p37 = scmp.ne.s32.totalorder %s23, %s24
    %p38 = scmp.eq.s32.totalorder %s16, 1
    %p39 = por %p37, %p38
    %p41 = scmp.ne.s32.totalorder %s24, %s40
    %p42 = scmp.eq.s32.totalorder %s16, 0
    %p43 = por %p41, %p42
    %s45 = sadd.s32 %s44, 1
    %p48 = scmp.eq.s32.totalorder %s10, 1
    %p49 = scmp.ne.s32.totalorder %s44, %s46
    %p50 = scmp.eq.s32.totalorder %s10, 0
    %p51 = por %p49, %p50
    %p52 = scmp.ne.s32.totalorder %s44, %s46
    %p53 = scmp.eq.s32.totalorder %s15, 1
    %p54 = por %p52, %p53
    %p55 = scmp.ne.s32.totalorder %s46, %s47
    %p56 = scmp.eq.s32.totalorder %s15, 0
    %p57 = por %p55, %p56
    %p58 = scmp.ne.s32.totalorder %s46, %s47
    %p59 = scmp.eq.s32.totalorder %s16, 1
    %p60 = por %p58, %p59
    %p62 = scmp.ne.s32.totalorder %s47, %s61
    %p63 = scmp.eq.s32.totalorder %s16, 0
    %p64 = por %p62, %p63
    %s65 = ssub.s32 %s10, %s17
    %p66 = scmp.eq.s32.totalorder %s65, 0
    %s68 = sadd.s32 %s67, 1
    %s69 = scalar_select %p66, %s67, %s68
    %p72 = pneg %p66
    %p73 = scmp.eq.s32.totalorder %s10, 1
    %p74 = por %p72, %p73
    %p75 = scmp.ne.s32.totalorder %s67, %s70
    %p76 = scmp.eq.s32.totalorder %s10, 0
    %p77 = por %p75, %p76
    %p78 = scmp.ne.s32.totalorder %s67, %s70
    %p79 = scmp.eq.s32.totalorder %s15, 1
    %p80 = por %p78, %p79
    %p81 = scmp.ne.s32.totalorder %s70, %s71
    %p82 = scmp.eq.s32.totalorder %s15, 0
    %p83 = por %p81, %p82
    %p84 = scmp.ne.s32.totalorder %s70, %s71
    %p85 = scmp.eq.s32.totalorder %s16, 1
    %p86 = por %p84, %p85
    %p88 = scmp.ne.s32.totalorder %s71, %s87
    %p89 = scmp.eq.s32.totalorder %s16, 0
    %p90 = por %p88, %p89
    %s91 = ssub.s32 %s10, %s17
    %p92 = scmp.eq.s32.totalorder %s91, 0
    %s94 = sadd.s32 %s93, 1
    %s95 = scalar_select %p92, %s93, %s94
    %p98 = pneg %p92
    %p99 = scmp.eq.s32.totalorder %s10, 1
    %p100 = por %p98, %p99
    %p101 = scmp.ne.s32.totalorder %s93, %s96
    %p102 = scmp.eq.s32.totalorder %s10, 0
    %p103 = por %p101, %p102
    %p104 = scmp.ne.s32.totalorder %s93, %s96
    %p105 = scmp.eq.s32.totalorder %s15, 1
    %p106 = por %p104, %p105
    %p107 = scmp.ne.s32.totalorder %s96, %s97
    %p108 = scmp.eq.s32.totalorder %s15, 0
    %p109 = por %p107, %p108
    %p110 = scmp.ne.s32.totalorder %s96, %s97
    %p111 = scmp.eq.s32.totalorder %s16, 1
    %p112 = por %p110, %p111
    %p114 = scmp.ne.s32.totalorder %s97, %s113
    %p115 = scmp.eq.s32.totalorder %s16, 0
    %p116 = por %p114, %p115
    %p117 = scmp.le.s32.totalorder 1, %s10
    %p118 = scmp.lt.s32.totalorder %s10, 3
    %p119 = pnand %p117, %p118
    %p120 = pneg %p119
    // Predicated region
    $region9: #{encoder_layer1_forward.3} parent=5 // pred_check
      _
    $region10: #{encoder_layer1_forward.3} parent=5 // pred_check_branch
      %122 = sbr.rel (%p119) target = $region12
    $region11: #{encoder_layer1_forward.3} parent=5 // pred_region
      %s123 = ssub.s32 %s10, 1
      // Predicated region
      $region13: #{encoder_layer1_forward.3} parent=11 // pred_check
        %p124 = pneg %p57
      $region14: #{encoder_layer1_forward.3} parent=11 // pred_check_branch
        %126 = sbr.rel (%p124) target = $region16
      $region15: #{encoder_layer1_forward.3} parent=11 // pred_region
        _
      $region16: #{encoder_layer1_forward.3} parent=11 // pred_fallthru
        _
    $region12: #{encoder_layer1_forward.3} parent=5 // pred_fallthru
      _
    %p127 = scmp.lt.s32.totalorder %s10, 2
    // Predicated region
    $region17: #{encoder_layer1_forward.3} parent=5 // pred_check
      %p128 = pneg %p127
    $region18: #{encoder_layer1_forward.3} parent=5 // pred_check_branch
      %130 = sbr.rel (%p128) target = $region20
    $region19: #{encoder_layer1_forward.3} parent=5 // pred_region
      // Predicated region
      $region21: #{encoder_layer1_forward.3} parent=19 // pred_check
        %p131 = pneg %p30
      $region22: #{encoder_layer1_forward.3} parent=19 // pred_check_branch
        %133 = sbr.rel (%p131) target = $region24
      $region23: #{encoder_layer1_forward.3} parent=19 // pred_region
        %s134 = smul.u32 34, %s10
        %p135 = scmp.lt.s32.totalorder %s134, 67
        %s136 = scalar_select %p135, %s134, 67
        %s137 = smul.addr %s136, 4
        %s138 = scalar_lea.vmem %s0, %s137
        %s139 = smul.u32 34, %s10
      $region24: #{encoder_layer1_forward.3} parent=19 // pred_fallthru
        _
    $region20: #{encoder_layer1_forward.3} parent=5 // pred_fallthru
      _
    %p140 = scmp.le.s32.totalorder 1, %s10
    %p141 = scmp.lt.s32.totalorder %s10, 3
    %p142 = pnand %p140, %p141
    %p143 = pneg %p142
    // Predicated region
    $region25: #{encoder_layer1_forward.3} parent=5 // pred_check
      _
    $region26: #{encoder_layer1_forward.3} parent=5 // pred_check_branch
      %145 = sbr.rel (%p142) target = $region28
    $region27: #{encoder_layer1_forward.3} parent=5 // pred_region
      %s146 = ssub.s32 %s10, 1
      %s147 = smul.u32 34, %s15
      %p148 = scmp.lt.s32.totalorder %s147, 67
      %s149 = scalar_select %p148, %s147, 67
      %s150 = smul.addr %s149, 4
      %s151 = scalar_lea.vmem %s0, %s150
      %p152 = pneg %p36
      %p153 = pneg %p33
      %p154 = pneg %p57
      %p155 = pneg %p54
      %p156 = pneg %p83
      %p157 = pneg %p80
      %s158 = smul.u32 34, %s15
      %p159 = scmp.lt.s32.totalorder %s158, 67
      %s160 = scalar_select %p159, %s158, 67
      %s161 = smul.addr %s160, 4
      %s162 = scalar_lea.vmem %s2, %s161
      %p163 = pneg %p109
      %p164 = pneg %p106
      %p165 = scmp.lt.s32.totalorder %s15, 1
      %s166 = scalar_select %p165, %s15, 1
      %s167 = smul.addr %s166, 2
      %s168 = scalar_lea.vmem %s3, %s167
      %s169 = smul.u32 34, %s15
      %p170 = scmp.lt.s32.totalorder %s169, 67
      %s171 = scalar_select %p170, %s169, 67
      %s172 = smul.addr %s171, 4
      %s173 = scalar_lea.vmem %s0, %s172
      %s174 = smul.u32 34, %s15
      %s175 = smul.u32 34, %s15
      %p176 = scmp.lt.s32.totalorder %s175, 67
      %s177 = scalar_select %p176, %s175, 67
      %s178 = smul.addr %s177, 4
      %s179 = scalar_lea.vmem %s2, %s178
      %s180 = smul.u32 34, %s15
      %p181 = scmp.lt.s32.totalorder %s15, 1
      %s182 = scalar_select %p181, %s15, 1
      %s183 = smul.addr %s182, 2
      %s184 = scalar_lea.vmem %s3, %s183
      %v186 = vld [vmem:[%s173] sm:$0xf]
      %v187 = vld [vmem:[%s173 + $0x4] sm:$0xf]
      %v188 = vld [vmem:[%s173 + $0x8] sm:$0xf]
      %v189 = vld [vmem:[%s173 + $0xc] sm:$0xf]
      %v190 = vld [vmem:[%s173 + $0x10] sm:$0xf]
      %v191 = vld [vmem:[%s173 + $0x14] sm:$0xf]
      %v192 = vld [vmem:[%s173 + $0x18] sm:$0xf]
      %v193 = vld [vmem:[%s173 + $0x1c] sm:$0xf]
      %v194 = vld [vmem:[%s173 + $0x20] sm:$0xf]
      %v195 = vld [vmem:[%s173 + $0x24] sm:$0xf]
      %v196 = vld [vmem:[%s173 + $0x28] sm:$0xf]
      %v197 = vld [vmem:[%s173 + $0x2c] sm:$0xf]
      %v198 = vld [vmem:[%s173 + $0x30] sm:$0xf]
      %v199 = vld [vmem:[%s173 + $0x34] sm:$0xf]
      %v200 = vld [vmem:[%s173 + $0x38] sm:$0xf]
      %v201 = vld [vmem:[%s173 + $0x3c] sm:$0xf]
      %v202 = vld [vmem:[%s173 + $0x40] sm:$0xf]
      %v203 = vld [vmem:[%s173 + $0x44] sm:$0xf]
      %v204 = vld [vmem:[%s173 + $0x48] sm:$0xf]
      %v205 = vld [vmem:[%s173 + $0x4c] sm:$0xf]
      %v206 = vld [vmem:[%s173 + $0x50] sm:$0xf]
      %v207 = vld [vmem:[%s173 + $0x54] sm:$0xf]
      %v208 = vld [vmem:[%s173 + $0x58] sm:$0xf]
      %v209 = vld [vmem:[%s173 + $0x5c] sm:$0xf]
      %v210 = vld [vmem:[%s173 + $0x60] sm:$0xf]
      %v211 = vld [vmem:[%s173 + $0x64] sm:$0xf]
      %v212 = vld [vmem:[%s173 + $0x68] sm:$0xf]
      %v213 = vld [vmem:[%s173 + $0x6c] sm:$0xf]
      %v214 = vld [vmem:[%s173 + $0x70] sm:$0xf]
      %v215 = vld [vmem:[%s173 + $0x74] sm:$0xf]
      %v216 = vld [vmem:[%s173 + $0x78] sm:$0xf]
      %v217 = vld [vmem:[%s173 + $0x7c] sm:$0xf]
      %v218 = vld [vmem:[%s173 + $0x80] sm:$0xf]
      %v219 = vld [vmem:[%s173 + $0x84] sm:$0xf]
      %v220 = vld [vmem:[%s1] sm:$0xf]
      %v221 = vld [vmem:[%s1 + $0x4] sm:$0xf]
      %v256 = vunpack.c.l.b16 %v186
      %v257 = vunpack.c.l.b16 %v187
      %v258 = vunpack.c.l.b16 %v188
      %v259 = vunpack.c.l.b16 %v189
      %v260 = vunpack.c.l.b16 %v190
      %v261 = vunpack.c.l.b16 %v191
      %v262 = vunpack.c.l.b16 %v192
      %v263 = vunpack.c.l.b16 %v193
      %v264 = vunpack.c.l.b16 %v194
      %v265 = vunpack.c.l.b16 %v195
      %v266 = vunpack.c.l.b16 %v196
      %v267 = vunpack.c.l.b16 %v197
      %v268 = vunpack.c.l.b16 %v198
      %v269 = vunpack.c.l.b16 %v199
      %v270 = vunpack.c.l.b16 %v200
      %v271 = vunpack.c.l.b16 %v201
      %v272 = vunpack.c.l.b16 %v202
      %v273 = vunpack.c.l.b16 %v203
      %v274 = vunpack.c.l.b16 %v204
      %v275 = vunpack.c.l.b16 %v205
      %v276 = vunpack.c.l.b16 %v206
      %v277 = vunpack.c.l.b16 %v207
      %v278 = vunpack.c.l.b16 %v208
      %v279 = vunpack.c.l.b16 %v209
      %v280 = vunpack.c.l.b16 %v210
      %v281 = vunpack.c.l.b16 %v211
      %v282 = vunpack.c.l.b16 %v212
      %v283 = vunpack.c.l.b16 %v213
      %v284 = vunpack.c.l.b16 %v214
      %v285 = vunpack.c.l.b16 %v215
      %v286 = vunpack.c.l.b16 %v216
      %v287 = vunpack.c.l.b16 %v217
      %v288 = vunpack.c.l.b16 %v218
      %v289 = vunpack.c.l.b16 %v219
      %v290 = vpack.c.b16 %v257, %v256
      %v291 = vpack.c.b16 %v259, %v258
      %v292 = vpack.c.b16 %v261, %v260
      %v293 = vpack.c.b16 %v263, %v262
      %v294 = vpack.c.b16 %v265, %v264
      %v295 = vpack.c.b16 %v267, %v266
      %v296 = vpack.c.b16 %v269, %v268
      %v297 = vpack.c.b16 %v271, %v270
      %v298 = vpack.c.b16 %v273, %v272
      %v299 = vpack.c.b16 %v275, %v274
      %v300 = vpack.c.b16 %v277, %v276
      %v301 = vpack.c.b16 %v279, %v278
      %v302 = vpack.c.b16 %v281, %v280
      %v303 = vpack.c.b16 %v283, %v282
      %v304 = vpack.c.b16 %v285, %v284
      %v305 = vpack.c.b16 %v287, %v286
      %v306 = vpack.c.b16 %v289, %v288
      %v309 = vunpack.c.l.b16 %v220
      %v310 = vunpack.c.l.b16 %v221
      %v311 = vpack.c.b16 %v310, %v309
      %vm313 = vcmask 130048
      %v315 = vsel %vm313, %v290, 0
      %v318 = vsel %vm313, %v291, 0
      %v321 = vsel %vm313, %v292, 0
      %v324 = vsel %vm313, %v293, 0
      %v327 = vsel %vm313, %v294, 0
      %v330 = vsel %vm313, %v295, 0
      %v333 = vsel %vm313, %v296, 0
      %v336 = vsel %vm313, %v297, 0
      %v339 = vsel %vm313, %v298, 0
      %v342 = vsel %vm313, %v299, 0
      %v345 = vsel %vm313, %v300, 0
      %v348 = vsel %vm313, %v301, 0
      %v351 = vsel %vm313, %v302, 0
      %v354 = vsel %vm313, %v303, 0
      %v357 = vsel %vm313, %v304, 0
      %v360 = vsel %vm313, %v305, 0
      %v363 = vsel %vm313, %v306, 0
      %365 = vmatprep.subr.bf16.mxu0 0
      %366 = vmatpush1.bf16.msra.mxu0 %v311
      %367 = vmatprep.subr.bf16.mxu0 0
      %368 = vmatpush1.bf16.msra.mxu0 0
      %369 = vmatprep.subr.bf16.mxu0 0
      %370 = vmatpush1.bf16.msra.mxu0 0
      %371 = vmatprep.subr.bf16.mxu0 0
      %372 = vmatpush1.bf16.msra.mxu0 0
      %373 = vmatprep.subr.bf16.mxu0 0
      %374 = vmatpush1.bf16.msra.mxu0 0
      %375 = vmatprep.subr.bf16.mxu0 0
      %376 = vmatpush1.bf16.msra.mxu0 0
      %377 = vmatprep.subr.bf16.mxu0 0
      %378 = vmatpush1.bf16.msra.mxu0 0
      %379 = vmatprep.subr.bf16.mxu0 0
      %380 = vmatpush1.bf16.msra.mxu0 0
      %381 = vmatprep.subr.bf16.mxu0 0
      %382 = vmatpush1.bf16.msra.mxu0 0
      %383 = vmatprep.subr.bf16.mxu0 0
      %384 = vmatpush1.bf16.msra.mxu0 0
      %385 = vmatprep.subr.bf16.mxu0 0
      %386 = vmatpush1.bf16.msra.mxu0 0
      %387 = vmatprep.subr.bf16.mxu0 0
      %388 = vmatpush1.bf16.msra.mxu0 0
      %389 = vmatprep.subr.bf16.mxu0 0
      %390 = vmatpush1.bf16.msra.mxu0 0
      %391 = vmatprep.subr.bf16.mxu0 0
      %392 = vmatpush1.bf16.msra.mxu0 0
      %393 = vmatprep.subr.bf16.mxu0 0
      %394 = vmatpush1.bf16.msra.mxu0 0
      %395 = vmatprep.subr.bf16.mxu0 0
      %396 = vmatpush1.bf16.msra.mxu0 0
      %397 = vmatprep.mubr.bf16.mxu0 0
      %398 = vmatmul.mubr.bf16.gmra.mrb[0].mxu0 %v315
      %v399 = vpop.f32.mrb[0].mxu0
      %v400 = vadd.f32 0.0, %v399
      %v401 = vpop.f32.mrb[0].mxu0
      %v402 = vpop.f32.mrb[0].mxu0
      %v403 = vadd.f32 0.0, %v402
      %v404 = vpop.f32.mrb[0].mxu0
      %405 = vmatprep.mubr.bf16.mxu0 0
      %406 = vmatmul.mubr.bf16.gmra.mrb[0].mxu0 %v318
      %v407 = vpop.f32.mrb[0].mxu0
      %v408 = vadd.f32 0.0, %v407
      %v409 = vpop.f32.mrb[0].mxu0
      %v410 = vpop.f32.mrb[0].mxu0
      %v411 = vadd.f32 0.0, %v410
      %v412 = vpop.f32.mrb[0].mxu0
      %413 = vmatprep.mubr.bf16.mxu0 0
      %414 = vmatmul.mubr.bf16.gmra.mrb[0].mxu0 %v321
      %v415 = vpop.f32.mrb[0].mxu0
      %v416 = vadd.f32 0.0, %v415
      %v417 = vpop.f32.mrb[0].mxu0
      %v418 = vpop.f32.mrb[0].mxu0
      %v419 = vadd.f32 0.0, %v418
      %v420 = vpop.f32.mrb[0].mxu0
      %421 = vmatprep.mubr.bf16.mxu0 0
      %422 = vmatmul.mubr.bf16.gmra.mrb[0].mxu0 %v324
      %v423 = vpop.f32.mrb[0].mxu0
      %v424 = vadd.f32 0.0, %v423
      %v425 = vpop.f32.mrb[0].mxu0
      %v426 = vpop.f32.mrb[0].mxu0
      %v427 = vadd.f32 0.0, %v426
      %v428 = vpop.f32.mrb[0].mxu0
      %429 = vmatprep.mubr.bf16.mxu0 0
      %430 = vmatmul.mubr.bf16.gmra.mrb[0].mxu0 %v327
      %v431 = vpop.f32.mrb[0].mxu0
      %v432 = vadd.f32 0.0, %v431
      %v433 = vpop.f32.mrb[0].mxu0
      %v434 = vpop.f32.mrb[0].mxu0
      %v435 = vadd.f32 0.0, %v434
      %v436 = vpop.f32.mrb[0].mxu0
      %437 = vmatprep.mubr.bf16.mxu0 0
      %438 = vmatmul.mubr.bf16.gmra.mrb[0].mxu0 %v330
      %v439 = vpop.f32.mrb[0].mxu0
      %v440 = vadd.f32 0.0, %v439
      %v441 = vpop.f32.mrb[0].mxu0
      %v442 = vpop.f32.mrb[0].mxu0
      %v443 = vadd.f32 0.0, %v442
      %v444 = vpop.f32.mrb[0].mxu0
      %445 = vmatprep.mubr.bf16.mxu0 0
      %446 = vmatmul.mubr.bf16.gmra.mrb[0].mxu0 %v333
      %v447 = vpop.f32.mrb[0].mxu0
      %v448 = vadd.f32 0.0, %v447
      %v449 = vpop.f32.mrb[0].mxu0
      %v450 = vpop.f32.mrb[0].mxu0
      %v451 = vadd.f32 0.0, %v450
      %v452 = vpop.f32.mrb[0].mxu0
      %453 = vmatprep.mubr.bf16.mxu0 0
      %454 = vmatmul.mubr.bf16.gmra.mrb[0].mxu0 %v336
      %v455 = vpop.f32.mrb[0].mxu0
      %v456 = vadd.f32 0.0, %v455
      %v457 = vpop.f32.mrb[0].mxu0
      %v458 = vpop.f32.mrb[0].mxu0
      %v459 = vadd.f32 0.0, %v458
      %v460 = vpop.f32.mrb[0].mxu0
      %461 = vmatprep.mubr.bf16.mxu0 0
      %462 = vmatmul.mubr.bf16.gmra.mrb[0].mxu0 %v339
      %v463 = vpop.f32.mrb[0].mxu0
      %v464 = vadd.f32 0.0, %v463
      %v465 = vpop.f32.mrb[0].mxu0
      %v466 = vpop.f32.mrb[0].mxu0
      %v467 = vadd.f32 0.0, %v466
      %v468 = vpop.f32.mrb[0].mxu0
      %469 = vmatprep.mubr.bf16.mxu0 0
      %470 = vmatmul.mubr.bf16.gmra.mrb[0].mxu0 %v342
      %v471 = vpop.f32.mrb[0].mxu0
      %v472 = vadd.f32 0.0, %v471
      %v473 = vpop.f32.mrb[0].mxu0
      %v474 = vpop.f32.mrb[0].mxu0
      %v475 = vadd.f32 0.0, %v474
      %v476 = vpop.f32.mrb[0].mxu0
      %477 = vmatprep.mubr.bf16.mxu0 0
      %478 = vmatmul.mubr.bf16.gmra.mrb[0].mxu0 %v345
      %v479 = vpop.f32.mrb[0].mxu0
      %v480 = vadd.f32 0.0, %v479
      %v481 = vpop.f32.mrb[0].mxu0
      %v482 = vpop.f32.mrb[0].mxu0
      %v483 = vadd.f32 0.0, %v482
      %v484 = vpop.f32.mrb[0].mxu0
      %485 = vmatprep.mubr.bf16.mxu0 0
      %486 = vmatmul.mubr.bf16.gmra.mrb[0].mxu0 %v348
      %v487 = vpop.f32.mrb[0].mxu0
      %v488 = vadd.f32 0.0, %v487
      %v489 = vpop.f32.mrb[0].mxu0
      %v490 = vpop.f32.mrb[0].mxu0
      %v491 = vadd.f32 0.0, %v490
      %v492 = vpop.f32.mrb[0].mxu0
      %493 = vmatprep.mubr.bf16.mxu0 0
      %494 = vmatmul.mubr.bf16.gmra.mrb[0].mxu0 %v351
      %v495 = vpop.f32.mrb[0].mxu0
      %v496 = vadd.f32 0.0, %v495
      %v497 = vpop.f32.mrb[0].mxu0
      %v498 = vpop.f32.mrb[0].mxu0
      %v499 = vadd.f32 0.0, %v498
      %v500 = vpop.f32.mrb[0].mxu0
      %501 = vmatprep.mubr.bf16.mxu0 0
      %502 = vmatmul.mubr.bf16.gmra.mrb[0].mxu0 %v354
      %v503 = vpop.f32.mrb[0].mxu0
      %v504 = vadd.f32 0.0, %v503
      %v505 = vpop.f32.mrb[0].mxu0
      %v506 = vpop.f32.mrb[0].mxu0
      %v507 = vadd.f32 0.0, %v506
      %v508 = vpop.f32.mrb[0].mxu0
      %509 = vmatprep.mubr.bf16.mxu0 0
      %510 = vmatmul.mubr.bf16.gmra.mrb[0].mxu0 %v357
      %v511 = vpop.f32.mrb[0].mxu0
      %v512 = vadd.f32 0.0, %v511
      %v513 = vpop.f32.mrb[0].mxu0
      %v514 = vpop.f32.mrb[0].mxu0
      %v515 = vadd.f32 0.0, %v514
      %v516 = vpop.f32.mrb[0].mxu0
      %517 = vmatprep.mubr.bf16.mxu0 0
      %518 = vmatmul.mubr.bf16.gmra.mrb[0].mxu0 %v360
      %v519 = vpop.f32.mrb[0].mxu0
      %v520 = vadd.f32 0.0, %v519
      %v521 = vpop.f32.mrb[0].mxu0
      %v522 = vpop.f32.mrb[0].mxu0
      %v523 = vadd.f32 0.0, %v522
      %v524 = vpop.f32.mrb[0].mxu0
      %525 = vmatprep.mubr.bf16.mxu0 0
      %526 = vmatmul.mubr.bf16.gmra.mrb[0].mxu0 %v363
      %v527 = vpop.f32.mrb[0].mxu0
      %v528 = vadd.f32 0.0, %v527
      %v529 = vpop.f32.mrb[0].mxu0
      %v530 = vpop.f32.mrb[0].mxu0
      %v531 = vadd.f32 0.0, %v530
      %v532 = vpop.f32.mrb[0].mxu0
      %533 = vdwg.mxu0
      %v534 = vpack.c.bf16 %v403, %v400
      %v535 = vpack.c.bf16 %v411, %v408
      %v536 = vpack.c.bf16 %v419, %v416
      %v537 = vpack.c.bf16 %v427, %v424
      %v538 = vpack.c.bf16 %v435, %v432
      %v539 = vpack.c.bf16 %v443, %v440
      %v540 = vpack.c.bf16 %v451, %v448
      %v541 = vpack.c.bf16 %v459, %v456
      %v542 = vpack.c.bf16 %v467, %v464
      %v543 = vpack.c.bf16 %v475, %v472
      %v544 = vpack.c.bf16 %v483, %v480
      %v545 = vpack.c.bf16 %v491, %v488
      %v546 = vpack.c.bf16 %v499, %v496
      %v547 = vpack.c.bf16 %v507, %v504
      %v548 = vpack.c.bf16 %v515, %v512
      %v549 = vpack.c.bf16 %v523, %v520
      %v550 = vpack.c.bf16 %v531, %v528
      %v568 = vunpack.c.l.b16 %v534
      %v569 = vunpack.c.h.b16 %v534
      %v570 = vunpack.c.l.b16 %v535
      %v571 = vunpack.c.h.b16 %v535
      %v572 = vunpack.c.l.b16 %v536
      %v573 = vunpack.c.h.b16 %v536
      %v574 = vunpack.c.l.b16 %v537
      %v575 = vunpack.c.h.b16 %v537
      %v576 = vunpack.c.l.b16 %v538
      %v577 = vunpack.c.h.b16 %v538
      %v578 = vunpack.c.l.b16 %v539
      %v579 = vunpack.c.h.b16 %v539
      %v580 = vunpack.c.l.b16 %v540
      %v581 = vunpack.c.h.b16 %v540
      %v582 = vunpack.c.l.b16 %v541
      %v583 = vunpack.c.h.b16 %v541
      %v584 = vunpack.c.l.b16 %v542
      %v585 = vunpack.c.h.b16 %v542
      %v586 = vunpack.c.l.b16 %v543
      %v587 = vunpack.c.h.b16 %v543
      %v588 = vunpack.c.l.b16 %v544
      %v589 = vunpack.c.h.b16 %v544
      %v590 = vunpack.c.l.b16 %v545
      %v591 = vunpack.c.h.b16 %v545
      %v592 = vunpack.c.l.b16 %v546
      %v593 = vunpack.c.h.b16 %v546
      %v594 = vunpack.c.l.b16 %v547
      %v595 = vunpack.c.h.b16 %v547
      %v596 = vunpack.c.l.b16 %v548
      %v597 = vunpack.c.h.b16 %v548
      %v598 = vunpack.c.l.b16 %v549
      %v599 = vunpack.c.h.b16 %v549
      %v600 = vunpack.c.l.b16 %v550
      %v601 = vunpack.c.h.b16 %v550
      %v602 = vpack.c.b16 %v568, %v568
      %v603 = vpack.c.b16 %v569, %v569
      %v604 = vpack.c.b16 %v570, %v570
      %v605 = vpack.c.b16 %v571, %v571
      %v606 = vpack.c.b16 %v572, %v572
      %v607 = vpack.c.b16 %v573, %v573
      %v608 = vpack.c.b16 %v574, %v574
      %v609 = vpack.c.b16 %v575, %v575
      %v610 = vpack.c.b16 %v576, %v576
      %v611 = vpack.c.b16 %v577, %v577
      %v612 = vpack.c.b16 %v578, %v578
      %v613 = vpack.c.b16 %v579, %v579
      %v614 = vpack.c.b16 %v580, %v580
      %v615 = vpack.c.b16 %v581, %v581
      %v616 = vpack.c.b16 %v582, %v582
      %v617 = vpack.c.b16 %v583, %v583
      %v618 = vpack.c.b16 %v584, %v584
      %v619 = vpack.c.b16 %v585, %v585
      %v620 = vpack.c.b16 %v586, %v586
      %v621 = vpack.c.b16 %v587, %v587
      %v622 = vpack.c.b16 %v588, %v588
      %v623 = vpack.c.b16 %v589, %v589
      %v624 = vpack.c.b16 %v590, %v590
      %v625 = vpack.c.b16 %v591, %v591
      %v626 = vpack.c.b16 %v592, %v592
      %v627 = vpack.c.b16 %v593, %v593
      %v628 = vpack.c.b16 %v594, %v594
      %v629 = vpack.c.b16 %v595, %v595
      %v630 = vpack.c.b16 %v596, %v596
      %v631 = vpack.c.b16 %v597, %v597
      %v632 = vpack.c.b16 %v598, %v598
      %v633 = vpack.c.b16 %v599, %v599
      %v634 = vpack.c.b16 %v600, %v600
      %v635 = vpack.c.b16 %v601, %v601
      %670 = vst [vmem:[%s179] sm:$0xf] %v602
      %671 = vst [vmem:[%s179 + $0x4] sm:$0xf] %v603
      %672 = vst [vmem:[%s179 + $0x8] sm:$0xf] %v604
      %673 = vst [vmem:[%s179 + $0xc] sm:$0xf] %v605
      %674 = vst [vmem:[%s179 + $0x10] sm:$0xf] %v606
      %675 = vst [vmem:[%s179 + $0x14] sm:$0xf] %v607
      %676 = vst [vmem:[%s179 + $0x18] sm:$0xf] %v608
      %677 = vst [vmem:[%s179 + $0x1c] sm:$0xf] %v609
      %678 = vst [vmem:[%s179 + $0x20] sm:$0xf] %v610
      %679 = vst [vmem:[%s179 + $0x24] sm:$0xf] %v611
      %680 = vst [vmem:[%s179 + $0x28] sm:$0xf] %v612
      %681 = vst [vmem:[%s179 + $0x2c] sm:$0xf] %v613
      %682 = vst [vmem:[%s179 + $0x30] sm:$0xf] %v614
      %683 = vst [vmem:[%s179 + $0x34] sm:$0xf] %v615
      %684 = vst [vmem:[%s179 + $0x38] sm:$0xf] %v616
      %685 = vst [vmem:[%s179 + $0x3c] sm:$0xf] %v617
      %686 = vst [vmem:[%s179 + $0x40] sm:$0xf] %v618
      %687 = vst [vmem:[%s179 + $0x44] sm:$0xf] %v619
      %688 = vst [vmem:[%s179 + $0x48] sm:$0xf] %v620
      %689 = vst [vmem:[%s179 + $0x4c] sm:$0xf] %v621
      %690 = vst [vmem:[%s179 + $0x50] sm:$0xf] %v622
      %691 = vst [vmem:[%s179 + $0x54] sm:$0xf] %v623
      %692 = vst [vmem:[%s179 + $0x58] sm:$0xf] %v624
      %693 = vst [vmem:[%s179 + $0x5c] sm:$0xf] %v625
      %694 = vst [vmem:[%s179 + $0x60] sm:$0xf] %v626
      %695 = vst [vmem:[%s179 + $0x64] sm:$0xf] %v627
      %696 = vst [vmem:[%s179 + $0x68] sm:$0xf] %v628
      %697 = vst [vmem:[%s179 + $0x6c] sm:$0xf] %v629
      %698 = vst [vmem:[%s179 + $0x70] sm:$0xf] %v630
      %699 = vst [vmem:[%s179 + $0x74] sm:$0xf] %v631
      %700 = vst [vmem:[%s179 + $0x78] sm:$0xf] %v632
      %701 = vst [vmem:[%s179 + $0x7c] sm:$0xf] %v633
      %702 = vst [vmem:[%s179 + $0x80] sm:$0xf] %v634
      %703 = vst [vmem:[%s179 + $0x84] sm:$0xf] %v635
      %v705 = vsel %vm313, 1.0, 0
      %707 = vmatprep.subr.mxu0 0.0
      %708 = vmatpush1.msra.mxu0 %v400
      %709 = vmatprep.subr.mxu0 0.0
      %710 = vmatpush1.msra.mxu0 %v403
      %711 = vmatprep.subr.mxu0 0.0
      %712 = vmatpush1.msra.mxu0 %v408
      %713 = vmatprep.subr.mxu0 0.0
      %714 = vmatpush1.msra.mxu0 %v411
      %715 = vmatprep.subr.mxu0 0.0
      %716 = vmatpush1.msra.mxu0 %v416
      %717 = vmatprep.subr.mxu0 0.0
      %718 = vmatpush1.msra.mxu0 %v419
      %719 = vmatprep.subr.mxu0 0.0
      %720 = vmatpush1.msra.mxu0 %v424
      %721 = vmatprep.subr.mxu0 0.0
      %722 = vmatpush1.msra.mxu0 %v427
      %723 = vmatprep.subr.mxu0 0.0
      %724 = vmatpush1.msra.mxu0 %v432
      %725 = vmatprep.subr.mxu0 0.0
      %726 = vmatpush1.msra.mxu0 %v435
      %727 = vmatprep.subr.mxu0 0.0
      %728 = vmatpush1.msra.mxu0 %v440
      %729 = vmatprep.subr.mxu0 0.0
      %730 = vmatpush1.msra.mxu0 %v443
      %731 = vmatprep.subr.mxu0 0.0
      %732 = vmatpush1.msra.mxu0 %v448
      %733 = vmatprep.subr.mxu0 0.0
      %734 = vmatpush1.msra.mxu0 %v451
      %735 = vmatprep.subr.mxu0 0.0
      %736 = vmatpush1.msra.mxu0 %v456
      %737 = vmatprep.subr.mxu0 0.0
      %738 = vmatpush1.msra.mxu0 %v459
      %739 = vmatprep.subr.mxu0 0.0
      %740 = vmatpush1.msra.mxu0 %v464
      %741 = vmatprep.subr.mxu0 0.0
      %742 = vmatpush1.msra.mxu0 %v467
      %743 = vmatprep.subr.mxu0 0.0
      %744 = vmatpush1.msra.mxu0 %v472
      %745 = vmatprep.subr.mxu0 0.0
      %746 = vmatpush1.msra.mxu0 %v475
      %747 = vmatprep.subr.mxu0 0.0
      %748 = vmatpush1.msra.mxu0 %v480
      %749 = vmatprep.subr.mxu0 0.0
      %750 = vmatpush1.msra.mxu0 %v483
      %751 = vmatprep.subr.mxu0 0.0
      %752 = vmatpush1.msra.mxu0 %v488
      %753 = vmatprep.subr.mxu0 0.0
      %754 = vmatpush1.msra.mxu0 %v491
      %755 = vmatprep.subr.mxu0 0.0
      %756 = vmatpush1.msra.mxu0 %v496
      %757 = vmatprep.subr.mxu0 0.0
      %758 = vmatpush1.msra.mxu0 %v499
      %759 = vmatprep.subr.mxu0 0.0
      %760 = vmatpush1.msra.mxu0 %v504
      %761 = vmatprep.subr.mxu0 0.0
      %762 = vmatpush1.msra.mxu0 %v507
      %763 = vmatprep.subr.mxu0 0.0
      %764 = vmatpush1.msra.mxu0 %v512
      %765 = vmatprep.subr.mxu0 0.0
      %766 = vmatpush1.msra.mxu0 %v515
      %767 = vmatprep.subr.mxu0 0.0
      %768 = vmatpush1.msra.mxu0 %v520
      %769 = vmatprep.subr.mxu0 0.0
      %770 = vmatpush1.msra.mxu0 %v523
      %771 = vmatprep.mubr.f32.mxu0 1.0
      %772 = vmatmul.mubr.f32.gmra.mrb[0].mxu0 1.0
      %v773 = vpop.f32.mrb[0].mxu0
      %v774 = vadd.f32 0.0, %v773
      %v775 = vpop.f32.mrb[0].mxu0
      %776 = vdwg.mxu0
      %777 = vmatprep.subr.mxu0 0.0
      %778 = vmatpush1.msra.mxu0 %v528
      %779 = vmatprep.subr.mxu0 0.0
      %780 = vmatpush1.msra.mxu0 %v531
      %781 = vmatprep.subr.mxu0 0.0
      %782 = vmatpush1.msra.mxu0 0.0
      %783 = vmatprep.subr.mxu0 0.0
      %784 = vmatpush1.msra.mxu0 0.0
      %785 = vmatprep.subr.mxu0 0.0
      %786 = vmatpush1.msra.mxu0 0.0
      %787 = vmatprep.subr.mxu0 0.0
      %788 = vmatpush1.msra.mxu0 0.0
      %789 = vmatprep.subr.mxu0 0.0
      %790 = vmatpush1.msra.mxu0 0.0
      %791 = vmatprep.subr.mxu0 0.0
      %792 = vmatpush1.msra.mxu0 0.0
      %793 = vmatprep.subr.mxu0 0.0
      %794 = vmatpush1.msra.mxu0 0.0
      %795 = vmatprep.subr.mxu0 0.0
      %796 = vmatpush1.msra.mxu0 0.0
      %797 = vmatprep.subr.mxu0 0.0
      %798 = vmatpush1.msra.mxu0 0.0
      %799 = vmatprep.subr.mxu0 0.0
      %800 = vmatpush1.msra.mxu0 0.0
      %801 = vmatprep.subr.mxu0 0.0
      %802 = vmatpush1.msra.mxu0 0.0
      %803 = vmatprep.subr.mxu0 0.0
      %804 = vmatpush1.msra.mxu0 0.0
      %805 = vmatprep.subr.mxu0 0.0
      %806 = vmatpush1.msra.mxu0 0.0
      %807 = vmatprep.subr.mxu0 0.0
      %808 = vmatpush1.msra.mxu0 0.0
      %809 = vmatprep.subr.mxu0 0.0
      %810 = vmatpush1.msra.mxu0 0.0
      %811 = vmatprep.subr.mxu0 0.0
      %812 = vmatpush1.msra.mxu0 0.0
      %813 = vmatprep.subr.mxu0 0.0
      %814 = vmatpush1.msra.mxu0 0.0
      %815 = vmatprep.subr.mxu0 0.0
      %816 = vmatpush1.msra.mxu0 0.0
      %817 = vmatprep.subr.mxu0 0.0
      %818 = vmatpush1.msra.mxu0 0.0
      %819 = vmatprep.subr.mxu0 0.0
      %820 = vmatpush1.msra.mxu0 0.0
      %821 = vmatprep.subr.mxu0 0.0
      %822 = vmatpush1.msra.mxu0 0.0
      %823 = vmatprep.subr.mxu0 0.0
      %824 = vmatpush1.msra.mxu0 0.0
      %825 = vmatprep.subr.mxu0 0.0
      %826 = vmatpush1.msra.mxu0 0.0
      %827 = vmatprep.subr.mxu0 0.0
      %828 = vmatpush1.msra.mxu0 0.0
      %829 = vmatprep.subr.mxu0 0.0
      %830 = vmatpush1.msra.mxu0 0.0
      %831 = vmatprep.subr.mxu0 0.0
      %832 = vmatpush1.msra.mxu0 0.0
      %833 = vmatprep.subr.mxu0 0.0
      %834 = vmatpush1.msra.mxu0 0.0
      %835 = vmatprep.subr.mxu0 0.0
      %836 = vmatpush1.msra.mxu0 0.0
      %837 = vmatprep.subr.mxu0 0.0
      %838 = vmatpush1.msra.mxu0 0.0
      %839 = vmatprep.subr.mxu0 0.0
      %840 = vmatpush1.msra.mxu0 0.0
      %841 = vmatprep.mubr.f32.mxu0 0.0
      %842 = vmatmul.mubr.f32.gmra.mrb[0].mxu0 %v705
      %v843 = vpop.f32.mrb[0].mxu0
      %v844 = vadd.f32 %v774, %v843
      %v845 = vpop.f32.mrb[0].mxu0
      %846 = vdwg.mxu0
      %v847 = vmul.f32 %v400, %v400
      %v848 = vmul.f32 %v403, %v403
      %v849 = vmul.f32 %v408, %v408
      %v850 = vmul.f32 %v411, %v411
      %v851 = vmul.f32 %v416, %v416
      %v852 = vmul.f32 %v419, %v419
      %v853 = vmul.f32 %v424, %v424
      %v854 = vmul.f32 %v427, %v427
      %v855 = vmul.f32 %v432, %v432
      %v856 = vmul.f32 %v435, %v435
      %v857 = vmul.f32 %v440, %v440
      %v858 = vmul.f32 %v443, %v443
      %v859 = vmul.f32 %v448, %v448
      %v860 = vmul.f32 %v451, %v451
      %v861 = vmul.f32 %v456, %v456
      %v862 = vmul.f32 %v459, %v459
      %v863 = vmul.f32 %v464, %v464
      %v864 = vmul.f32 %v467, %v467
      %v865 = vmul.f32 %v472, %v472
      %v866 = vmul.f32 %v475, %v475
      %v867 = vmul.f32 %v480, %v480
      %v868 = vmul.f32 %v483, %v483
      %v869 = vmul.f32 %v488, %v488
      %v870 = vmul.f32 %v491, %v491
      %v871 = vmul.f32 %v496, %v496
      %v872 = vmul.f32 %v499, %v499
      %v873 = vmul.f32 %v504, %v504
      %v874 = vmul.f32 %v507, %v507
      %v875 = vmul.f32 %v512, %v512
      %v876 = vmul.f32 %v515, %v515
      %v877 = vmul.f32 %v520, %v520
      %v878 = vmul.f32 %v523, %v523
      %v879 = vmul.f32 %v528, %v528
      %v880 = vmul.f32 %v531, %v531
      %881 = vmatprep.subr.mxu0 0.0
      %882 = vmatpush1.msra.mxu0 %v847
      %883 = vmatprep.subr.mxu0 0.0
      %884 = vmatpush1.msra.mxu0 %v848
      %885 = vmatprep.subr.mxu0 0.0
      %886 = vmatpush1.msra.mxu0 %v849
      %887 = vmatprep.subr.mxu0 0.0
      %888 = vmatpush1.msra.mxu0 %v850
      %889 = vmatprep.subr.mxu0 0.0
      %890 = vmatpush1.msra.mxu0 %v851
      %891 = vmatprep.subr.mxu0 0.0
      %892 = vmatpush1.msra.mxu0 %v852
      %893 = vmatprep.subr.mxu0 0.0
      %894 = vmatpush1.msra.mxu0 %v853
      %895 = vmatprep.subr.mxu0 0.0
      %896 = vmatpush1.msra.mxu0 %v854
      %897 = vmatprep.subr.mxu0 0.0
      %898 = vmatpush1.msra.mxu0 %v855
      %899 = vmatprep.subr.mxu0 0.0
      %900 = vmatpush1.msra.mxu0 %v856
      %901 = vmatprep.subr.mxu0 0.0
      %902 = vmatpush1.msra.mxu0 %v857
      %903 = vmatprep.subr.mxu0 0.0
      %904 = vmatpush1.msra.mxu0 %v858
      %905 = vmatprep.subr.mxu0 0.0
      %906 = vmatpush1.msra.mxu0 %v859
      %907 = vmatprep.subr.mxu0 0.0
      %908 = vmatpush1.msra.mxu0 %v860
      %909 = vmatprep.subr.mxu0 0.0
      %910 = vmatpush1.msra.mxu0 %v861
      %911 = vmatprep.subr.mxu0 0.0
      %912 = vmatpush1.msra.mxu0 %v862
      %913 = vmatprep.subr.mxu0 0.0
      %914 = vmatpush1.msra.mxu0 %v863
      %915 = vmatprep.subr.mxu0 0.0
      %916 = vmatpush1.msra.mxu0 %v864
      %917 = vmatprep.subr.mxu0 0.0
      %918 = vmatpush1.msra.mxu0 %v865
      %919 = vmatprep.subr.mxu0 0.0
      %920 = vmatpush1.msra.mxu0 %v866
      %921 = vmatprep.subr.mxu0 0.0
      %922 = vmatpush1.msra.mxu0 %v867
      %923 = vmatprep.subr.mxu0 0.0
      %924 = vmatpush1.msra.mxu0 %v868
      %925 = vmatprep.subr.mxu0 0.0
      %926 = vmatpush1.msra.mxu0 %v869
      %927 = vmatprep.subr.mxu0 0.0
      %928 = vmatpush1.msra.mxu0 %v870
      %929 = vmatprep.subr.mxu0 0.0
      %930 = vmatpush1.msra.mxu0 %v871
      %931 = vmatprep.subr.mxu0 0.0
      %932 = vmatpush1.msra.mxu0 %v872
      %933 = vmatprep.subr.mxu0 0.0
      %934 = vmatpush1.msra.mxu0 %v873
      %935 = vmatprep.subr.mxu0 0.0
      %936 = vmatpush1.msra.mxu0 %v874
      %937 = vmatprep.subr.mxu0 0.0
      %938 = vmatpush1.msra.mxu0 %v875
      %939 = vmatprep.subr.mxu0 0.0
      %940 = vmatpush1.msra.mxu0 %v876
      %941 = vmatprep.subr.mxu0 0.0
      %942 = vmatpush1.msra.mxu0 %v877
      %943 = vmatprep.subr.mxu0 0.0
      %944 = vmatpush1.msra.mxu0 %v878
      %945 = vmatprep.mubr.f32.mxu0 1.0
      %946 = vmatmul.mubr.f32.gmra.mrb[0].mxu0 1.0
      %v947 = vpop.f32.mrb[0].mxu0
      %v948 = vadd.f32 0.0, %v947
      %v949 = vpop.f32.mrb[0].mxu0
      %950 = vdwg.mxu0
      %951 = vmatprep.subr.mxu0 0.0
      %952 = vmatpush1.msra.mxu0 %v879
      %953 = vmatprep.subr.mxu0 0.0
      %954 = vmatpush1.msra.mxu0 %v880
      %955 = vmatprep.subr.mxu0 0.0
      %956 = vmatpush1.msra.mxu0 0.0
      %957 = vmatprep.subr.mxu0 0.0
      %958 = vmatpush1.msra.mxu0 0.0
      %959 = vmatprep.subr.mxu0 0.0
      %960 = vmatpush1.msra.mxu0 0.0
      %961 = vmatprep.subr.mxu0 0.0
      %962 = vmatpush1.msra.mxu0 0.0
      %963 = vmatprep.subr.mxu0 0.0
      %964 = vmatpush1.msra.mxu0 0.0
      %965 = vmatprep.subr.mxu0 0.0
      %966 = vmatpush1.msra.mxu0 0.0
      %967 = vmatprep.subr.mxu0 0.0
      %968 = vmatpush1.msra.mxu0 0.0
      %969 = vmatprep.subr.mxu0 0.0
      %970 = vmatpush1.msra.mxu0 0.0
      %971 = vmatprep.subr.mxu0 0.0
      %972 = vmatpush1.msra.mxu0 0.0
      %973 = vmatprep.subr.mxu0 0.0
      %974 = vmatpush1.msra.mxu0 0.0
      %975 = vmatprep.subr.mxu0 0.0
      %976 = vmatpush1.msra.mxu0 0.0
      %977 = vmatprep.subr.mxu0 0.0
      %978 = vmatpush1.msra.mxu0 0.0
      %979 = vmatprep.subr.mxu0 0.0
      %980 = vmatpush1.msra.mxu0 0.0
      %981 = vmatprep.subr.mxu0 0.0
      %982 = vmatpush1.msra.mxu0 0.0
      %983 = vmatprep.subr.mxu0 0.0
      %984 = vmatpush1.msra.mxu0 0.0
      %985 = vmatprep.subr.mxu0 0.0
      %986 = vmatpush1.msra.mxu0 0.0
      %987 = vmatprep.subr.mxu0 0.0
      %988 = vmatpush1.msra.mxu0 0.0
      %989 = vmatprep.subr.mxu0 0.0
      %990 = vmatpush1.msra.mxu0 0.0
      %991 = vmatprep.subr.mxu0 0.0
      %992 = vmatpush1.msra.mxu0 0.0
      %993 = vmatprep.subr.mxu0 0.0
      %994 = vmatpush1.msra.mxu0 0.0
      %995 = vmatprep.subr.mxu0 0.0
      %996 = vmatpush1.msra.mxu0 0.0
      %997 = vmatprep.subr.mxu0 0.0
      %998 = vmatpush1.msra.mxu0 0.0
      %999 = vmatprep.subr.mxu0 0.0
      %1000 = vmatpush1.msra.mxu0 0.0
      %1001 = vmatprep.subr.mxu0 0.0
      %1002 = vmatpush1.msra.mxu0 0.0
      %1003 = vmatprep.subr.mxu0 0.0
      %1004 = vmatpush1.msra.mxu0 0.0
      %1005 = vmatprep.subr.mxu0 0.0
      %1006 = vmatpush1.msra.mxu0 0.0
      %1007 = vmatprep.subr.mxu0 0.0
      %1008 = vmatpush1.msra.mxu0 0.0
      %1009 = vmatprep.subr.mxu0 0.0
      %1010 = vmatpush1.msra.mxu0 0.0
      %1011 = vmatprep.subr.mxu0 0.0
      %1012 = vmatpush1.msra.mxu0 0.0
      %1013 = vmatprep.subr.mxu0 0.0
      %1014 = vmatpush1.msra.mxu0 0.0
      %1015 = vmatprep.mubr.f32.mxu0 0.0
      %1016 = vmatmul.mubr.f32.gmra.mrb[0].mxu0 %v705
      %v1017 = vpop.f32.mrb[0].mxu0
      %v1018 = vadd.f32 %v948, %v1017
      %v1019 = vpop.f32.mrb[0].mxu0
      %1020 = vdwg.mxu0
      %1021 = vst [vmem:[%s184] sm:$0x1] %v844
      %1022 = vst [vmem:[%s184 + $0x1] sm:$0x1] %v1018
      %s1023 = smul.u32 34, %s15
      %p1024 = scmp.lt.s32.totalorder %s1023, 67
      %s1025 = scalar_select %p1024, %s1023, 67
      %s1026 = smul.addr %s1025, 4
      %s1027 = scalar_lea.vmem %s2, %s1026
      %p1028 = scmp.lt.s32.totalorder %s15, 1
      %s1029 = scalar_select %p1028, %s15, 1
      %s1030 = smul.addr %s1029, 2
      %s1031 = scalar_lea.vmem %s3, %s1030
      // Predicated region
      $region29: #{encoder_layer1_forward.3} parent=27 // pred_check
        %p1032 = pneg %p80
      $region30: #{encoder_layer1_forward.3} parent=27 // pred_check_branch
        %1034 = sbr.rel (%p1032) target = $region32
      $region31: #{encoder_layer1_forward.3} parent=27 // pred_region
        %s1035 = smul.u32 34, %s15
      $region32: #{encoder_layer1_forward.3} parent=27 // pred_fallthru
        _
      // Predicated region
      $region33: #{encoder_layer1_forward.3} parent=27 // pred_check
        %p1036 = pneg %p106
      $region34: #{encoder_layer1_forward.3} parent=27 // pred_check_branch
        %1038 = sbr.rel (%p1036) target = $region36
      $region35: #{encoder_layer1_forward.3} parent=27 // pred_region
        _
      $region36: #{encoder_layer1_forward.3} parent=27 // pred_fallthru
        _
    $region28: #{encoder_layer1_forward.3} parent=5 // pred_fallthru
      _
    %p1039 = scmp.le.s32.totalorder 2, %s10
    // Predicated region
    $region37: #{encoder_layer1_forward.3} parent=5 // pred_check
      %p1040 = pneg %p1039
    $region38: #{encoder_layer1_forward.3} parent=5 // pred_check_branch
      %1042 = sbr.rel (%p1040) target = $region40
    $region39: #{encoder_layer1_forward.3} parent=5 // pred_region
      %s1043 = ssub.s32 %s10, 2
      // Predicated region
      $region41: #{encoder_layer1_forward.3} parent=39 // pred_check
        %p1044 = pneg %p86
      $region42: #{encoder_layer1_forward.3} parent=39 // pred_check_branch
        %1046 = sbr.rel (%p1044) target = $region44
      $region43: #{encoder_layer1_forward.3} parent=39 // pred_region
        %s1047 = smul.u32 34, %s16
        %p1048 = scmp.lt.s32.totalorder %s1047, 67
        %s1049 = scalar_select %p1048, %s1047, 67
        %s1050 = smul.addr %s1049, 4
        %s1051 = scalar_lea.vmem %s2, %s1050
      $region44: #{encoder_layer1_forward.3} parent=39 // pred_fallthru
        _
      // Predicated region
      $region45: #{encoder_layer1_forward.3} parent=39 // pred_check
        %p1052 = pneg %p112
      $region46: #{encoder_layer1_forward.3} parent=39 // pred_check_branch
        %1054 = sbr.rel (%p1052) target = $region48
      $region47: #{encoder_layer1_forward.3} parent=39 // pred_region
        %p1055 = scmp.lt.s32.totalorder %s16, 1
        %s1056 = scalar_select %p1055, %s16, 1
        %s1057 = smul.addr %s1056, 2
        %s1058 = scalar_lea.vmem %s3, %s1057
      $region48: #{encoder_layer1_forward.3} parent=39 // pred_fallthru
        _
    $region40: #{encoder_layer1_forward.3} parent=5 // pred_fallthru
      _
  $region6: #{encoder_layer1_forward.3} parent=0 // loop_footer
    %s14 = sadd.s32 1, %s10
  $region7: #{encoder_layer1_forward.3} parent=0 // loop_footer_branch
    %9 = sbr.rel target = $region3
  $region8: #{encoder_layer1_forward.3} parent=0 // loop_exit
    _

// kernel: encoder_layer1_forward.5
$region0: #{encoder_layer1_forward.5}
  #allocation0 [shape = 'u32[]', space=smem, size = 0x4, offset = 0x4, fixed_abs, tag = 'smem constant byte address 0x4 - core index']
  #allocation1 [shape = 'u32[144,128]{1,0:T(1,128)}', space=vmem, size = 0x12000, scoped, tag = 'internal scratch']
  %s0 = inlined_call_operand.vmem [shape: bf16[128,2,128], index: 0, kind: input, shape index: {}]
  %s1 = inlined_call_operand.vmem [shape: f32[1,1,128], index: 1, kind: input, shape index: {}]
  %s2 = inlined_call_operand.vmem [shape: f32[1,1,128], index: 2, kind: input, shape index: {}]
  %s3 = inlined_call_operand.hbm [shape: f32[128,128], index: 3, kind: output, shape index: {}]
  %s4 = sld [smem:[#allocation0]]
  $region45: #{encoder_layer1_forward.5} parent=0
    _
  %s6 = ssub.s32 1, %s4
  %s7 = scalar_select 0, %s6, %s4
  $region1: #{encoder_layer1_forward.5} parent=0
    #allocation2 [shape = 'u8[65536]{0}', space=vmem, size = 0x10000, scoped, tag = 'output window, operand 0']
    #allocation3 [shape = 's32[2]{0}', space=sflag, size = 0x8, scoped, tag = 'scoped memory for encoder_layer1_forward.5']
    %8 = vsyncpa [#allocation3], 0
    %s9 = scalar_lea.sflag [#allocation3], 1
    %10 = vsyncpa %s9, 0
    loop: start=0, step=1, limit=4
    $region2: #{encoder_layer1_forward.5} parent=1 // loop_pre_header
      _
    $region3: #{encoder_layer1_forward.5} parent=1 // loop_header
      %s12 = sphi 0, %s16
      %p13 = scmp.ge.s32.totalorder %s12, 4
      %s22 = sphi 0, %s24
      %s25 = sphi 0, %s22
      %s26 = sphi 0, %s25
      %s42 = sphi 0, %s26
      %s46 = sphi 0, %s46
      %s48 = sphi 0, %s46
      %s49 = sphi 0, %s48
      %s63 = sphi 0, %s49
      %s67 = sphi 0, %s67
      %s69 = sphi 0, %s67
      %s70 = sphi 0, %s69
      %s84 = sphi 0, %s70
      %s90 = sphi 0, %s92
      %s93 = sphi 0, %s90
      %s94 = sphi 0, %s93
      %s110 = sphi 0, %s94
    $region4: #{encoder_layer1_forward.5} parent=1 // loop_header_branch
      %15 = sbr.rel (%p13) target = $region8
    $region5: #{encoder_layer1_forward.5} parent=1 // loop_body
      %s17 = ssub.s32 %s12, 1
      %s18 = ssub.s32 %s12, 2
      %s19 = sadd.s32 %s12, 1
      %s20 = ssub.s32 %s12, %s19
      %p21 = scmp.eq.s32.totalorder %s20, 0
      %s23 = sadd.s32 %s22, 1
      %s24 = scalar_select %p21, %s22, %s23
      %p27 = pneg %p21
      %p28 = scmp.eq.s32.totalorder %s12, 1
      %p29 = por %p27, %p28
      %p30 = scmp.ne.s32.totalorder %s22, %s25
      %p31 = scmp.eq.s32.totalorder %s12, 0
      %p32 = por %p30, %p31
      %p33 = scmp.ne.s32.totalorder %s22, %s25
      %p34 = scmp.eq.s32.totalorder %s17, 1
      %p35 = por %p33, %p34
      %p36 = scmp.ne.s32.totalorder %s25, %s26
      %p37 = scmp.eq.s32.totalorder %s17, 0
      %p38 = por %p36, %p37
      %p39 = scmp.ne.s32.totalorder %s25, %s26
      %p40 = scmp.eq.s32.totalorder %s18, 1
      %p41 = por %p39, %p40
      %p43 = scmp.ne.s32.totalorder %s26, %s42
      %p44 = scmp.eq.s32.totalorder %s18, 0
      %p45 = por %p43, %p44
      %s47 = sadd.s32 %s46, 1
      %p50 = scmp.eq.s32.totalorder %s12, 1
      %p51 = scmp.ne.s32.totalorder %s46, %s48
      %p52 = scmp.eq.s32.totalorder %s12, 0
      %p53 = por %p51, %p52
      %p54 = scmp.ne.s32.totalorder %s46, %s48
      %p55 = scmp.eq.s32.totalorder %s17, 1
      %p56 = por %p54, %p55
      %p57 = scmp.ne.s32.totalorder %s48, %s49
      %p58 = scmp.eq.s32.totalorder %s17, 0
      %p59 = por %p57, %p58
      %p60 = scmp.ne.s32.totalorder %s48, %s49
      %p61 = scmp.eq.s32.totalorder %s18, 1
      %p62 = por %p60, %p61
      %p64 = scmp.ne.s32.totalorder %s49, %s63
      %p65 = scmp.eq.s32.totalorder %s18, 0
      %p66 = por %p64, %p65
      %s68 = sadd.s32 %s67, 1
      %p71 = scmp.eq.s32.totalorder %s12, 1
      %p72 = scmp.ne.s32.totalorder %s67, %s69
      %p73 = scmp.eq.s32.totalorder %s12, 0
      %p74 = por %p72, %p73
      %p75 = scmp.ne.s32.totalorder %s67, %s69
      %p76 = scmp.eq.s32.totalorder %s17, 1
      %p77 = por %p75, %p76
      %p78 = scmp.ne.s32.totalorder %s69, %s70
      %p79 = scmp.eq.s32.totalorder %s17, 0
      %p80 = por %p78, %p79
      %p81 = scmp.ne.s32.totalorder %s69, %s70
      %p82 = scmp.eq.s32.totalorder %s18, 1
      %p83 = por %p81, %p82
      %p85 = scmp.ne.s32.totalorder %s70, %s84
      %p86 = scmp.eq.s32.totalorder %s18, 0
      %p87 = por %p85, %p86
      %s88 = ssub.s32 %s12, %s19
      %p89 = scmp.eq.s32.totalorder %s88, 0
      %s91 = sadd.s32 %s90, 1
      %s92 = scalar_select %p89, %s90, %s91
      %p95 = pneg %p89
      %p96 = scmp.eq.s32.totalorder %s12, 1
      %p97 = por %p95, %p96
      %p98 = scmp.ne.s32.totalorder %s90, %s93
      %p99 = scmp.eq.s32.totalorder %s12, 0
      %p100 = por %p98, %p99
      %p101 = scmp.ne.s32.totalorder %s90, %s93
      %p102 = scmp.eq.s32.totalorder %s17, 1
      %p103 = por %p101, %p102
      %p104 = scmp.ne.s32.totalorder %s93, %s94
      %p105 = scmp.eq.s32.totalorder %s17, 0
      %p106 = por %p104, %p105
      %p107 = scmp.ne.s32.totalorder %s93, %s94
      %p108 = scmp.eq.s32.totalorder %s18, 1
      %p109 = por %p107, %p108
      %p111 = scmp.ne.s32.totalorder %s94, %s110
      %p112 = scmp.eq.s32.totalorder %s18, 0
      %p113 = por %p111, %p112
      %p114 = scmp.le.s32.totalorder 1, %s12
      %p115 = scmp.lt.s32.totalorder %s12, 3
      %p116 = pnand %p114, %p115
      %p117 = pneg %p116
      // Predicated region
      $region9: #{encoder_layer1_forward.5} parent=5 // pred_check
        _
      $region10: #{encoder_layer1_forward.5} parent=5 // pred_check_branch
        %119 = sbr.rel (%p116) target = $region12
      $region11: #{encoder_layer1_forward.5} parent=5 // pred_region
        %s120 = ssub.s32 %s12, 1
        // Predicated region
        $region13: #{encoder_layer1_forward.5} parent=11 // pred_check
          %p121 = pneg %p59
        $region14: #{encoder_layer1_forward.5} parent=11 // pred_check_branch
          %123 = sbr.rel (%p121) target = $region16
        $region15: #{encoder_layer1_forward.5} parent=11 // pred_region
          _
        $region16: #{encoder_layer1_forward.5} parent=11 // pred_fallthru
          _
        // Predicated region
        $region17: #{encoder_layer1_forward.5} parent=11 // pred_check
          %p124 = pneg %p80
        $region18: #{encoder_layer1_forward.5} parent=11 // pred_check_branch
          %126 = sbr.rel (%p124) target = $region20
        $region19: #{encoder_layer1_forward.5} parent=11 // pred_region
          _
        $region20: #{encoder_layer1_forward.5} parent=11 // pred_fallthru
          _
      $region12: #{encoder_layer1_forward.5} parent=5 // pred_fallthru
        _
      %p127 = scmp.lt.s32.totalorder %s12, 2
      // Predicated region
      $region21: #{encoder_layer1_forward.5} parent=5 // pred_check
        %p128 = pneg %p127
      $region22: #{encoder_layer1_forward.5} parent=5 // pred_check_branch
        %130 = sbr.rel (%p128) target = $region24
      $region23: #{encoder_layer1_forward.5} parent=5 // pred_region
        // Predicated region
        $region25: #{encoder_layer1_forward.5} parent=23 // pred_check
          %p131 = pneg %p32
        $region26: #{encoder_layer1_forward.5} parent=23 // pred_check_branch
          %133 = sbr.rel (%p131) target = $region28
        $region27: #{encoder_layer1_forward.5} parent=23 // pred_region
          %s134 = smul.u32 64, %s12
          %p135 = scmp.lt.s32.totalorder %s134, 127
          %s136 = scalar_select %p135, %s134, 127
          %s137 = scalar_lea.vmem %s0, %s136
          %s138 = smul.u32 64, %s12
        $region28: #{encoder_layer1_forward.5} parent=23 // pred_fallthru
          _
      $region24: #{encoder_layer1_forward.5} parent=5 // pred_fallthru
        _
      %p139 = scmp.le.s32.totalorder 1, %s12
      %p140 = scmp.lt.s32.totalorder %s12, 3
      %p141 = pnand %p139, %p140
      %p142 = pneg %p141
      // Predicated region
      $region29: #{encoder_layer1_forward.5} parent=5 // pred_check
        _
      $region30: #{encoder_layer1_forward.5} parent=5 // pred_check_branch
        %144 = sbr.rel (%p141) target = $region32
      $region31: #{encoder_layer1_forward.5} parent=5 // pred_region
        %s145 = ssub.s32 %s12, 1
        %s146 = smul.u32 64, %s17
        %p147 = scmp.lt.s32.totalorder %s146, 127
        %s148 = scalar_select %p147, %s146, 127
        %s149 = scalar_lea.vmem %s0, %s148
        %p150 = pneg %p38
        %p151 = pneg %p35
        %p152 = pneg %p59
        %p153 = pneg %p56
        %p154 = pneg %p80
        %p155 = pneg %p77
        %p156 = pneg %p106
        %p157 = pneg %p103
        %s158 = sand.u32 %s93, 1
        %s159 = scalar_lea.sflag [#allocation3], %s158
        %s160 = sand.u32 %s93, 1
        %s161 = smul.addr %s160, 64
        %s162 = scalar_lea.vmem [#allocation2], %s161
        %s163 = smul.u32 64, %s17
        %p164 = scmp.lt.s32.totalorder %s163, 127
        %s165 = scalar_select %p164, %s163, 127
        %s166 = scalar_lea.vmem %s0, %s165
        %s167 = smul.u32 64, %s17
        %s168 = smul.u32 8, %s17
        %v169 = vld [vmem:[%s166] sm:$0x1]
        %v170 = vld [vmem:[%s166 + $0x1] sm:$0x1]
        %v171 = vld [vmem:[%s166 + $0x2] sm:$0x1]
        %v172 = vld [vmem:[%s166 + $0x3] sm:$0x1]
        %v173 = vld [vmem:[%s166 + $0x4] sm:$0x1]
        %v174 = vld [vmem:[%s166 + $0x5] sm:$0x1]
        %v175 = vld [vmem:[%s166 + $0x6] sm:$0x1]
        %v176 = vld [vmem:[%s166 + $0x7] sm:$0x1]
        %v177 = vld [vmem:[%s166 + $0x8] sm:$0x1]
        %v178 = vld [vmem:[%s166 + $0x9] sm:$0x1]
        %v179 = vld [vmem:[%s166 + $0xa] sm:$0x1]
        %v180 = vld [vmem:[%s166 + $0xb] sm:$0x1]
        %v181 = vld [vmem:[%s166 + $0xc] sm:$0x1]
        %v182 = vld [vmem:[%s166 + $0xd] sm:$0x1]
        %v183 = vld [vmem:[%s166 + $0xe] sm:$0x1]
        %v184 = vld [vmem:[%s166 + $0xf] sm:$0x1]
        %v185 = vld [vmem:[%s166 + $0x10] sm:$0x1]
        %v186 = vld [vmem:[%s166 + $0x11] sm:$0x1]
        %v187 = vld [vmem:[%s166 + $0x12] sm:$0x1]
        %v188 = vld [vmem:[%s166 + $0x13] sm:$0x1]
        %v189 = vld [vmem:[%s166 + $0x14] sm:$0x1]
        %v190 = vld [vmem:[%s166 + $0x15] sm:$0x1]
        %v191 = vld [vmem:[%s166 + $0x16] sm:$0x1]
        %v192 = vld [vmem:[%s166 + $0x17] sm:$0x1]
        %v193 = vld [vmem:[%s166 + $0x18] sm:$0x1]
        %v194 = vld [vmem:[%s166 + $0x19] sm:$0x1]
        %v195 = vld [vmem:[%s166 + $0x1a] sm:$0x1]
        %v196 = vld [vmem:[%s166 + $0x1b] sm:$0x1]
        %v197 = vld [vmem:[%s166 + $0x1c] sm:$0x1]
        %v198 = vld [vmem:[%s166 + $0x1d] sm:$0x1]
        %v199 = vld [vmem:[%s166 + $0x1e] sm:$0x1]
        %v200 = vld [vmem:[%s166 + $0x1f] sm:$0x1]
        %v201 = vld [vmem:[%s166 + $0x20] sm:$0x1]
        %v202 = vld [vmem:[%s166 + $0x21] sm:$0x1]
        %v203 = vld [vmem:[%s166 + $0x22] sm:$0x1]
        %v204 = vld [vmem:[%s166 + $0x23] sm:$0x1]
        %v205 = vld [vmem:[%s166 + $0x24] sm:$0x1]
        %v206 = vld [vmem:[%s166 + $0x25] sm:$0x1]
        %v207 = vld [vmem:[%s166 + $0x26] sm:$0x1]
        %v208 = vld [vmem:[%s166 + $0x27] sm:$0x1]
        %v209 = vld [vmem:[%s166 + $0x28] sm:$0x1]
        %v210 = vld [vmem:[%s166 + $0x29] sm:$0x1]
        %v211 = vld [vmem:[%s166 + $0x2a] sm:$0x1]
        %v212 = vld [vmem:[%s166 + $0x2b] sm:$0x1]
        %v213 = vld [vmem:[%s166 + $0x2c] sm:$0x1]
        %v214 = vld [vmem:[%s166 + $0x2d] sm:$0x1]
        %v215 = vld [vmem:[%s166 + $0x2e] sm:$0x1]
        %v216 = vld [vmem:[%s166 + $0x2f] sm:$0x1]
        %v217 = vld [vmem:[%s166 + $0x30] sm:$0x1]
        %v218 = vld [vmem:[%s166 + $0x31] sm:$0x1]
        %v219 = vld [vmem:[%s166 + $0x32] sm:$0x1]
        %v220 = vld [vmem:[%s166 + $0x33] sm:$0x1]
        %v221 = vld [vmem:[%s166 + $0x34] sm:$0x1]
        %v222 = vld [vmem:[%s166 + $0x35] sm:$0x1]
        %v223 = vld [vmem:[%s166 + $0x36] sm:$0x1]
        %v224 = vld [vmem:[%s166 + $0x37] sm:$0x1]
        %v225 = vld [vmem:[%s166 + $0x38] sm:$0x1]
        %v226 = vld [vmem:[%s166 + $0x39] sm:$0x1]
        %v227 = vld [vmem:[%s166 + $0x3a] sm:$0x1]
        %v228 = vld [vmem:[%s166 + $0x3b] sm:$0x1]
        %v229 = vld [vmem:[%s166 + $0x3c] sm:$0x1]
        %v230 = vld [vmem:[%s166 + $0x3d] sm:$0x1]
        %v231 = vld [vmem:[%s166 + $0x3e] sm:$0x1]
        %v232 = vld [vmem:[%s166 + $0x3f] sm:$0x1]
        %v233 = vunpack.c.l.bf16 %v169
        %v234 = vunpack.c.l.bf16 %v170
        %v235 = vunpack.c.l.bf16 %v171
        %v236 = vunpack.c.l.bf16 %v172
        %v237 = vunpack.c.l.bf16 %v173
        %v238 = vunpack.c.l.bf16 %v174
        %v239 = vunpack.c.l.bf16 %v175
        %v240 = vunpack.c.l.bf16 %v176
        %v241 = vunpack.c.l.bf16 %v177
        %v242 = vunpack.c.l.bf16 %v178
        %v243 = vunpack.c.l.bf16 %v179
        %v244 = vunpack.c.l.bf16 %v180
        %v245 = vunpack.c.l.bf16 %v181
        %v246 = vunpack.c.l.bf16 %v182
        %v247 = vunpack.c.l.bf16 %v183
        %v248 = vunpack.c.l.bf16 %v184
        %v249 = vunpack.c.l.bf16 %v185
        %v250 = vunpack.c.l.bf16 %v186
        %v251 = vunpack.c.l.bf16 %v187
        %v252 = vunpack.c.l.bf16 %v188
        %v253 = vunpack.c.l.bf16 %v189
        %v254 = vunpack.c.l.bf16 %v190
        %v255 = vunpack.c.l.bf16 %v191
        %v256 = vunpack.c.l.bf16 %v192
        %v257 = vunpack.c.l.bf16 %v193
        %v258 = vunpack.c.l.bf16 %v194
        %v259 = vunpack.c.l.bf16 %v195
        %v260 = vunpack.c.l.bf16 %v196
        %v261 = vunpack.c.l.bf16 %v197
        %v262 = vunpack.c.l.bf16 %v198
        %v263 = vunpack.c.l.bf16 %v199
        %v264 = vunpack.c.l.bf16 %v200
        %v265 = vunpack.c.l.bf16 %v201
        %v266 = vunpack.c.l.bf16 %v202
        %v267 = vunpack.c.l.bf16 %v203
        %v268 = vunpack.c.l.bf16 %v204
        %v269 = vunpack.c.l.bf16 %v205
        %v270 = vunpack.c.l.bf16 %v206
        %v271 = vunpack.c.l.bf16 %v207
        %v272 = vunpack.c.l.bf16 %v208
        %v273 = vunpack.c.l.bf16 %v209
        %v274 = vunpack.c.l.bf16 %v210
        %v275 = vunpack.c.l.bf16 %v211
        %v276 = vunpack.c.l.bf16 %v212
        %v277 = vunpack.c.l.bf16 %v213
        %v278 = vunpack.c.l.bf16 %v214
        %v279 = vunpack.c.l.bf16 %v215
        %v280 = vunpack.c.l.bf16 %v216
        %v281 = vunpack.c.l.bf16 %v217
        %v282 = vunpack.c.l.bf16 %v218
        %v283 = vunpack.c.l.bf16 %v219
        %v284 = vunpack.c.l.bf16 %v220
        %v285 = vunpack.c.l.bf16 %v221
        %v286 = vunpack.c.l.bf16 %v222
        %v287 = vunpack.c.l.bf16 %v223
        %v288 = vunpack.c.l.bf16 %v224
        %v289 = vunpack.c.l.bf16 %v225
        %v290 = vunpack.c.l.bf16 %v226
        %v291 = vunpack.c.l.bf16 %v227
        %v292 = vunpack.c.l.bf16 %v228
        %v293 = vunpack.c.l.bf16 %v229
        %v294 = vunpack.c.l.bf16 %v230
        %v295 = vunpack.c.l.bf16 %v231
        %v296 = vunpack.c.l.bf16 %v232
        %v297 = vld [vmem:[%s1] sm:$0x1]
        %v299 = vlaneseq
        %v300 = vshrl.u32 %v299, 7
        %v301 = vsub.s32 0, %v300
        %v302 = vrot.slane %v297, %v301
        %v304 = vmul.f32 %v233, %v302
        %v305 = vmul.f32 %v234, %v302
        %v306 = vmul.f32 %v235, %v302
        %v307 = vmul.f32 %v236, %v302
        %v308 = vmul.f32 %v237, %v302
        %v309 = vmul.f32 %v238, %v302
        %v310 = vmul.f32 %v239, %v302
        %v311 = vmul.f32 %v240, %v302
        %v312 = vmul.f32 %v241, %v302
        %v313 = vmul.f32 %v242, %v302
        %v314 = vmul.f32 %v243, %v302
        %v315 = vmul.f32 %v244, %v302
        %v316 = vmul.f32 %v245, %v302
        %v317 = vmul.f32 %v246, %v302
        %v318 = vmul.f32 %v247, %v302
        %v319 = vmul.f32 %v248, %v302
        %v320 = vmul.f32 %v249, %v302
        %v321 = vmul.f32 %v250, %v302
        %v322 = vmul.f32 %v251, %v302
        %v323 = vmul.f32 %v252, %v302
        %v324 = vmul.f32 %v253, %v302
        %v325 = vmul.f32 %v254, %v302
        %v326 = vmul.f32 %v255, %v302
        %v327 = vmul.f32 %v256, %v302
        %v328 = vmul.f32 %v257, %v302
        %v329 = vmul.f32 %v258, %v302
        %v330 = vmul.f32 %v259, %v302
        %v331 = vmul.f32 %v260, %v302
        %v332 = vmul.f32 %v261, %v302
        %v333 = vmul.f32 %v262, %v302
        %v334 = vmul.f32 %v263, %v302
        %v335 = vmul.f32 %v264, %v302
        %v336 = vmul.f32 %v265, %v302
        %v337 = vmul.f32 %v266, %v302
        %v338 = vmul.f32 %v267, %v302
        %v339 = vmul.f32 %v268, %v302
        %v340 = vmul.f32 %v269, %v302
        %v341 = vmul.f32 %v270, %v302
        %v342 = vmul.f32 %v271, %v302
        %v343 = vmul.f32 %v272, %v302
        %v344 = vmul.f32 %v273, %v302
        %v345 = vmul.f32 %v274, %v302
        %v346 = vmul.f32 %v275, %v302
        %v347 = vmul.f32 %v276, %v302
        %v348 = vmul.f32 %v277, %v302
        %v349 = vmul.f32 %v278, %v302
        %v350 = vmul.f32 %v279, %v302
        %v351 = vmul.f32 %v280, %v302
        %v352 = vmul.f32 %v281, %v302
        %v353 = vmul.f32 %v282, %v302
        %v354 = vmul.f32 %v283, %v302
        %v355 = vmul.f32 %v284, %v302
        %v356 = vmul.f32 %v285, %v302
        %v357 = vmul.f32 %v286, %v302
        %v358 = vmul.f32 %v287, %v302
        %v359 = vmul.f32 %v288, %v302
        %v360 = vmul.f32 %v289, %v302
        %v361 = vmul.f32 %v290, %v302
        %v362 = vmul.f32 %v291, %v302
        %v363 = vmul.f32 %v292, %v302
        %v364 = vmul.f32 %v293, %v302
        %v365 = vmul.f32 %v294, %v302
        %v366 = vmul.f32 %v295, %v302
        %v367 = vmul.f32 %v296, %v302
        %v368 = vld [vmem:[%s2] sm:$0x1]
        %v370 = vlaneseq
        %v371 = vshrl.u32 %v370, 7
        %v372 = vsub.s32 0, %v371
        %v373 = vrot.slane %v368, %v372
        %v375 = vadd.f32 %v304, %v373
        %v376 = vadd.f32 %v305, %v373
        %v377 = vadd.f32 %v306, %v373
        %v378 = vadd.f32 %v307, %v373
        %v379 = vadd.f32 %v308, %v373
        %v380 = vadd.f32 %v309, %v373
        %v381 = vadd.f32 %v310, %v373
        %v382 = vadd.f32 %v311, %v373
        %v383 = vadd.f32 %v312, %v373
        %v384 = vadd.f32 %v313, %v373
        %v385 = vadd.f32 %v314, %v373
        %v386 = vadd.f32 %v315, %v373
        %v387 = vadd.f32 %v316, %v373
        %v388 = vadd.f32 %v317, %v373
        %v389 = vadd.f32 %v318, %v373
        %v390 = vadd.f32 %v319, %v373
        %v391 = vadd.f32 %v320, %v373
        %v392 = vadd.f32 %v321, %v373
        %v393 = vadd.f32 %v322, %v373
        %v394 = vadd.f32 %v323, %v373
        %v395 = vadd.f32 %v324, %v373
        %v396 = vadd.f32 %v325, %v373
        %v397 = vadd.f32 %v326, %v373
        %v398 = vadd.f32 %v327, %v373
        %v399 = vadd.f32 %v328, %v373
        %v400 = vadd.f32 %v329, %v373
        %v401 = vadd.f32 %v330, %v373
        %v402 = vadd.f32 %v331, %v373
        %v403 = vadd.f32 %v332, %v373
        %v404 = vadd.f32 %v333, %v373
        %v405 = vadd.f32 %v334, %v373
        %v406 = vadd.f32 %v335, %v373
        %v407 = vadd.f32 %v336, %v373
        %v408 = vadd.f32 %v337, %v373
        %v409 = vadd.f32 %v338, %v373
        %v410 = vadd.f32 %v339, %v373
        %v411 = vadd.f32 %v340, %v373
        %v412 = vadd.f32 %v341, %v373
        %v413 = vadd.f32 %v342, %v373
        %v414 = vadd.f32 %v343, %v373
        %v415 = vadd.f32 %v344, %v373
        %v416 = vadd.f32 %v345, %v373
        %v417 = vadd.f32 %v346, %v373
        %v418 = vadd.f32 %v347, %v373
        %v419 = vadd.f32 %v348, %v373
        %v420 = vadd.f32 %v349, %v373
        %v421 = vadd.f32 %v350, %v373
        %v422 = vadd.f32 %v351, %v373
        %v423 = vadd.f32 %v352, %v373
        %v424 = vadd.f32 %v353, %v373
        %v425 = vadd.f32 %v354, %v373
        %v426 = vadd.f32 %v355, %v373
        %v427 = vadd.f32 %v356, %v373
        %v428 = vadd.f32 %v357, %v373
        %v429 = vadd.f32 %v358, %v373
        %v430 = vadd.f32 %v359, %v373
        %v431 = vadd.f32 %v360, %v373
        %v432 = vadd.f32 %v361, %v373
        %v433 = vadd.f32 %v362, %v373
        %v434 = vadd.f32 %v363, %v373
        %v435 = vadd.f32 %v364, %v373
        %v436 = vadd.f32 %v365, %v373
        %v437 = vadd.f32 %v366, %v373
        %v438 = vadd.f32 %v367, %v373
        %v439 = vmax.f32 %v375, 0.0
        %v440 = vmax.f32 %v376, 0.0
        %v441 = vmax.f32 %v377, 0.0
        %v442 = vmax.f32 %v378, 0.0
        %v443 = vmax.f32 %v379, 0.0
        %v444 = vmax.f32 %v380, 0.0
        %v445 = vmax.f32 %v381, 0.0
        %v446 = vmax.f32 %v382, 0.0
        %v447 = vmax.f32 %v383, 0.0
        %v448 = vmax.f32 %v384, 0.0
        %v449 = vmax.f32 %v385, 0.0
        %v450 = vmax.f32 %v386, 0.0
        %v451 = vmax.f32 %v387, 0.0
        %v452 = vmax.f32 %v388, 0.0
        %v453 = vmax.f32 %v389, 0.0
        %v454 = vmax.f32 %v390, 0.0
        %v455 = vmax.f32 %v391, 0.0
        %v456 = vmax.f32 %v392, 0.0
        %v457 = vmax.f32 %v393, 0.0
        %v458 = vmax.f32 %v394, 0.0
        %v459 = vmax.f32 %v395, 0.0
        %v460 = vmax.f32 %v396, 0.0
        %v461 = vmax.f32 %v397, 0.0
        %v462 = vmax.f32 %v398, 0.0
        %v463 = vmax.f32 %v399, 0.0
        %v464 = vmax.f32 %v400, 0.0
        %v465 = vmax.f32 %v401, 0.0
        %v466 = vmax.f32 %v402, 0.0
        %v467 = vmax.f32 %v403, 0.0
        %v468 = vmax.f32 %v404, 0.0
        %v469 = vmax.f32 %v405, 0.0
        %v470 = vmax.f32 %v406, 0.0
        %v471 = vmax.f32 %v407, 0.0
        %v472 = vmax.f32 %v408, 0.0
        %v473 = vmax.f32 %v409, 0.0
        %v474 = vmax.f32 %v410, 0.0
        %v475 = vmax.f32 %v411, 0.0
        %v476 = vmax.f32 %v412, 0.0
        %v477 = vmax.f32 %v413, 0.0
        %v478 = vmax.f32 %v414, 0.0
        %v479 = vmax.f32 %v415, 0.0
        %v480 = vmax.f32 %v416, 0.0
        %v481 = vmax.f32 %v417, 0.0
        %v482 = vmax.f32 %v418, 0.0
        %v483 = vmax.f32 %v419, 0.0
        %v484 = vmax.f32 %v420, 0.0
        %v485 = vmax.f32 %v421, 0.0
        %v486 = vmax.f32 %v422, 0.0
        %v487 = vmax.f32 %v423, 0.0
        %v488 = vmax.f32 %v424, 0.0
        %v489 = vmax.f32 %v425, 0.0
        %v490 = vmax.f32 %v426, 0.0
        %v491 = vmax.f32 %v427, 0.0
        %v492 = vmax.f32 %v428, 0.0
        %v493 = vmax.f32 %v429, 0.0
        %v494 = vmax.f32 %v430, 0.0
        %v495 = vmax.f32 %v431, 0.0
        %v496 = vmax.f32 %v432, 0.0
        %v497 = vmax.f32 %v433, 0.0
        %v498 = vmax.f32 %v434, 0.0
        %v499 = vmax.f32 %v435, 0.0
        %v500 = vmax.f32 %v436, 0.0
        %v501 = vmax.f32 %v437, 0.0
        %v502 = vmax.f32 %v438, 0.0
        %v567 = vrot.slane %v439, 7
        %v568 = vrot.slane %v567, 2
        %v569 = vrot.slane %v440, 7
        %v570 = vrot.slane %v569, 2
        %v571 = vrot.slane %v441, 7
        %v572 = vrot.slane %v571, 2
        %v573 = vrot.slane %v442, 7
        %v574 = vrot.slane %v573, 2
        %v575 = vrot.slane %v443, 7
        %v576 = vrot.slane %v575, 2
        %v577 = vrot.slane %v444, 7
        %v578 = vrot.slane %v577, 2
        %v579 = vrot.slane %v445, 7
        %v580 = vrot.slane %v579, 2
        %v581 = vrot.slane %v446, 7
        %v582 = vrot.slane %v581, 2
        %v583 = vrot.slane %v447, 7
        %v584 = vrot.slane %v583, 2
        %v585 = vrot.slane %v448, 7
        %v586 = vrot.slane %v585, 2
        %v587 = vrot.slane %v449, 7
        %v588 = vrot.slane %v587, 2
        %v589 = vrot.slane %v450, 7
        %v590 = vrot.slane %v589, 2
        %v591 = vrot.slane %v451, 7
        %v592 = vrot.slane %v591, 2
        %v593 = vrot.slane %v452, 7
        %v594 = vrot.slane %v593, 2
        %v595 = vrot.slane %v453, 7
        %v596 = vrot.slane %v595, 2
        %v597 = vrot.slane %v454, 7
        %v598 = vrot.slane %v597, 2
        %v599 = vrot.slane %v455, 7
        %v600 = vrot.slane %v599, 2
        %v601 = vrot.slane %v456, 7
        %v602 = vrot.slane %v601, 2
        %v603 = vrot.slane %v457, 7
        %v604 = vrot.slane %v603, 2
        %v605 = vrot.slane %v458, 7
        %v606 = vrot.slane %v605, 2
        %v607 = vrot.slane %v459, 7
        %v608 = vrot.slane %v607, 2
        %v609 = vrot.slane %v460, 7
        %v610 = vrot.slane %v609, 2
        %v611 = vrot.slane %v461, 7
        %v612 = vrot.slane %v611, 2
        %v613 = vrot.slane %v462, 7
        %v614 = vrot.slane %v613, 2
        %v615 = vrot.slane %v463, 7
        %v616 = vrot.slane %v615, 2
        %v617 = vrot.slane %v464, 7
        %v618 = vrot.slane %v617, 2
        %v619 = vrot.slane %v465, 7
        %v620 = vrot.slane %v619, 2
        %v621 = vrot.slane %v466, 7
        %v622 = vrot.slane %v621, 2
        %v623 = vrot.slane %v467, 7
        %v624 = vrot.slane %v623, 2
        %v625 = vrot.slane %v468, 7
        %v626 = vrot.slane %v625, 2
        %v627 = vrot.slane %v469, 7
        %v628 = vrot.slane %v627, 2
        %v629 = vrot.slane %v470, 7
        %v630 = vrot.slane %v629, 2
        %v631 = vrot.slane %v471, 7
        %v632 = vrot.slane %v631, 2
        %v633 = vrot.slane %v472, 7
        %v634 = vrot.slane %v633, 2
        %v635 = vrot.slane %v473, 7
        %v636 = vrot.slane %v635, 2
        %v637 = vrot.slane %v474, 7
        %v638 = vrot.slane %v637, 2
        %v639 = vrot.slane %v475, 7
        %v640 = vrot.slane %v639, 2
        %v641 = vrot.slane %v476, 7
        %v642 = vrot.slane %v641, 2
        %v643 = vrot.slane %v477, 7
        %v644 = vrot.slane %v643, 2
        %v645 = vrot.slane %v478, 7
        %v646 = vrot.slane %v645, 2
        %v647 = vrot.slane %v479, 7
        %v648 = vrot.slane %v647, 2
        %v649 = vrot.slane %v480, 7
        %v650 = vrot.slane %v649, 2
        %v651 = vrot.slane %v481, 7
        %v652 = vrot.slane %v651, 2
        %v653 = vrot.slane %v482, 7
        %v654 = vrot.slane %v653, 2
        %v655 = vrot.slane %v483, 7
        %v656 = vrot.slane %v655, 2
        %v657 = vrot.slane %v484, 7
        %v658 = vrot.slane %v657, 2
        %v659 = vrot.slane %v485, 7
        %v660 = vrot.slane %v659, 2
        %v661 = vrot.slane %v486, 7
        %v662 = vrot.slane %v661, 2
        %v663 = vrot.slane %v487, 7
        %v664 = vrot.slane %v663, 2
        %v665 = vrot.slane %v488, 7
        %v666 = vrot.slane %v665, 2
        %v667 = vrot.slane %v489, 7
        %v668 = vrot.slane %v667, 2
        %v669 = vrot.slane %v490, 7
        %v670 = vrot.slane %v669, 2
        %v671 = vrot.slane %v491, 7
        %v672 = vrot.slane %v671, 2
        %v673 = vrot.slane %v492, 7
        %v674 = vrot.slane %v673, 2
        %v675 = vrot.slane %v493, 7
        %v676 = vrot.slane %v675, 2
        %v677 = vrot.slane %v494, 7
        %v678 = vrot.slane %v677, 2
        %v679 = vrot.slane %v495, 7
        %v680 = vrot.slane %v679, 2
        %v681 = vrot.slane %v496, 7
        %v682 = vrot.slane %v681, 2
        %v683 = vrot.slane %v497, 7
        %v684 = vrot.slane %v683, 2
        %v685 = vrot.slane %v498, 7
        %v686 = vrot.slane %v685, 2
        %v687 = vrot.slane %v499, 7
        %v688 = vrot.slane %v687, 2
        %v689 = vrot.slane %v500, 7
        %v690 = vrot.slane %v689, 2
        %v691 = vrot.slane %v501, 7
        %v692 = vrot.slane %v691, 2
        %v693 = vrot.slane %v502, 7
        %v694 = vrot.slane %v693, 2
        %v759 = vadd.f32 %v439, %v568
        %v760 = vadd.f32 %v440, %v570
        %v761 = vadd.f32 %v441, %v572
        %v762 = vadd.f32 %v442, %v574
        %v763 = vadd.f32 %v443, %v576
        %v764 = vadd.f32 %v444, %v578
        %v765 = vadd.f32 %v445, %v580
        %v766 = vadd.f32 %v446, %v582
        %v767 = vadd.f32 %v447, %v584
        %v768 = vadd.f32 %v448, %v586
        %v769 = vadd.f32 %v449, %v588
        %v770 = vadd.f32 %v450, %v590
        %v771 = vadd.f32 %v451, %v592
        %v772 = vadd.f32 %v452, %v594
        %v773 = vadd.f32 %v453, %v596
        %v774 = vadd.f32 %v454, %v598
        %v775 = vadd.f32 %v455, %v600
        %v776 = vadd.f32 %v456, %v602
        %v777 = vadd.f32 %v457, %v604
        %v778 = vadd.f32 %v458, %v606
        %v779 = vadd.f32 %v459, %v608
        %v780 = vadd.f32 %v460, %v610
        %v781 = vadd.f32 %v461, %v612
        %v782 = vadd.f32 %v462, %v614
        %v783 = vadd.f32 %v463, %v616
        %v784 = vadd.f32 %v464, %v618
        %v785 = vadd.f32 %v465, %v620
        %v786 = vadd.f32 %v466, %v622
        %v787 = vadd.f32 %v467, %v624
        %v788 = vadd.f32 %v468, %v626
        %v789 = vadd.f32 %v469, %v628
        %v790 = vadd.f32 %v470, %v630
        %v791 = vadd.f32 %v471, %v632
        %v792 = vadd.f32 %v472, %v634
        %v793 = vadd.f32 %v473, %v636
        %v794 = vadd.f32 %v474, %v638
        %v795 = vadd.f32 %v475, %v640
        %v796 = vadd.f32 %v476, %v642
        %v797 = vadd.f32 %v477, %v644
        %v798 = vadd.f32 %v478, %v646
        %v799 = vadd.f32 %v479, %v648
        %v800 = vadd.f32 %v480, %v650
        %v801 = vadd.f32 %v481, %v652
        %v802 = vadd.f32 %v482, %v654
        %v803 = vadd.f32 %v483, %v656
        %v804 = vadd.f32 %v484, %v658
        %v805 = vadd.f32 %v485, %v660
        %v806 = vadd.f32 %v486, %v662
        %v807 = vadd.f32 %v487, %v664
        %v808 = vadd.f32 %v488, %v666
        %v809 = vadd.f32 %v489, %v668
        %v810 = vadd.f32 %v490, %v670
        %v811 = vadd.f32 %v491, %v672
        %v812 = vadd.f32 %v492, %v674
        %v813 = vadd.f32 %v493, %v676
        %v814 = vadd.f32 %v494, %v678
        %v815 = vadd.f32 %v495, %v680
        %v816 = vadd.f32 %v496, %v682
        %v817 = vadd.f32 %v497, %v684
        %v818 = vadd.f32 %v498, %v686
        %v819 = vadd.f32 %v499, %v688
        %v820 = vadd.f32 %v500, %v690
        %v821 = vadd.f32 %v501, %v692
        %v822 = vadd.f32 %v502, %v694
        %v823 = vmul.f32 %v759, 0.5
        %v824 = vmul.f32 %v760, 0.5
        %v825 = vmul.f32 %v761, 0.5
        %v826 = vmul.f32 %v762, 0.5
        %v827 = vmul.f32 %v763, 0.5
        %v828 = vmul.f32 %v764, 0.5
        %v829 = vmul.f32 %v765, 0.5
        %v830 = vmul.f32 %v766, 0.5
        %v831 = vmul.f32 %v767, 0.5
        %v832 = vmul.f32 %v768, 0.5
        %v833 = vmul.f32 %v769, 0.5
        %v834 = vmul.f32 %v770, 0.5
        %v835 = vmul.f32 %v771, 0.5
        %v836 = vmul.f32 %v772, 0.5
        %v837 = vmul.f32 %v773, 0.5
        %v838 = vmul.f32 %v774, 0.5
        %v839 = vmul.f32 %v775, 0.5
        %v840 = vmul.f32 %v776, 0.5
        %v841 = vmul.f32 %v777, 0.5
        %v842 = vmul.f32 %v778, 0.5
        %v843 = vmul.f32 %v779, 0.5
        %v844 = vmul.f32 %v780, 0.5
        %v845 = vmul.f32 %v781, 0.5
        %v846 = vmul.f32 %v782, 0.5
        %v847 = vmul.f32 %v783, 0.5
        %v848 = vmul.f32 %v784, 0.5
        %v849 = vmul.f32 %v785, 0.5
        %v850 = vmul.f32 %v786, 0.5
        %v851 = vmul.f32 %v787, 0.5
        %v852 = vmul.f32 %v788, 0.5
        %v853 = vmul.f32 %v789, 0.5
        %v854 = vmul.f32 %v790, 0.5
        %v855 = vmul.f32 %v791, 0.5
        %v856 = vmul.f32 %v792, 0.5
        %v857 = vmul.f32 %v793, 0.5
        %v858 = vmul.f32 %v794, 0.5
        %v859 = vmul.f32 %v795, 0.5
        %v860 = vmul.f32 %v796, 0.5
        %v861 = vmul.f32 %v797, 0.5
        %v862 = vmul.f32 %v798, 0.5
        %v863 = vmul.f32 %v799, 0.5
        %v864 = vmul.f32 %v800, 0.5
        %v865 = vmul.f32 %v801, 0.5
        %v866 = vmul.f32 %v802, 0.5
        %v867 = vmul.f32 %v803, 0.5
        %v868 = vmul.f32 %v804, 0.5
        %v869 = vmul.f32 %v805, 0.5
        %v870 = vmul.f32 %v806, 0.5
        %v871 = vmul.f32 %v807, 0.5
        %v872 = vmul.f32 %v808, 0.5
        %v873 = vmul.f32 %v809, 0.5
        %v874 = vmul.f32 %v810, 0.5
        %v875 = vmul.f32 %v811, 0.5
        %v876 = vmul.f32 %v812, 0.5
        %v877 = vmul.f32 %v813, 0.5
        %v878 = vmul.f32 %v814, 0.5
        %v879 = vmul.f32 %v815, 0.5
        %v880 = vmul.f32 %v816, 0.5
        %v881 = vmul.f32 %v817, 0.5
        %v882 = vmul.f32 %v818, 0.5
        %v883 = vmul.f32 %v819, 0.5
        %v884 = vmul.f32 %v820, 0.5
        %v885 = vmul.f32 %v821, 0.5
        %v886 = vmul.f32 %v822, 0.5
        %v951 = vlaneseq
        %v952 = vshrl.u32 %v951, 7
        %v953 = vsub.s32 0, %v952
        %v954 = vrot.slane %v823, %v953
        %v955 = vlaneseq
        %v956 = vshrl.u32 %v955, 7
        %v957 = vsub.s32 0, %v956
        %v958 = vrot.slane %v824, %v957
        %v959 = vlaneseq
        %v960 = vshrl.u32 %v959, 7
        %v961 = vsub.s32 0, %v960
        %v962 = vrot.slane %v825, %v961
        %v963 = vlaneseq
        %v964 = vshrl.u32 %v963, 7
        %v965 = vsub.s32 0, %v964
        %v966 = vrot.slane %v826, %v965
        %v967 = vlaneseq
        %v968 = vshrl.u32 %v967, 7
        %v969 = vsub.s32 0, %v968
        %v970 = vrot.slane %v827, %v969
        %v971 = vlaneseq
        %v972 = vshrl.u32 %v971, 7
        %v973 = vsub.s32 0, %v972
        %v974 = vrot.slane %v828, %v973
        %v975 = vlaneseq
        %v976 = vshrl.u32 %v975, 7
        %v977 = vsub.s32 0, %v976
        %v978 = vrot.slane %v829, %v977
        %v979 = vlaneseq
        %v980 = vshrl.u32 %v979, 7
        %v981 = vsub.s32 0, %v980
        %v982 = vrot.slane %v830, %v981
        %v983 = vlaneseq
        %v984 = vshrl.u32 %v983, 7
        %v985 = vsub.s32 0, %v984
        %v986 = vrot.slane %v831, %v985
        %v987 = vlaneseq
        %v988 = vshrl.u32 %v987, 7
        %v989 = vsub.s32 0, %v988
        %v990 = vrot.slane %v832, %v989
        %v991 = vlaneseq
        %v992 = vshrl.u32 %v991, 7
        %v993 = vsub.s32 0, %v992
        %v994 = vrot.slane %v833, %v993
        %v995 = vlaneseq
        %v996 = vshrl.u32 %v995, 7
        %v997 = vsub.s32 0, %v996
        %v998 = vrot.slane %v834, %v997
        %v999 = vlaneseq
        %v1000 = vshrl.u32 %v999, 7
        %v1001 = vsub.s32 0, %v1000
        %v1002 = vrot.slane %v835, %v1001
        %v1003 = vlaneseq
        %v1004 = vshrl.u32 %v1003, 7
        %v1005 = vsub.s32 0, %v1004
        %v1006 = vrot.slane %v836, %v1005
        %v1007 = vlaneseq
        %v1008 = vshrl.u32 %v1007, 7
        %v1009 = vsub.s32 0, %v1008
        %v1010 = vrot.slane %v837, %v1009
        %v1011 = vlaneseq
        %v1012 = vshrl.u32 %v1011, 7
        %v1013 = vsub.s32 0, %v1012
        %v1014 = vrot.slane %v838, %v1013
        %v1015 = vlaneseq
        %v1016 = vshrl.u32 %v1015, 7
        %v1017 = vsub.s32 0, %v1016
        %v1018 = vrot.slane %v839, %v1017
        %v1019 = vlaneseq
        %v1020 = vshrl.u32 %v1019, 7
        %v1021 = vsub.s32 0, %v1020
        %v1022 = vrot.slane %v840, %v1021
        %v1023 = vlaneseq
        %v1024 = vshrl.u32 %v1023, 7
        %v1025 = vsub.s32 0, %v1024
        %v1026 = vrot.slane %v841, %v1025
        %v1027 = vlaneseq
        %v1028 = vshrl.u32 %v1027, 7
        %v1029 = vsub.s32 0, %v1028
        %v1030 = vrot.slane %v842, %v1029
        %v1031 = vlaneseq
        %v1032 = vshrl.u32 %v1031, 7
        %v1033 = vsub.s32 0, %v1032
        %v1034 = vrot.slane %v843, %v1033
        %v1035 = vlaneseq
        %v1036 = vshrl.u32 %v1035, 7
        %v1037 = vsub.s32 0, %v1036
        %v1038 = vrot.slane %v844, %v1037
        %v1039 = vlaneseq
        %v1040 = vshrl.u32 %v1039, 7
        %v1041 = vsub.s32 0, %v1040
        %v1042 = vrot.slane %v845, %v1041
        %v1043 = vlaneseq
        %v1044 = vshrl.u32 %v1043, 7
        %v1045 = vsub.s32 0, %v1044
        %v1046 = vrot.slane %v846, %v1045
        %v1047 = vlaneseq
        %v1048 = vshrl.u32 %v1047, 7
        %v1049 = vsub.s32 0, %v1048
        %v1050 = vrot.slane %v847, %v1049
        %v1051 = vlaneseq
        %v1052 = vshrl.u32 %v1051, 7
        %v1053 = vsub.s32 0, %v1052
        %v1054 = vrot.slane %v848, %v1053
        %v1055 = vlaneseq
        %v1056 = vshrl.u32 %v1055, 7
        %v1057 = vsub.s32 0, %v1056
        %v1058 = vrot.slane %v849, %v1057
        %v1059 = vlaneseq
        %v1060 = vshrl.u32 %v1059, 7
        %v1061 = vsub.s32 0, %v1060
        %v1062 = vrot.slane %v850, %v1061
        %v1063 = vlaneseq
        %v1064 = vshrl.u32 %v1063, 7
        %v1065 = vsub.s32 0, %v1064
        %v1066 = vrot.slane %v851, %v1065
        %v1067 = vlaneseq
        %v1068 = vshrl.u32 %v1067, 7
        %v1069 = vsub.s32 0, %v1068
        %v1070 = vrot.slane %v852, %v1069
        %v1071 = vlaneseq
        %v1072 = vshrl.u32 %v1071, 7
        %v1073 = vsub.s32 0, %v1072
        %v1074 = vrot.slane %v853, %v1073
        %v1075 = vlaneseq
        %v1076 = vshrl.u32 %v1075, 7
        %v1077 = vsub.s32 0, %v1076
        %v1078 = vrot.slane %v854, %v1077
        %v1079 = vlaneseq
        %v1080 = vshrl.u32 %v1079, 7
        %v1081 = vsub.s32 0, %v1080
        %v1082 = vrot.slane %v855, %v1081
        %v1083 = vlaneseq
        %v1084 = vshrl.u32 %v1083, 7
        %v1085 = vsub.s32 0, %v1084
        %v1086 = vrot.slane %v856, %v1085
        %v1087 = vlaneseq
        %v1088 = vshrl.u32 %v1087, 7
        %v1089 = vsub.s32 0, %v1088
        %v1090 = vrot.slane %v857, %v1089
        %v1091 = vlaneseq
        %v1092 = vshrl.u32 %v1091, 7
        %v1093 = vsub.s32 0, %v1092
        %v1094 = vrot.slane %v858, %v1093
        %v1095 = vlaneseq
        %v1096 = vshrl.u32 %v1095, 7
        %v1097 = vsub.s32 0, %v1096
        %v1098 = vrot.slane %v859, %v1097
        %v1099 = vlaneseq
        %v1100 = vshrl.u32 %v1099, 7
        %v1101 = vsub.s32 0, %v1100
        %v1102 = vrot.slane %v860, %v1101
        %v1103 = vlaneseq
        %v1104 = vshrl.u32 %v1103, 7
        %v1105 = vsub.s32 0, %v1104
        %v1106 = vrot.slane %v861, %v1105
        %v1107 = vlaneseq
        %v1108 = vshrl.u32 %v1107, 7
        %v1109 = vsub.s32 0, %v1108
        %v1110 = vrot.slane %v862, %v1109
        %v1111 = vlaneseq
        %v1112 = vshrl.u32 %v1111, 7
        %v1113 = vsub.s32 0, %v1112
        %v1114 = vrot.slane %v863, %v1113
        %v1115 = vlaneseq
        %v1116 = vshrl.u32 %v1115, 7
        %v1117 = vsub.s32 0, %v1116
        %v1118 = vrot.slane %v864, %v1117
        %v1119 = vlaneseq
        %v1120 = vshrl.u32 %v1119, 7
        %v1121 = vsub.s32 0, %v1120
        %v1122 = vrot.slane %v865, %v1121
        %v1123 = vlaneseq
        %v1124 = vshrl.u32 %v1123, 7
        %v1125 = vsub.s32 0, %v1124
        %v1126 = vrot.slane %v866, %v1125
        %v1127 = vlaneseq
        %v1128 = vshrl.u32 %v1127, 7
        %v1129 = vsub.s32 0, %v1128
        %v1130 = vrot.slane %v867, %v1129
        %v1131 = vlaneseq
        %v1132 = vshrl.u32 %v1131, 7
        %v1133 = vsub.s32 0, %v1132
        %v1134 = vrot.slane %v868, %v1133
        %v1135 = vlaneseq
        %v1136 = vshrl.u32 %v1135, 7
        %v1137 = vsub.s32 0, %v1136
        %v1138 = vrot.slane %v869, %v1137
        %v1139 = vlaneseq
        %v1140 = vshrl.u32 %v1139, 7
        %v1141 = vsub.s32 0, %v1140
        %v1142 = vrot.slane %v870, %v1141
        %v1143 = vlaneseq
        %v1144 = vshrl.u32 %v1143, 7
        %v1145 = vsub.s32 0, %v1144
        %v1146 = vrot.slane %v871, %v1145
        %v1147 = vlaneseq
        %v1148 = vshrl.u32 %v1147, 7
        %v1149 = vsub.s32 0, %v1148
        %v1150 = vrot.slane %v872, %v1149
        %v1151 = vlaneseq
        %v1152 = vshrl.u32 %v1151, 7
        %v1153 = vsub.s32 0, %v1152
        %v1154 = vrot.slane %v873, %v1153
        %v1155 = vlaneseq
        %v1156 = vshrl.u32 %v1155, 7
        %v1157 = vsub.s32 0, %v1156
        %v1158 = vrot.slane %v874, %v1157
        %v1159 = vlaneseq
        %v1160 = vshrl.u32 %v1159, 7
        %v1161 = vsub.s32 0, %v1160
        %v1162 = vrot.slane %v875, %v1161
        %v1163 = vlaneseq
        %v1164 = vshrl.u32 %v1163, 7
        %v1165 = vsub.s32 0, %v1164
        %v1166 = vrot.slane %v876, %v1165
        %v1167 = vlaneseq
        %v1168 = vshrl.u32 %v1167, 7
        %v1169 = vsub.s32 0, %v1168
        %v1170 = vrot.slane %v877, %v1169
        %v1171 = vlaneseq
        %v1172 = vshrl.u32 %v1171, 7
        %v1173 = vsub.s32 0, %v1172
        %v1174 = vrot.slane %v878, %v1173
        %v1175 = vlaneseq
        %v1176 = vshrl.u32 %v1175, 7
        %v1177 = vsub.s32 0, %v1176
        %v1178 = vrot.slane %v879, %v1177
        %v1179 = vlaneseq
        %v1180 = vshrl.u32 %v1179, 7
        %v1181 = vsub.s32 0, %v1180
        %v1182 = vrot.slane %v880, %v1181
        %v1183 = vlaneseq
        %v1184 = vshrl.u32 %v1183, 7
        %v1185 = vsub.s32 0, %v1184
        %v1186 = vrot.slane %v881, %v1185
        %v1187 = vlaneseq
        %v1188 = vshrl.u32 %v1187, 7
        %v1189 = vsub.s32 0, %v1188
        %v1190 = vrot.slane %v882, %v1189
        %v1191 = vlaneseq
        %v1192 = vshrl.u32 %v1191, 7
        %v1193 = vsub.s32 0, %v1192
        %v1194 = vrot.slane %v883, %v1193
        %v1195 = vlaneseq
        %v1196 = vshrl.u32 %v1195, 7
        %v1197 = vsub.s32 0, %v1196
        %v1198 = vrot.slane %v884, %v1197
        %v1199 = vlaneseq
        %v1200 = vshrl.u32 %v1199, 7
        %v1201 = vsub.s32 0, %v1200
        %v1202 = vrot.slane %v885, %v1201
        %v1203 = vlaneseq
        %v1204 = vshrl.u32 %v1203, 7
        %v1205 = vsub.s32 0, %v1204
        %v1206 = vrot.slane %v886, %v1205
        %vm1207 = vcmask 1041409
        %v1208 = vsel %vm1207, %v958, %v954
        %vm1209 = vcmask 1042434
        %v1210 = vsel %vm1209, %v962, %v1208
        %vm1211 = vcmask 1043459
        %v1212 = vsel %vm1211, %v966, %v1210
        %vm1213 = vcmask 1044484
        %v1214 = vsel %vm1213, %v970, %v1212
        %vm1215 = vcmask 1045509
        %v1216 = vsel %vm1215, %v974, %v1214
        %vm1217 = vcmask 1046534
        %v1218 = vsel %vm1217, %v978, %v1216
        %vm1219 = vcmask 1047559
        %v1220 = vsel %vm1219, %v982, %v1218
        %v1221 = vsel %vm1207, %v990, %v986
        %v1222 = vsel %vm1209, %v994, %v1221
        %v1223 = vsel %vm1211, %v998, %v1222
        %v1224 = vsel %vm1213, %v1002, %v1223
        %v1225 = vsel %vm1215, %v1006, %v1224
        %v1226 = vsel %vm1217, %v1010, %v1225
        %v1227 = vsel %vm1219, %v1014, %v1226
        %v1228 = vsel %vm1207, %v1022, %v1018
        %v1229 = vsel %vm1209, %v1026, %v1228
        %v1230 = vsel %vm1211, %v1030, %v1229
        %v1231 = vsel %vm1213, %v1034, %v1230
        %v1232 = vsel %vm1215, %v1038, %v1231
        %v1233 = vsel %vm1217, %v1042, %v1232
        %v1234 = vsel %vm1219, %v1046, %v1233
        %v1235 = vsel %vm1207, %v1054, %v1050
        %v1236 = vsel %vm1209, %v1058, %v1235
        %v1237 = vsel %vm1211, %v1062, %v1236
        %v1238 = vsel %vm1213, %v1066, %v1237
        %v1239 = vsel %vm1215, %v1070, %v1238
        %v1240 = vsel %vm1217, %v1074, %v1239
        %v1241 = vsel %vm1219, %v1078, %v1240
        %v1242 = vsel %vm1207, %v1086, %v1082
        %v1243 = vsel %vm1209, %v1090, %v1242
        %v1244 = vsel %vm1211, %v1094, %v1243
        %v1245 = vsel %vm1213, %v1098, %v1244
        %v1246 = vsel %vm1215, %v1102, %v1245
        %v1247 = vsel %vm1217, %v1106, %v1246
        %v1248 = vsel %vm1219, %v1110, %v1247
        %v1249 = vsel %vm1207, %v1118, %v1114
        %v1250 = vsel %vm1209, %v1122, %v1249
        %v1251 = vsel %vm1211, %v1126, %v1250
        %v1252 = vsel %vm1213, %v1130, %v1251
        %v1253 = vsel %vm1215, %v1134, %v1252
        %v1254 = vsel %vm1217, %v1138, %v1253
        %v1255 = vsel %vm1219, %v1142, %v1254
        %v1256 = vsel %vm1207, %v1150, %v1146
        %v1257 = vsel %vm1209, %v1154, %v1256
        %v1258 = vsel %vm1211, %v1158, %v1257
        %v1259 = vsel %vm1213, %v1162, %v1258
        %v1260 = vsel %vm1215, %v1166, %v1259
        %v1261 = vsel %vm1217, %v1170, %v1260
        %v1262 = vsel %vm1219, %v1174, %v1261
        %v1263 = vsel %vm1207, %v1182, %v1178
        %v1264 = vsel %vm1209, %v1186, %v1263
        %v1265 = vsel %vm1211, %v1190, %v1264
        %v1266 = vsel %vm1213, %v1194, %v1265
        %v1267 = vsel %vm1215, %v1198, %v1266
        %v1268 = vsel %vm1217, %v1202, %v1267
        %v1269 = vsel %vm1219, %v1206, %v1268
        %1278 = vst [vmem:[%s162] sm:$0xff] %v1220
        %1279 = vst [vmem:[%s162 + $0x8] sm:$0xff] %v1227
        %1280 = vst [vmem:[%s162 + $0x10] sm:$0xff] %v1234
        %1281 = vst [vmem:[%s162 + $0x18] sm:$0xff] %v1241
        %1282 = vst [vmem:[%s162 + $0x20] sm:$0xff] %v1248
        %1283 = vst [vmem:[%s162 + $0x28] sm:$0xff] %v1255
        %1284 = vst [vmem:[%s162 + $0x30] sm:$0xff] %v1262
        %1285 = vst [vmem:[%s162 + $0x38] sm:$0xff] %v1269
        %s1286 = sand.u32 %s93, 1
        %s1287 = scalar_lea.sflag [#allocation3], %s1286
        %s1288 = sand.u32 %s93, 1
        %s1289 = smul.addr %s1288, 64
        %s1290 = scalar_lea.vmem [#allocation2], %s1289
        // Predicated region
        $region33: #{encoder_layer1_forward.5} parent=31 // pred_check
          %p1291 = pneg %p103
        $region34: #{encoder_layer1_forward.5} parent=31 // pred_check_branch
          %1293 = sbr.rel (%p1291) target = $region36
        $region35: #{encoder_layer1_forward.5} parent=31 // pred_region
          %s1294 = smul.u32 8, %s17
          %s1296 = ssub.s32 1024, 1024
          %1297 = vsyncadd %s1287, %s1296
          %s1298 = smul.addr %s1294, 128
          %s1299 = scalar_lea.hbm %s3, %s1298
          %s1300 = sshll.u32 %s1290, 4
          %s1301 = int_to_ptr.vmem [resolvable:$true] %s1300
          %1306 = dma.vmem_to_hbm [thread:$0]  %s1301, 1024, %s1299, %s1287, 128, 128, 8
        $region36: #{encoder_layer1_forward.5} parent=31 // pred_fallthru
          _
      $region32: #{encoder_layer1_forward.5} parent=5 // pred_fallthru
        _
      %p1307 = scmp.le.s32.totalorder 2, %s12
      // Predicated region
      $region37: #{encoder_layer1_forward.5} parent=5 // pred_check
        %p1308 = pneg %p1307
      $region38: #{encoder_layer1_forward.5} parent=5 // pred_check_branch
        %1310 = sbr.rel (%p1308) target = $region40
      $region39: #{encoder_layer1_forward.5} parent=5 // pred_region
        %s1311 = ssub.s32 %s12, 2
        // Predicated region
        $region41: #{encoder_layer1_forward.5} parent=39 // pred_check
          %p1312 = pneg %p109
        $region42: #{encoder_layer1_forward.5} parent=39 // pred_check_branch
          %1314 = sbr.rel (%p1312) target = $region44
        $region43: #{encoder_layer1_forward.5} parent=39 // pred_region
          %s1315 = sand.u32 %s94, 1
          %s1316 = scalar_lea.sflag [#allocation3], %s1315
          %s1317 = sand.u32 %s94, 1
          %s1318 = smul.addr %s1317, 64
          %s1319 = scalar_lea.vmem [#allocation2], %s1318
          %1320 = dma.done %s1316, 1024
        $region44: #{encoder_layer1_forward.5} parent=39 // pred_fallthru
          _
      $region40: #{encoder_layer1_forward.5} parent=5 // pred_fallthru
        _
    $region6: #{encoder_layer1_forward.5} parent=1 // loop_footer
      %s16 = sadd.s32 1, %s12
    $region7: #{encoder_layer1_forward.5} parent=1 // loop_footer_branch
      %11 = sbr.rel target = $region3
    $region8: #{encoder_layer1_forward.5} parent=1 // loop_exit
      _
    %1321 = vsyncpa [#allocation3], 1
    %s1322 = scalar_lea.sflag [#allocation3], 1
    %1323 = vsyncpa %s1322, 1

// kernel: encoder_layer1_forward.4
$region0: #{encoder_layer1_forward.4}
  #allocation0 [shape = 'u32[]', space=smem, size = 0x4, offset = 0x4, fixed_abs, tag = 'smem constant byte address 0x4 - core index']
  #allocation1 [shape = 'u32[144,128]{1,0:T(1,128)}', space=vmem, size = 0x12000, scoped, tag = 'internal scratch']
  %s0 = inlined_call_operand.vmem [shape: bf16[256,1024], index: 0, kind: input, shape index: {}]
  %s1 = inlined_call_operand.vmem [shape: bf16[1024,128], index: 1, kind: input, shape index: {}]
  %s2 = inlined_call_operand.vmem [shape: bf16[256,128], index: 2, kind: output, shape index: {0}]
  %s3 = inlined_call_operand.vmem [shape: f32[2,2,128], index: 3, kind: output, shape index: {1}]
  %4 = xla_tuple %s2, %s3
  %s5 = sld [smem:[#allocation0]]
  $region49: #{encoder_layer1_forward.4} parent=0
    _
  %s7 = ssub.s32 1, %s5
  %s8 = scalar_select 0, %s7, %s5
  loop: start=0, step=1, limit=4
  $region2: #{encoder_layer1_forward.4} parent=0 // loop_pre_header
    _
  $region3: #{encoder_layer1_forward.4} parent=0 // loop_header
    %s10 = sphi 0, %s14
    %p11 = scmp.ge.s32.totalorder %s10, 4
    %s20 = sphi 0, %s22
    %s23 = sphi 0, %s20
    %s24 = sphi 0, %s23
    %s40 = sphi 0, %s24
    %s44 = sphi 0, %s44
    %s46 = sphi 0, %s44
    %s47 = sphi 0, %s46
    %s61 = sphi 0, %s47
    %s67 = sphi 0, %s69
    %s70 = sphi 0, %s67
    %s71 = sphi 0, %s70
    %s87 = sphi 0, %s71
    %s93 = sphi 0, %s95
    %s96 = sphi 0, %s93
    %s97 = sphi 0, %s96
    %s113 = sphi 0, %s97
  $region4: #{encoder_layer1_forward.4} parent=0 // loop_header_branch
    %13 = sbr.rel (%p11) target = $region8
  $region5: #{encoder_layer1_forward.4} parent=0 // loop_body
    %s15 = ssub.s32 %s10, 1
    %s16 = ssub.s32 %s10, 2
    %s17 = sadd.s32 %s10, 1
    %s18 = ssub.s32 %s10, %s17
    %p19 = scmp.eq.s32.totalorder %s18, 0
    %s21 = sadd.s32 %s20, 1
    %s22 = scalar_select %p19, %s20, %s21
    %p25 = pneg %p19
    %p26 = scmp.eq.s32.totalorder %s10, 1
    %p27 = por %p25, %p26
    %p28 = scmp.ne.s32.totalorder %s20, %s23
    %p29 = scmp.eq.s32.totalorder %s10, 0
    %p30 = por %p28, %p29
    %p31 = scmp.ne.s32.totalorder %s20, %s23
    %p32 = scmp.eq.s32.totalorder %s15, 1
    %p33 = por %p31, %p32
    %p34 = scmp.ne.s32.totalorder %s23, %s24
    %p35 = scmp.eq.s32.totalorder %s15, 0
    %p36 = por %p34, %p35
    %p37 = scmp.ne.s32.totalorder %s23, %s24
    %p38 = scmp.eq.s32.totalorder %s16, 1
    %p39 = por %p37, %p38
    %p41 = scmp.ne.s32.totalorder %s24, %s40
    %p42 = scmp.eq.s32.totalorder %s16, 0
    %p43 = por %p41, %p42
    %s45 = sadd.s32 %s44, 1
    %p48 = scmp.eq.s32.totalorder %s10, 1
    %p49 = scmp.ne.s32.totalorder %s44, %s46
    %p50 = scmp.eq.s32.totalorder %s10, 0
    %p51 = por %p49, %p50
    %p52 = scmp.ne.s32.totalorder %s44, %s46
    %p53 = scmp.eq.s32.totalorder %s15, 1
    %p54 = por %p52, %p53
    %p55 = scmp.ne.s32.totalorder %s46, %s47
    %p56 = scmp.eq.s32.totalorder %s15, 0
    %p57 = por %p55, %p56
    %p58 = scmp.ne.s32.totalorder %s46, %s47
    %p59 = scmp.eq.s32.totalorder %s16, 1
    %p60 = por %p58, %p59
    %p62 = scmp.ne.s32.totalorder %s47, %s61
    %p63 = scmp.eq.s32.totalorder %s16, 0
    %p64 = por %p62, %p63
    %s65 = ssub.s32 %s10, %s17
    %p66 = scmp.eq.s32.totalorder %s65, 0
    %s68 = sadd.s32 %s67, 1
    %s69 = scalar_select %p66, %s67, %s68
    %p72 = pneg %p66
    %p73 = scmp.eq.s32.totalorder %s10, 1
    %p74 = por %p72, %p73
    %p75 = scmp.ne.s32.totalorder %s67, %s70
    %p76 = scmp.eq.s32.totalorder %s10, 0
    %p77 = por %p75, %p76
    %p78 = scmp.ne.s32.totalorder %s67, %s70
    %p79 = scmp.eq.s32.totalorder %s15, 1
    %p80 = por %p78, %p79
    %p81 = scmp.ne.s32.totalorder %s70, %s71
    %p82 = scmp.eq.s32.totalorder %s15, 0
    %p83 = por %p81, %p82
    %p84 = scmp.ne.s32.totalorder %s70, %s71
    %p85 = scmp.eq.s32.totalorder %s16, 1
    %p86 = por %p84, %p85
    %p88 = scmp.ne.s32.totalorder %s71, %s87
    %p89 = scmp.eq.s32.totalorder %s16, 0
    %p90 = por %p88, %p89
    %s91 = ssub.s32 %s10, %s17
    %p92 = scmp.eq.s32.totalorder %s91, 0
    %s94 = sadd.s32 %s93, 1
    %s95 = scalar_select %p92, %s93, %s94
    %p98 = pneg %p92
    %p99 = scmp.eq.s32.totalorder %s10, 1
    %p100 = por %p98, %p99
    %p101 = scmp.ne.s32.totalorder %s93, %s96
    %p102 = scmp.eq.s32.totalorder %s10, 0
    %p103 = por %p101, %p102
    %p104 = scmp.ne.s32.totalorder %s93, %s96
    %p105 = scmp.eq.s32.totalorder %s15, 1
    %p106 = por %p104, %p105
    %p107 = scmp.ne.s32.totalorder %s96, %s97
    %p108 = scmp.eq.s32.totalorder %s15, 0
    %p109 = por %p107, %p108
    %p110 = scmp.ne.s32.totalorder %s96, %s97
    %p111 = scmp.eq.s32.totalorder %s16, 1
    %p112 = por %p110, %p111
    %p114 = scmp.ne.s32.totalorder %s97, %s113
    %p115 = scmp.eq.s32.totalorder %s16, 0
    %p116 = por %p114, %p115
    %p117 = scmp.le.s32.totalorder 1, %s10
    %p118 = scmp.lt.s32.totalorder %s10, 3
    %p119 = pnand %p117, %p118
    %p120 = pneg %p119
    // Predicated region
    $region9: #{encoder_layer1_forward.4} parent=5 // pred_check
      _
    $region10: #{encoder_layer1_forward.4} parent=5 // pred_check_branch
      %122 = sbr.rel (%p119) target = $region12
    $region11: #{encoder_layer1_forward.4} parent=5 // pred_region
      %s123 = ssub.s32 %s10, 1
      // Predicated region
      $region13: #{encoder_layer1_forward.4} parent=11 // pred_check
        %p124 = pneg %p57
      $region14: #{encoder_layer1_forward.4} parent=11 // pred_check_branch
        %126 = sbr.rel (%p124) target = $region16
      $region15: #{encoder_layer1_forward.4} parent=11 // pred_region
        _
      $region16: #{encoder_layer1_forward.4} parent=11 // pred_fallthru
        _
    $region12: #{encoder_layer1_forward.4} parent=5 // pred_fallthru
      _
    %p127 = scmp.lt.s32.totalorder %s10, 2
    // Predicated region
    $region17: #{encoder_layer1_forward.4} parent=5 // pred_check
      %p128 = pneg %p127
    $region18: #{encoder_layer1_forward.4} parent=5 // pred_check_branch
      %130 = sbr.rel (%p128) target = $region20
    $region19: #{encoder_layer1_forward.4} parent=5 // pred_region
      // Predicated region
      $region21: #{encoder_layer1_forward.4} parent=19 // pred_check
        %p131 = pneg %p30
      $region22: #{encoder_layer1_forward.4} parent=19 // pred_check_branch
        %133 = sbr.rel (%p131) target = $region24
      $region23: #{encoder_layer1_forward.4} parent=19 // pred_region
        %s134 = smul.u32 16, %s10
        %p135 = scmp.lt.s32.totalorder %s134, 31
        %s136 = scalar_select %p135, %s134, 31
        %s137 = smul.addr %s136, 8
        %s138 = smul.addr %s137, 4
        %s139 = scalar_lea.vmem %s0, %s138
        %s140 = smul.u32 16, %s10
      $region24: #{encoder_layer1_forward.4} parent=19 // pred_fallthru
        _
    $region20: #{encoder_layer1_forward.4} parent=5 // pred_fallthru
      _
    %p141 = scmp.le.s32.totalorder 1, %s10
    %p142 = scmp.lt.s32.totalorder %s10, 3
    %p143 = pnand %p141, %p142
    %p144 = pneg %p143
    // Predicated region
    $region25: #{encoder_layer1_forward.4} parent=5 // pred_check
      _
    $region26: #{encoder_layer1_forward.4} parent=5 // pred_check_branch
      %146 = sbr.rel (%p143) target = $region28
    $region27: #{encoder_layer1_forward.4} parent=5 // pred_region
      %s147 = ssub.s32 %s10, 1
      %s148 = smul.u32 16, %s15
      %p149 = scmp.lt.s32.totalorder %s148, 31
      %s150 = scalar_select %p149, %s148, 31
      %s151 = smul.addr %s150, 8
      %s152 = smul.addr %s151, 4
      %s153 = scalar_lea.vmem %s0, %s152
      %p154 = pneg %p36
      %p155 = pneg %p33
      %p156 = pneg %p57
      %p157 = pneg %p54
      %p158 = pneg %p83
      %p159 = pneg %p80
      %s160 = smul.u32 16, %s15
      %p161 = scmp.lt.s32.totalorder %s160, 31
      %s162 = scalar_select %p161, %s160, 31
      %s163 = smul.addr %s162, 4
      %s164 = scalar_lea.vmem %s2, %s163
      %p165 = pneg %p109
      %p166 = pneg %p106
      %p167 = scmp.lt.s32.totalorder %s15, 1
      %s168 = scalar_select %p167, %s15, 1
      %s169 = smul.addr %s168, 2
      %s170 = scalar_lea.vmem %s3, %s169
      %s171 = smul.u32 16, %s15
      %p172 = scmp.lt.s32.totalorder %s171, 31
      %s173 = scalar_select %p172, %s171, 31
      %s174 = smul.addr %s173, 8
      %s175 = smul.addr %s174, 4
      %s176 = scalar_lea.vmem %s0, %s175
      %s177 = smul.u32 16, %s15
      %s178 = smul.u32 16, %s15
      %p179 = scmp.lt.s32.totalorder %s178, 31
      %s180 = scalar_select %p179, %s178, 31
      %s181 = smul.addr %s180, 4
      %s182 = scalar_lea.vmem %s2, %s181
      %s183 = smul.u32 16, %s15
      %p184 = scmp.lt.s32.totalorder %s15, 1
      %s185 = scalar_select %p184, %s15, 1
      %s186 = smul.addr %s185, 2
      %s187 = scalar_lea.vmem %s3, %s186
      %v189 = vld [vmem:[%s176] sm:$0xff]
      %v190 = vld [vmem:[%s176 + $0x8] sm:$0xff]
      %v191 = vld [vmem:[%s176 + $0x10] sm:$0xff]
      %v192 = vld [vmem:[%s176 + $0x18] sm:$0xff]
      %v193 = vld [vmem:[%s176 + $0x20] sm:$0xff]
      %v194 = vld [vmem:[%s176 + $0x28] sm:$0xff]
      %v195 = vld [vmem:[%s176 + $0x30] sm:$0xff]
      %v196 = vld [vmem:[%s176 + $0x38] sm:$0xff]
      %v197 = vld [vmem:[%s176 + $0x40] sm:$0xff]
      %v198 = vld [vmem:[%s176 + $0x48] sm:$0xff]
      %v199 = vld [vmem:[%s176 + $0x50] sm:$0xff]
      %v200 = vld [vmem:[%s176 + $0x58] sm:$0xff]
      %v201 = vld [vmem:[%s176 + $0x60] sm:$0xff]
      %v202 = vld [vmem:[%s176 + $0x68] sm:$0xff]
      %v203 = vld [vmem:[%s176 + $0x70] sm:$0xff]
      %v204 = vld [vmem:[%s176 + $0x78] sm:$0xff]
      %v205 = vld [vmem:[%s176 + $0x80] sm:$0xff]
      %v206 = vld [vmem:[%s176 + $0x88] sm:$0xff]
      %v207 = vld [vmem:[%s176 + $0x90] sm:$0xff]
      %v208 = vld [vmem:[%s176 + $0x98] sm:$0xff]
      %v209 = vld [vmem:[%s176 + $0xa0] sm:$0xff]
      %v210 = vld [vmem:[%s176 + $0xa8] sm:$0xff]
      %v211 = vld [vmem:[%s176 + $0xb0] sm:$0xff]
      %v212 = vld [vmem:[%s176 + $0xb8] sm:$0xff]
      %v213 = vld [vmem:[%s176 + $0xc0] sm:$0xff]
      %v214 = vld [vmem:[%s176 + $0xc8] sm:$0xff]
      %v215 = vld [vmem:[%s176 + $0xd0] sm:$0xff]
      %v216 = vld [vmem:[%s176 + $0xd8] sm:$0xff]
      %v217 = vld [vmem:[%s176 + $0xe0] sm:$0xff]
      %v218 = vld [vmem:[%s176 + $0xe8] sm:$0xff]
      %v219 = vld [vmem:[%s176 + $0xf0] sm:$0xff]
      %v220 = vld [vmem:[%s176 + $0xf8] sm:$0xff]
      %v221 = vld [vmem:[%s176 + $0x100] sm:$0xff]
      %v222 = vld [vmem:[%s176 + $0x108] sm:$0xff]
      %v223 = vld [vmem:[%s176 + $0x110] sm:$0xff]
      %v224 = vld [vmem:[%s176 + $0x118] sm:$0xff]
      %v225 = vld [vmem:[%s176 + $0x120] sm:$0xff]
      %v226 = vld [vmem:[%s176 + $0x128] sm:$0xff]
      %v227 = vld [vmem:[%s176 + $0x130] sm:$0xff]
      %v228 = vld [vmem:[%s176 + $0x138] sm:$0xff]
      %v229 = vld [vmem:[%s176 + $0x140] sm:$0xff]
      %v230 = vld [vmem:[%s176 + $0x148] sm:$0xff]
      %v231 = vld [vmem:[%s176 + $0x150] sm:$0xff]
      %v232 = vld [vmem:[%s176 + $0x158] sm:$0xff]
      %v233 = vld [vmem:[%s176 + $0x160] sm:$0xff]
      %v234 = vld [vmem:[%s176 + $0x168] sm:$0xff]
      %v235 = vld [vmem:[%s176 + $0x170] sm:$0xff]
      %v236 = vld [vmem:[%s176 + $0x178] sm:$0xff]
      %v237 = vld [vmem:[%s176 + $0x180] sm:$0xff]
      %v238 = vld [vmem:[%s176 + $0x188] sm:$0xff]
      %v239 = vld [vmem:[%s176 + $0x190] sm:$0xff]
      %v240 = vld [vmem:[%s176 + $0x198] sm:$0xff]
      %v241 = vld [vmem:[%s176 + $0x1a0] sm:$0xff]
      %v242 = vld [vmem:[%s176 + $0x1a8] sm:$0xff]
      %v243 = vld [vmem:[%s176 + $0x1b0] sm:$0xff]
      %v244 = vld [vmem:[%s176 + $0x1b8] sm:$0xff]
      %v245 = vld [vmem:[%s176 + $0x1c0] sm:$0xff]
      %v246 = vld [vmem:[%s176 + $0x1c8] sm:$0xff]
      %v247 = vld [vmem:[%s176 + $0x1d0] sm:$0xff]
      %v248 = vld [vmem:[%s176 + $0x1d8] sm:$0xff]
      %v249 = vld [vmem:[%s176 + $0x1e0] sm:$0xff]
      %v250 = vld [vmem:[%s176 + $0x1e8] sm:$0xff]
      %v251 = vld [vmem:[%s176 + $0x1f0] sm:$0xff]
      %v252 = vld [vmem:[%s176 + $0x1f8] sm:$0xff]
      %v253 = vld [vmem:[%s1] sm:$0xf]
      %v254 = vld [vmem:[%s1 + $0x4] sm:$0xf]
      %v255 = vld [vmem:[%s1 + $0x8] sm:$0xf]
      %v256 = vld [vmem:[%s1 + $0xc] sm:$0xf]
      %v257 = vld [vmem:[%s1 + $0x10] sm:$0xf]
      %v258 = vld [vmem:[%s1 + $0x14] sm:$0xf]
      %v259 = vld [vmem:[%s1 + $0x18] sm:$0xf]
      %v260 = vld [vmem:[%s1 + $0x1c] sm:$0xf]
      %v261 = vld [vmem:[%s1 + $0x20] sm:$0xf]
      %v262 = vld [vmem:[%s1 + $0x24] sm:$0xf]
      %v263 = vld [vmem:[%s1 + $0x28] sm:$0xf]
      %v264 = vld [vmem:[%s1 + $0x2c] sm:$0xf]
      %v265 = vld [vmem:[%s1 + $0x30] sm:$0xf]
      %v266 = vld [vmem:[%s1 + $0x34] sm:$0xf]
      %v267 = vld [vmem:[%s1 + $0x38] sm:$0xf]
      %v268 = vld [vmem:[%s1 + $0x3c] sm:$0xf]
      %v269 = vld [vmem:[%s1 + $0x40] sm:$0xf]
      %v270 = vld [vmem:[%s1 + $0x44] sm:$0xf]
      %v271 = vld [vmem:[%s1 + $0x48] sm:$0xf]
      %v272 = vld [vmem:[%s1 + $0x4c] sm:$0xf]
      %v273 = vld [vmem:[%s1 + $0x50] sm:$0xf]
      %v274 = vld [vmem:[%s1 + $0x54] sm:$0xf]
      %v275 = vld [vmem:[%s1 + $0x58] sm:$0xf]
      %v276 = vld [vmem:[%s1 + $0x5c] sm:$0xf]
      %v277 = vld [vmem:[%s1 + $0x60] sm:$0xf]
      %v278 = vld [vmem:[%s1 + $0x64] sm:$0xf]
      %v279 = vld [vmem:[%s1 + $0x68] sm:$0xf]
      %v280 = vld [vmem:[%s1 + $0x6c] sm:$0xf]
      %v281 = vld [vmem:[%s1 + $0x70] sm:$0xf]
      %v282 = vld [vmem:[%s1 + $0x74] sm:$0xf]
      %v283 = vld [vmem:[%s1 + $0x78] sm:$0xf]
      %v284 = vld [vmem:[%s1 + $0x7c] sm:$0xf]
      %v285 = vld [vmem:[%s1 + $0x80] sm:$0xf]
      %v286 = vld [vmem:[%s1 + $0x84] sm:$0xf]
      %v287 = vld [vmem:[%s1 + $0x88] sm:$0xf]
      %v288 = vld [vmem:[%s1 + $0x8c] sm:$0xf]
      %v289 = vld [vmem:[%s1 + $0x90] sm:$0xf]
      %v290 = vld [vmem:[%s1 + $0x94] sm:$0xf]
      %v291 = vld [vmem:[%s1 + $0x98] sm:$0xf]
      %v292 = vld [vmem:[%s1 + $0x9c] sm:$0xf]
      %v293 = vld [vmem:[%s1 + $0xa0] sm:$0xf]
      %v294 = vld [vmem:[%s1 + $0xa4] sm:$0xf]
      %v295 = vld [vmem:[%s1 + $0xa8] sm:$0xf]
      %v296 = vld [vmem:[%s1 + $0xac] sm:$0xf]
      %v297 = vld [vmem:[%s1 + $0xb0] sm:$0xf]
      %v298 = vld [vmem:[%s1 + $0xb4] sm:$0xf]
      %v299 = vld [vmem:[%s1 + $0xb8] sm:$0xf]
      %v300 = vld [vmem:[%s1 + $0xbc] sm:$0xf]
      %v301 = vld [vmem:[%s1 + $0xc0] sm:$0xf]
      %v302 = vld [vmem:[%s1 + $0xc4] sm:$0xf]
      %v303 = vld [vmem:[%s1 + $0xc8] sm:$0xf]
      %v304 = vld [vmem:[%s1 + $0xcc] sm:$0xf]
      %v305 = vld [vmem:[%s1 + $0xd0] sm:$0xf]
      %v306 = vld [vmem:[%s1 + $0xd4] sm:$0xf]
      %v307 = vld [vmem:[%s1 + $0xd8] sm:$0xf]
      %v308 = vld [vmem:[%s1 + $0xdc] sm:$0xf]
      %v309 = vld [vmem:[%s1 + $0xe0] sm:$0xf]
      %v310 = vld [vmem:[%s1 + $0xe4] sm:$0xf]
      %v311 = vld [vmem:[%s1 + $0xe8] sm:$0xf]
      %v312 = vld [vmem:[%s1 + $0xec] sm:$0xf]
      %v313 = vld [vmem:[%s1 + $0xf0] sm:$0xf]
      %v314 = vld [vmem:[%s1 + $0xf4] sm:$0xf]
      %v315 = vld [vmem:[%s1 + $0xf8] sm:$0xf]
      %v316 = vld [vmem:[%s1 + $0xfc] sm:$0xf]
      %v317 = vld [vmem:[%s1 + $0x100] sm:$0xf]
      %v318 = vld [vmem:[%s1 + $0x104] sm:$0xf]
      %v319 = vld [vmem:[%s1 + $0x108] sm:$0xf]
      %v320 = vld [vmem:[%s1 + $0x10c] sm:$0xf]
      %v321 = vld [vmem:[%s1 + $0x110] sm:$0xf]
      %v322 = vld [vmem:[%s1 + $0x114] sm:$0xf]
      %v323 = vld [vmem:[%s1 + $0x118] sm:$0xf]
      %v324 = vld [vmem:[%s1 + $0x11c] sm:$0xf]
      %v325 = vld [vmem:[%s1 + $0x120] sm:$0xf]
      %v326 = vld [vmem:[%s1 + $0x124] sm:$0xf]
      %v327 = vld [vmem:[%s1 + $0x128] sm:$0xf]
      %v328 = vld [vmem:[%s1 + $0x12c] sm:$0xf]
      %v329 = vld [vmem:[%s1 + $0x130] sm:$0xf]
      %v330 = vld [vmem:[%s1 + $0x134] sm:$0xf]
      %v331 = vld [vmem:[%s1 + $0x138] sm:$0xf]
      %v332 = vld [vmem:[%s1 + $0x13c] sm:$0xf]
      %v333 = vld [vmem:[%s1 + $0x140] sm:$0xf]
      %v334 = vld [vmem:[%s1 + $0x144] sm:$0xf]
      %v335 = vld [vmem:[%s1 + $0x148] sm:$0xf]
      %v336 = vld [vmem:[%s1 + $0x14c] sm:$0xf]
      %v337 = vld [vmem:[%s1 + $0x150] sm:$0xf]
      %v338 = vld [vmem:[%s1 + $0x154] sm:$0xf]
      %v339 = vld [vmem:[%s1 + $0x158] sm:$0xf]
      %v340 = vld [vmem:[%s1 + $0x15c] sm:$0xf]
      %v341 = vld [vmem:[%s1 + $0x160] sm:$0xf]
      %v342 = vld [vmem:[%s1 + $0x164] sm:$0xf]
      %v343 = vld [vmem:[%s1 + $0x168] sm:$0xf]
      %v344 = vld [vmem:[%s1 + $0x16c] sm:$0xf]
      %v345 = vld [vmem:[%s1 + $0x170] sm:$0xf]
      %v346 = vld [vmem:[%s1 + $0x174] sm:$0xf]
      %v347 = vld [vmem:[%s1 + $0x178] sm:$0xf]
      %v348 = vld [vmem:[%s1 + $0x17c] sm:$0xf]
      %v349 = vld [vmem:[%s1 + $0x180] sm:$0xf]
      %v350 = vld [vmem:[%s1 + $0x184] sm:$0xf]
      %v351 = vld [vmem:[%s1 + $0x188] sm:$0xf]
      %v352 = vld [vmem:[%s1 + $0x18c] sm:$0xf]
      %v353 = vld [vmem:[%s1 + $0x190] sm:$0xf]
      %v354 = vld [vmem:[%s1 + $0x194] sm:$0xf]
      %v355 = vld [vmem:[%s1 + $0x198] sm:$0xf]
      %v356 = vld [vmem:[%s1 + $0x19c] sm:$0xf]
      %v357 = vld [vmem:[%s1 + $0x1a0] sm:$0xf]
      %v358 = vld [vmem:[%s1 + $0x1a4] sm:$0xf]
      %v359 = vld [vmem:[%s1 + $0x1a8] sm:$0xf]
      %v360 = vld [vmem:[%s1 + $0x1ac] sm:$0xf]
      %v361 = vld [vmem:[%s1 + $0x1b0] sm:$0xf]
      %v362 = vld [vmem:[%s1 + $0x1b4] sm:$0xf]
      %v363 = vld [vmem:[%s1 + $0x1b8] sm:$0xf]
      %v364 = vld [vmem:[%s1 + $0x1bc] sm:$0xf]
      %v365 = vld [vmem:[%s1 + $0x1c0] sm:$0xf]
      %v366 = vld [vmem:[%s1 + $0x1c4] sm:$0xf]
      %v367 = vld [vmem:[%s1 + $0x1c8] sm:$0xf]
      %v368 = vld [vmem:[%s1 + $0x1cc] sm:$0xf]
      %v369 = vld [vmem:[%s1 + $0x1d0] sm:$0xf]
      %v370 = vld [vmem:[%s1 + $0x1d4] sm:$0xf]
      %v371 = vld [vmem:[%s1 + $0x1d8] sm:$0xf]
      %v372 = vld [vmem:[%s1 + $0x1dc] sm:$0xf]
      %v373 = vld [vmem:[%s1 + $0x1e0] sm:$0xf]
      %v374 = vld [vmem:[%s1 + $0x1e4] sm:$0xf]
      %v375 = vld [vmem:[%s1 + $0x1e8] sm:$0xf]
      %v376 = vld [vmem:[%s1 + $0x1ec] sm:$0xf]
      %v377 = vld [vmem:[%s1 + $0x1f0] sm:$0xf]
      %v378 = vld [vmem:[%s1 + $0x1f4] sm:$0xf]
      %v379 = vld [vmem:[%s1 + $0x1f8] sm:$0xf]
      %v380 = vld [vmem:[%s1 + $0x1fc] sm:$0xf]
      %v445 = vunpack.c.l.b16 %v189
      %v446 = vunpack.c.h.b16 %v189
      %v447 = vunpack.c.l.b16 %v190
      %v448 = vunpack.c.h.b16 %v190
      %v449 = vunpack.c.l.b16 %v191
      %v450 = vunpack.c.h.b16 %v191
      %v451 = vunpack.c.l.b16 %v192
      %v452 = vunpack.c.h.b16 %v192
      %v453 = vunpack.c.l.b16 %v193
      %v454 = vunpack.c.h.b16 %v193
      %v455 = vunpack.c.l.b16 %v194
      %v456 = vunpack.c.h.b16 %v194
      %v457 = vunpack.c.l.b16 %v195
      %v458 = vunpack.c.h.b16 %v195
      %v459 = vunpack.c.l.b16 %v196
      %v460 = vunpack.c.h.b16 %v196
      %v461 = vunpack.c.l.b16 %v197
      %v462 = vunpack.c.h.b16 %v197
      %v463 = vunpack.c.l.b16 %v198
      %v464 = vunpack.c.h.b16 %v198
      %v465 = vunpack.c.l.b16 %v199
      %v466 = vunpack.c.h.b16 %v199
      %v467 = vunpack.c.l.b16 %v200
      %v468 = vunpack.c.h.b16 %v200
      %v469 = vunpack.c.l.b16 %v201
      %v470 = vunpack.c.h.b16 %v201
      %v471 = vunpack.c.l.b16 %v202
      %v472 = vunpack.c.h.b16 %v202
      %v473 = vunpack.c.l.b16 %v203
      %v474 = vunpack.c.h.b16 %v203
      %v475 = vunpack.c.l.b16 %v204
      %v476 = vunpack.c.h.b16 %v204
      %v477 = vunpack.c.l.b16 %v205
      %v478 = vunpack.c.h.b16 %v205
      %v479 = vunpack.c.l.b16 %v206
      %v480 = vunpack.c.h.b16 %v206
      %v481 = vunpack.c.l.b16 %v207
      %v482 = vunpack.c.h.b16 %v207
      %v483 = vunpack.c.l.b16 %v208
      %v484 = vunpack.c.h.b16 %v208
      %v485 = vunpack.c.l.b16 %v209
      %v486 = vunpack.c.h.b16 %v209
      %v487 = vunpack.c.l.b16 %v210
      %v488 = vunpack.c.h.b16 %v210
      %v489 = vunpack.c.l.b16 %v211
      %v490 = vunpack.c.h.b16 %v211
      %v491 = vunpack.c.l.b16 %v212
      %v492 = vunpack.c.h.b16 %v212
      %v493 = vunpack.c.l.b16 %v213
      %v494 = vunpack.c.h.b16 %v213
      %v495 = vunpack.c.l.b16 %v214
      %v496 = vunpack.c.h.b16 %v214
      %v497 = vunpack.c.l.b16 %v215
      %v498 = vunpack.c.h.b16 %v215
      %v499 = vunpack.c.l.b16 %v216
      %v500 = vunpack.c.h.b16 %v216
      %v501 = vunpack.c.l.b16 %v217
      %v502 = vunpack.c.h.b16 %v217
      %v503 = vunpack.c.l.b16 %v218
      %v504 = vunpack.c.h.b16 %v218
      %v505 = vunpack.c.l.b16 %v219
      %v506 = vunpack.c.h.b16 %v219
      %v507 = vunpack.c.l.b16 %v220
      %v508 = vunpack.c.h.b16 %v220
      %v509 = vunpack.c.l.b16 %v221
      %v510 = vunpack.c.h.b16 %v221
      %v511 = vunpack.c.l.b16 %v222
      %v512 = vunpack.c.h.b16 %v222
      %v513 = vunpack.c.l.b16 %v223
      %v514 = vunpack.c.h.b16 %v223
      %v515 = vunpack.c.l.b16 %v224
      %v516 = vunpack.c.h.b16 %v224
      %v517 = vunpack.c.l.b16 %v225
      %v518 = vunpack.c.h.b16 %v225
      %v519 = vunpack.c.l.b16 %v226
      %v520 = vunpack.c.h.b16 %v226
      %v521 = vunpack.c.l.b16 %v227
      %v522 = vunpack.c.h.b16 %v227
      %v523 = vunpack.c.l.b16 %v228
      %v524 = vunpack.c.h.b16 %v228
      %v525 = vunpack.c.l.b16 %v229
      %v526 = vunpack.c.h.b16 %v229
      %v527 = vunpack.c.l.b16 %v230
      %v528 = vunpack.c.h.b16 %v230
      %v529 = vunpack.c.l.b16 %v231
      %v530 = vunpack.c.h.b16 %v231
      %v531 = vunpack.c.l.b16 %v232
      %v532 = vunpack.c.h.b16 %v232
      %v533 = vunpack.c.l.b16 %v233
      %v534 = vunpack.c.h.b16 %v233
      %v535 = vunpack.c.l.b16 %v234
      %v536 = vunpack.c.h.b16 %v234
      %v537 = vunpack.c.l.b16 %v235
      %v538 = vunpack.c.h.b16 %v235
      %v539 = vunpack.c.l.b16 %v236
      %v540 = vunpack.c.h.b16 %v236
      %v541 = vunpack.c.l.b16 %v237
      %v542 = vunpack.c.h.b16 %v237
      %v543 = vunpack.c.l.b16 %v238
      %v544 = vunpack.c.h.b16 %v238
      %v545 = vunpack.c.l.b16 %v239
      %v546 = vunpack.c.h.b16 %v239
      %v547 = vunpack.c.l.b16 %v240
      %v548 = vunpack.c.h.b16 %v240
      %v549 = vunpack.c.l.b16 %v241
      %v550 = vunpack.c.h.b16 %v241
      %v551 = vunpack.c.l.b16 %v242
      %v552 = vunpack.c.h.b16 %v242
      %v553 = vunpack.c.l.b16 %v243
      %v554 = vunpack.c.h.b16 %v243
      %v555 = vunpack.c.l.b16 %v244
      %v556 = vunpack.c.h.b16 %v244
      %v557 = vunpack.c.l.b16 %v245
      %v558 = vunpack.c.h.b16 %v245
      %v559 = vunpack.c.l.b16 %v246
      %v560 = vunpack.c.h.b16 %v246
      %v561 = vunpack.c.l.b16 %v247
      %v562 = vunpack.c.h.b16 %v247
      %v563 = vunpack.c.l.b16 %v248
      %v564 = vunpack.c.h.b16 %v248
      %v565 = vunpack.c.l.b16 %v249
      %v566 = vunpack.c.h.b16 %v249
      %v567 = vunpack.c.l.b16 %v250
      %v568 = vunpack.c.h.b16 %v250
      %v569 = vunpack.c.l.b16 %v251
      %v570 = vunpack.c.h.b16 %v251
      %v571 = vunpack.c.l.b16 %v252
      %v572 = vunpack.c.h.b16 %v252
      %v573 = vpack.c.b16 %v453, %v445
      %v574 = vpack.c.b16 %v454, %v446
      %v575 = vpack.c.b16 %v455, %v447
      %v576 = vpack.c.b16 %v456, %v448
      %v577 = vpack.c.b16 %v457, %v449
      %v578 = vpack.c.b16 %v458, %v450
      %v579 = vpack.c.b16 %v459, %v451
      %v580 = vpack.c.b16 %v460, %v452
      %v581 = vpack.c.b16 %v469, %v461
      %v582 = vpack.c.b16 %v470, %v462
      %v583 = vpack.c.b16 %v471, %v463
      %v584 = vpack.c.b16 %v472, %v464
      %v585 = vpack.c.b16 %v473, %v465
      %v586 = vpack.c.b16 %v474, %v466
      %v587 = vpack.c.b16 %v475, %v467
      %v588 = vpack.c.b16 %v476, %v468
      %v589 = vpack.c.b16 %v485, %v477
      %v590 = vpack.c.b16 %v486, %v478
      %v591 = vpack.c.b16 %v487, %v479
      %v592 = vpack.c.b16 %v488, %v480
      %v593 = vpack.c.b16 %v489, %v481
      %v594 = vpack.c.b16 %v490, %v482
      %v595 = vpack.c.b16 %v491, %v483
      %v596 = vpack.c.b16 %v492, %v484
      %v597 = vpack.c.b16 %v501, %v493
      %v598 = vpack.c.b16 %v502, %v494
      %v599 = vpack.c.b16 %v503, %v495
      %v600 = vpack.c.b16 %v504, %v496
      %v601 = vpack.c.b16 %v505, %v497
      %v602 = vpack.c.b16 %v506, %v498
      %v603 = vpack.c.b16 %v507, %v499
      %v604 = vpack.c.b16 %v508, %v500
      %v605 = vpack.c.b16 %v517, %v509
      %v606 = vpack.c.b16 %v518, %v510
      %v607 = vpack.c.b16 %v519, %v511
      %v608 = vpack.c.b16 %v520, %v512
      %v609 = vpack.c.b16 %v521, %v513
      %v610 = vpack.c.b16 %v522, %v514
      %v611 = vpack.c.b16 %v523, %v515
      %v612 = vpack.c.b16 %v524, %v516
      %v613 = vpack.c.b16 %v533, %v525
      %v614 = vpack.c.b16 %v534, %v526
      %v615 = vpack.c.b16 %v535, %v527
      %v616 = vpack.c.b16 %v536, %v528
      %v617 = vpack.c.b16 %v537, %v529
      %v618 = vpack.c.b16 %v538, %v530
      %v619 = vpack.c.b16 %v539, %v531
      %v620 = vpack.c.b16 %v540, %v532
      %v621 = vpack.c.b16 %v549, %v541
      %v622 = vpack.c.b16 %v550, %v542
      %v623 = vpack.c.b16 %v551, %v543
      %v624 = vpack.c.b16 %v552, %v544
      %v625 = vpack.c.b16 %v553, %v545
      %v626 = vpack.c.b16 %v554, %v546
      %v627 = vpack.c.b16 %v555, %v547
      %v628 = vpack.c.b16 %v556, %v548
      %v629 = vpack.c.b16 %v565, %v557
      %v630 = vpack.c.b16 %v566, %v558
      %v631 = vpack.c.b16 %v567, %v559
      %v632 = vpack.c.b16 %v568, %v560
      %v633 = vpack.c.b16 %v569, %v561
      %v634 = vpack.c.b16 %v570, %v562
      %v635 = vpack.c.b16 %v571, %v563
      %v636 = vpack.c.b16 %v572, %v564
      %v829 = vunpack.c.l.b16 %v253
      %v830 = vunpack.c.l.b16 %v254
      %v831 = vunpack.c.l.b16 %v255
      %v832 = vunpack.c.l.b16 %v256
      %v833 = vunpack.c.l.b16 %v257
      %v834 = vunpack.c.l.b16 %v258
      %v835 = vunpack.c.l.b16 %v259
      %v836 = vunpack.c.l.b16 %v260
      %v837 = vunpack.c.l.b16 %v261
      %v838 = vunpack.c.l.b16 %v262
      %v839 = vunpack.c.l.b16 %v263
      %v840 = vunpack.c.l.b16 %v264
      %v841 = vunpack.c.l.b16 %v265
      %v842 = vunpack.c.l.b16 %v266
      %v843 = vunpack.c.l.b16 %v267
      %v844 = vunpack.c.l.b16 %v268
      %v845 = vunpack.c.l.b16 %v269
      %v846 = vunpack.c.l.b16 %v270
      %v847 = vunpack.c.l.b16 %v271
      %v848 = vunpack.c.l.b16 %v272
      %v849 = vunpack.c.l.b16 %v273
      %v850 = vunpack.c.l.b16 %v274
      %v851 = vunpack.c.l.b16 %v275
      %v852 = vunpack.c.l.b16 %v276
      %v853 = vunpack.c.l.b16 %v277
      %v854 = vunpack.c.l.b16 %v278
      %v855 = vunpack.c.l.b16 %v279
      %v856 = vunpack.c.l.b16 %v280
      %v857 = vunpack.c.l.b16 %v281
      %v858 = vunpack.c.l.b16 %v282
      %v859 = vunpack.c.l.b16 %v283
      %v860 = vunpack.c.l.b16 %v284
      %v861 = vunpack.c.l.b16 %v285
      %v862 = vunpack.c.l.b16 %v286
      %v863 = vunpack.c.l.b16 %v287
      %v864 = vunpack.c.l.b16 %v288
      %v865 = vunpack.c.l.b16 %v289
      %v866 = vunpack.c.l.b16 %v290
      %v867 = vunpack.c.l.b16 %v291
      %v868 = vunpack.c.l.b16 %v292
      %v869 = vunpack.c.l.b16 %v293
      %v870 = vunpack.c.l.b16 %v294
      %v871 = vunpack.c.l.b16 %v295
      %v872 = vunpack.c.l.b16 %v296
      %v873 = vunpack.c.l.b16 %v297
      %v874 = vunpack.c.l.b16 %v298
      %v875 = vunpack.c.l.b16 %v299
      %v876 = vunpack.c.l.b16 %v300
      %v877 = vunpack.c.l.b16 %v301
      %v878 = vunpack.c.l.b16 %v302
      %v879 = vunpack.c.l.b16 %v303
      %v880 = vunpack.c.l.b16 %v304
      %v881 = vunpack.c.l.b16 %v305
      %v882 = vunpack.c.l.b16 %v306
      %v883 = vunpack.c.l.b16 %v307
      %v884 = vunpack.c.l.b16 %v308
      %v885 = vunpack.c.l.b16 %v309
      %v886 = vunpack.c.l.b16 %v310
      %v887 = vunpack.c.l.b16 %v311
      %v888 = vunpack.c.l.b16 %v312
      %v889 = vunpack.c.l.b16 %v313
      %v890 = vunpack.c.l.b16 %v314
      %v891 = vunpack.c.l.b16 %v315
      %v892 = vunpack.c.l.b16 %v316
      %v893 = vunpack.c.l.b16 %v317
      %v894 = vunpack.c.l.b16 %v318
      %v895 = vunpack.c.l.b16 %v319
      %v896 = vunpack.c.l.b16 %v320
      %v897 = vunpack.c.l.b16 %v321
      %v898 = vunpack.c.l.b16 %v322
      %v899 = vunpack.c.l.b16 %v323
      %v900 = vunpack.c.l.b16 %v324
      %v901 = vunpack.c.l.b16 %v325
      %v902 = vunpack.c.l.b16 %v326
      %v903 = vunpack.c.l.b16 %v327
      %v904 = vunpack.c.l.b16 %v328
      %v905 = vunpack.c.l.b16 %v329
      %v906 = vunpack.c.l.b16 %v330
      %v907 = vunpack.c.l.b16 %v331
      %v908 = vunpack.c.l.b16 %v332
      %v909 = vunpack.c.l.b16 %v333
      %v910 = vunpack.c.l.b16 %v334
      %v911 = vunpack.c.l.b16 %v335
      %v912 = vunpack.c.l.b16 %v336
      %v913 = vunpack.c.l.b16 %v337
      %v914 = vunpack.c.l.b16 %v338
      %v915 = vunpack.c.l.b16 %v339
      %v916 = vunpack.c.l.b16 %v340
      %v917 = vunpack.c.l.b16 %v341
      %v918 = vunpack.c.l.b16 %v342
      %v919 = vunpack.c.l.b16 %v343
      %v920 = vunpack.c.l.b16 %v344
      %v921 = vunpack.c.l.b16 %v345
      %v922 = vunpack.c.l.b16 %v346
      %v923 = vunpack.c.l.b16 %v347
      %v924 = vunpack.c.l.b16 %v348
      %v925 = vunpack.c.l.b16 %v349
      %v926 = vunpack.c.l.b16 %v350
      %v927 = vunpack.c.l.b16 %v351
      %v928 = vunpack.c.l.b16 %v352
      %v929 = vunpack.c.l.b16 %v353
      %v930 = vunpack.c.l.b16 %v354
      %v931 = vunpack.c.l.b16 %v355
      %v932 = vunpack.c.l.b16 %v356
      %v933 = vunpack.c.l.b16 %v357
      %v934 = vunpack.c.l.b16 %v358
      %v935 = vunpack.c.l.b16 %v359
      %v936 = vunpack.c.l.b16 %v360
      %v937 = vunpack.c.l.b16 %v361
      %v938 = vunpack.c.l.b16 %v362
      %v939 = vunpack.c.l.b16 %v363
      %v940 = vunpack.c.l.b16 %v364
      %v941 = vunpack.c.l.b16 %v365
      %v942 = vunpack.c.l.b16 %v366
      %v943 = vunpack.c.l.b16 %v367
      %v944 = vunpack.c.l.b16 %v368
      %v945 = vunpack.c.l.b16 %v369
      %v946 = vunpack.c.l.b16 %v370
      %v947 = vunpack.c.l.b16 %v371
      %v948 = vunpack.c.l.b16 %v372
      %v949 = vunpack.c.l.b16 %v373
      %v950 = vunpack.c.l.b16 %v374
      %v951 = vunpack.c.l.b16 %v375
      %v952 = vunpack.c.l.b16 %v376
      %v953 = vunpack.c.l.b16 %v377
      %v954 = vunpack.c.l.b16 %v378
      %v955 = vunpack.c.l.b16 %v379
      %v956 = vunpack.c.l.b16 %v380
      %v957 = vpack.c.b16 %v830, %v829
      %v958 = vpack.c.b16 %v832, %v831
      %v959 = vpack.c.b16 %v834, %v833
      %v960 = vpack.c.b16 %v836, %v835
      %v961 = vpack.c.b16 %v838, %v837
      %v962 = vpack.c.b16 %v840, %v839
      %v963 = vpack.c.b16 %v842, %v841
      %v964 = vpack.c.b16 %v844, %v843
      %v965 = vpack.c.b16 %v846, %v845
      %v966 = vpack.c.b16 %v848, %v847
      %v967 = vpack.c.b16 %v850, %v849
      %v968 = vpack.c.b16 %v852, %v851
      %v969 = vpack.c.b16 %v854, %v853
      %v970 = vpack.c.b16 %v856, %v855
      %v971 = vpack.c.b16 %v858, %v857
      %v972 = vpack.c.b16 %v860, %v859
      %v973 = vpack.c.b16 %v862, %v861
      %v974 = vpack.c.b16 %v864, %v863
      %v975 = vpack.c.b16 %v866, %v865
      %v976 = vpack.c.b16 %v868, %v867
      %v977 = vpack.c.b16 %v870, %v869
      %v978 = vpack.c.b16 %v872, %v871
      %v979 = vpack.c.b16 %v874, %v873
      %v980 = vpack.c.b16 %v876, %v875
      %v981 = vpack.c.b16 %v878, %v877
      %v982 = vpack.c.b16 %v880, %v879
      %v983 = vpack.c.b16 %v882, %v881
      %v984 = vpack.c.b16 %v884, %v883
      %v985 = vpack.c.b16 %v886, %v885
      %v986 = vpack.c.b16 %v888, %v887
      %v987 = vpack.c.b16 %v890, %v889
      %v988 = vpack.c.b16 %v892, %v891
      %v989 = vpack.c.b16 %v894, %v893
      %v990 = vpack.c.b16 %v896, %v895
      %v991 = vpack.c.b16 %v898, %v897
      %v992 = vpack.c.b16 %v900, %v899
      %v993 = vpack.c.b16 %v902, %v901
      %v994 = vpack.c.b16 %v904, %v903
      %v995 = vpack.c.b16 %v906, %v905
      %v996 = vpack.c.b16 %v908, %v907
      %v997 = vpack.c.b16 %v910, %v909
      %v998 = vpack.c.b16 %v912, %v911
      %v999 = vpack.c.b16 %v914, %v913
      %v1000 = vpack.c.b16 %v916, %v915
      %v1001 = vpack.c.b16 %v918, %v917
      %v1002 = vpack.c.b16 %v920, %v919
      %v1003 = vpack.c.b16 %v922, %v921
      %v1004 = vpack.c.b16 %v924, %v923
      %v1005 = vpack.c.b16 %v926, %v925
      %v1006 = vpack.c.b16 %v928, %v927
      %v1007 = vpack.c.b16 %v930, %v929
      %v1008 = vpack.c.b16 %v932, %v931
      %v1009 = vpack.c.b16 %v934, %v933
      %v1010 = vpack.c.b16 %v936, %v935
      %v1011 = vpack.c.b16 %v938, %v937
      %v1012 = vpack.c.b16 %v940, %v939
      %v1013 = vpack.c.b16 %v942, %v941
      %v1014 = vpack.c.b16 %v944, %v943
      %v1015 = vpack.c.b16 %v946, %v945
      %v1016 = vpack.c.b16 %v948, %v947
      %v1017 = vpack.c.b16 %v950, %v949
      %v1018 = vpack.c.b16 %v952, %v951
      %v1019 = vpack.c.b16 %v954, %v953
      %v1020 = vpack.c.b16 %v956, %v955
      %1085 = vmatprep.subr.bf16.mxu0 0
      %1086 = vmatpush1.bf16.msra.mxu0 %v957
      %1087 = vmatprep.subr.bf16.mxu0 0
      %1088 = vmatpush1.bf16.msra.mxu0 %v958
      %1089 = vmatprep.subr.bf16.mxu0 0
      %1090 = vmatpush1.bf16.msra.mxu0 %v959
      %1091 = vmatprep.subr.bf16.mxu0 0
      %1092 = vmatpush1.bf16.msra.mxu0 %v960
      %1093 = vmatprep.subr.bf16.mxu0 0
      %1094 = vmatpush1.bf16.msra.mxu0 %v961
      %1095 = vmatprep.subr.bf16.mxu0 0
      %1096 = vmatpush1.bf16.msra.mxu0 %v962
      %1097 = vmatprep.subr.bf16.mxu0 0
      %1098 = vmatpush1.bf16.msra.mxu0 %v963
      %1099 = vmatprep.subr.bf16.mxu0 0
      %1100 = vmatpush1.bf16.msra.mxu0 %v964
      %1101 = vmatprep.subr.bf16.mxu0 0
      %1102 = vmatpush1.bf16.msra.mxu0 %v965
      %1103 = vmatprep.subr.bf16.mxu0 0
      %1104 = vmatpush1.bf16.msra.mxu0 %v966
      %1105 = vmatprep.subr.bf16.mxu0 0
      %1106 = vmatpush1.bf16.msra.mxu0 %v967
      %1107 = vmatprep.subr.bf16.mxu0 0
      %1108 = vmatpush1.bf16.msra.mxu0 %v968
      %1109 = vmatprep.subr.bf16.mxu0 0
      %1110 = vmatpush1.bf16.msra.mxu0 %v969
      %1111 = vmatprep.subr.bf16.mxu0 0
      %1112 = vmatpush1.bf16.msra.mxu0 %v970
      %1113 = vmatprep.subr.bf16.mxu0 0
      %1114 = vmatpush1.bf16.msra.mxu0 %v971
      %1115 = vmatprep.subr.bf16.mxu0 0
      %1116 = vmatpush1.bf16.msra.mxu0 %v972
      %1117 = vmatprep.mubr.bf16.mxu0 %v574
      %1118 = vmatmul.mubr.bf16.gmra.mrb[0].mxu0 %v573
      %v1119 = vpop.f32.mrb[0].mxu0
      %v1120 = vadd.f32 0.0, %v1119
      %v1121 = vpop.f32.mrb[0].mxu0
      %v1122 = vpop.f32.mrb[0].mxu0
      %v1123 = vadd.f32 0.0, %v1122
      %v1124 = vpop.f32.mrb[0].mxu0
      %1125 = vmatprep.mubr.bf16.mxu0 %v582
      %1126 = vmatmul.mubr.bf16.gmra.mrb[0].mxu0 %v581
      %v1127 = vpop.f32.mrb[0].mxu0
      %v1128 = vadd.f32 0.0, %v1127
      %v1129 = vpop.f32.mrb[0].mxu0
      %v1130 = vpop.f32.mrb[0].mxu0
      %v1131 = vadd.f32 0.0, %v1130
      %v1132 = vpop.f32.mrb[0].mxu0
      %1133 = vmatprep.mubr.bf16.mxu0 %v590
      %1134 = vmatmul.mubr.bf16.gmra.mrb[0].mxu0 %v589
      %v1135 = vpop.f32.mrb[0].mxu0
      %v1136 = vadd.f32 0.0, %v1135
      %v1137 = vpop.f32.mrb[0].mxu0
      %v1138 = vpop.f32.mrb[0].mxu0
      %v1139 = vadd.f32 0.0, %v1138
      %v1140 = vpop.f32.mrb[0].mxu0
      %1141 = vmatprep.mubr.bf16.mxu0 %v598
      %1142 = vmatmul.mubr.bf16.gmra.mrb[0].mxu0 %v597
      %v1143 = vpop.f32.mrb[0].mxu0
      %v1144 = vadd.f32 0.0, %v1143
      %v1145 = vpop.f32.mrb[0].mxu0
      %v1146 = vpop.f32.mrb[0].mxu0
      %v1147 = vadd.f32 0.0, %v1146
      %v1148 = vpop.f32.mrb[0].mxu0
      %1149 = vmatprep.mubr.bf16.mxu0 %v606
      %1150 = vmatmul.mubr.bf16.gmra.mrb[0].mxu0 %v605
      %v1151 = vpop.f32.mrb[0].mxu0
      %v1152 = vadd.f32 0.0, %v1151
      %v1153 = vpop.f32.mrb[0].mxu0
      %v1154 = vpop.f32.mrb[0].mxu0
      %v1155 = vadd.f32 0.0, %v1154
      %v1156 = vpop.f32.mrb[0].mxu0
      %1157 = vmatprep.mubr.bf16.mxu0 %v614
      %1158 = vmatmul.mubr.bf16.gmra.mrb[0].mxu0 %v613
      %v1159 = vpop.f32.mrb[0].mxu0
      %v1160 = vadd.f32 0.0, %v1159
      %v1161 = vpop.f32.mrb[0].mxu0
      %v1162 = vpop.f32.mrb[0].mxu0
      %v1163 = vadd.f32 0.0, %v1162
      %v1164 = vpop.f32.mrb[0].mxu0
      %1165 = vmatprep.mubr.bf16.mxu0 %v622
      %1166 = vmatmul.mubr.bf16.gmra.mrb[0].mxu0 %v621
      %v1167 = vpop.f32.mrb[0].mxu0
      %v1168 = vadd.f32 0.0, %v1167
      %v1169 = vpop.f32.mrb[0].mxu0
      %v1170 = vpop.f32.mrb[0].mxu0
      %v1171 = vadd.f32 0.0, %v1170
      %v1172 = vpop.f32.mrb[0].mxu0
      %1173 = vmatprep.mubr.bf16.mxu0 %v630
      %1174 = vmatmul.mubr.bf16.gmra.mrb[0].mxu0 %v629
      %v1175 = vpop.f32.mrb[0].mxu0
      %v1176 = vadd.f32 0.0, %v1175
      %v1177 = vpop.f32.mrb[0].mxu0
      %v1178 = vpop.f32.mrb[0].mxu0
      %v1179 = vadd.f32 0.0, %v1178
      %v1180 = vpop.f32.mrb[0].mxu0
      %1181 = vdwg.mxu0
      %1182 = vmatprep.subr.bf16.mxu0 0
      %1183 = vmatpush1.bf16.msra.mxu0 %v973
      %1184 = vmatprep.subr.bf16.mxu0 0
      %1185 = vmatpush1.bf16.msra.mxu0 %v974
      %1186 = vmatprep.subr.bf16.mxu0 0
      %1187 = vmatpush1.bf16.msra.mxu0 %v975
      %1188 = vmatprep.subr.bf16.mxu0 0
      %1189 = vmatpush1.bf16.msra.mxu0 %v976
      %1190 = vmatprep.subr.bf16.mxu0 0
      %1191 = vmatpush1.bf16.msra.mxu0 %v977
      %1192 = vmatprep.subr.bf16.mxu0 0
      %1193 = vmatpush1.bf16.msra.mxu0 %v978
      %1194 = vmatprep.subr.bf16.mxu0 0
      %1195 = vmatpush1.bf16.msra.mxu0 %v979
      %1196 = vmatprep.subr.bf16.mxu0 0
      %1197 = vmatpush1.bf16.msra.mxu0 %v980
      %1198 = vmatprep.subr.bf16.mxu0 0
      %1199 = vmatpush1.bf16.msra.mxu0 %v981
      %1200 = vmatprep.subr.bf16.mxu0 0
      %1201 = vmatpush1.bf16.msra.mxu0 %v982
      %1202 = vmatprep.subr.bf16.mxu0 0
      %1203 = vmatpush1.bf16.msra.mxu0 %v983
      %1204 = vmatprep.subr.bf16.mxu0 0
      %1205 = vmatpush1.bf16.msra.mxu0 %v984
      %1206 = vmatprep.subr.bf16.mxu0 0
      %1207 = vmatpush1.bf16.msra.mxu0 %v985
      %1208 = vmatprep.subr.bf16.mxu0 0
      %1209 = vmatpush1.bf16.msra.mxu0 %v986
      %1210 = vmatprep.subr.bf16.mxu0 0
      %1211 = vmatpush1.bf16.msra.mxu0 %v987
      %1212 = vmatprep.subr.bf16.mxu0 0
      %1213 = vmatpush1.bf16.msra.mxu0 %v988
      %1214 = vmatprep.mubr.bf16.mxu0 %v576
      %1215 = vmatmul.mubr.bf16.gmra.mrb[0].mxu0 %v575
      %v1216 = vpop.f32.mrb[0].mxu0
      %v1217 = vadd.f32 %v1120, %v1216
      %v1218 = vpop.f32.mrb[0].mxu0
      %v1219 = vpop.f32.mrb[0].mxu0
      %v1220 = vadd.f32 %v1123, %v1219
      %v1221 = vpop.f32.mrb[0].mxu0
      %1222 = vmatprep.mubr.bf16.mxu0 %v584
      %1223 = vmatmul.mubr.bf16.gmra.mrb[0].mxu0 %v583
      %v1224 = vpop.f32.mrb[0].mxu0
      %v1225 = vadd.f32 %v1128, %v1224
      %v1226 = vpop.f32.mrb[0].mxu0
      %v1227 = vpop.f32.mrb[0].mxu0
      %v1228 = vadd.f32 %v1131, %v1227
      %v1229 = vpop.f32.mrb[0].mxu0
      %1230 = vmatprep.mubr.bf16.mxu0 %v592
      %1231 = vmatmul.mubr.bf16.gmra.mrb[0].mxu0 %v591
      %v1232 = vpop.f32.mrb[0].mxu0
      %v1233 = vadd.f32 %v1136, %v1232
      %v1234 = vpop.f32.mrb[0].mxu0
      %v1235 = vpop.f32.mrb[0].mxu0
      %v1236 = vadd.f32 %v1139, %v1235
      %v1237 = vpop.f32.mrb[0].mxu0
      %1238 = vmatprep.mubr.bf16.mxu0 %v600
      %1239 = vmatmul.mubr.bf16.gmra.mrb[0].mxu0 %v599
      %v1240 = vpop.f32.mrb[0].mxu0
      %v1241 = vadd.f32 %v1144, %v1240
      %v1242 = vpop.f32.mrb[0].mxu0
      %v1243 = vpop.f32.mrb[0].mxu0
      %v1244 = vadd.f32 %v1147, %v1243
      %v1245 = vpop.f32.mrb[0].mxu0
      %1246 = vmatprep.mubr.bf16.mxu0 %v608
      %1247 = vmatmul.mubr.bf16.gmra.mrb[0].mxu0 %v607
      %v1248 = vpop.f32.mrb[0].mxu0
      %v1249 = vadd.f32 %v1152, %v1248
      %v1250 = vpop.f32.mrb[0].mxu0
      %v1251 = vpop.f32.mrb[0].mxu0
      %v1252 = vadd.f32 %v1155, %v1251
      %v1253 = vpop.f32.mrb[0].mxu0
      %1254 = vmatprep.mubr.bf16.mxu0 %v616
      %1255 = vmatmul.mubr.bf16.gmra.mrb[0].mxu0 %v615
      %v1256 = vpop.f32.mrb[0].mxu0
      %v1257 = vadd.f32 %v1160, %v1256
      %v1258 = vpop.f32.mrb[0].mxu0
      %v1259 = vpop.f32.mrb[0].mxu0
      %v1260 = vadd.f32 %v1163, %v1259
      %v1261 = vpop.f32.mrb[0].mxu0
      %1262 = vmatprep.mubr.bf16.mxu0 %v624
      %1263 = vmatmul.mubr.bf16.gmra.mrb[0].mxu0 %v623
      %v1264 = vpop.f32.mrb[0].mxu0
      %v1265 = vadd.f32 %v1168, %v1264
      %v1266 = vpop.f32.mrb[0].mxu0
      %v1267 = vpop.f32.mrb[0].mxu0
      %v1268 = vadd.f32 %v1171, %v1267
      %v1269 = vpop.f32.mrb[0].mxu0
      %1270 = vmatprep.mubr.bf16.mxu0 %v632
      %1271 = vmatmul.mubr.bf16.gmra.mrb[0].mxu0 %v631
      %v1272 = vpop.f32.mrb[0].mxu0
      %v1273 = vadd.f32 %v1176, %v1272
      %v1274 = vpop.f32.mrb[0].mxu0
      %v1275 = vpop.f32.mrb[0].mxu0
      %v1276 = vadd.f32 %v1179, %v1275
      %v1277 = vpop.f32.mrb[0].mxu0
      %1278 = vdwg.mxu0
      %1279 = vmatprep.subr.bf16.mxu0 0
      %1280 = vmatpush1.bf16.msra.mxu0 %v989
      %1281 = vmatprep.subr.bf16.mxu0 0
      %1282 = vmatpush1.bf16.msra.mxu0 %v990
      %1283 = vmatprep.subr.bf16.mxu0 0
      %1284 = vmatpush1.bf16.msra.mxu0 %v991
      %1285 = vmatprep.subr.bf16.mxu0 0
      %1286 = vmatpush1.bf16.msra.mxu0 %v992
      %1287 = vmatprep.subr.bf16.mxu0 0
      %1288 = vmatpush1.bf16.msra.mxu0 %v993
      %1289 = vmatprep.subr.bf16.mxu0 0
      %1290 = vmatpush1.bf16.msra.mxu0 %v994
      %1291 = vmatprep.subr.bf16.mxu0 0
      %1292 = vmatpush1.bf16.msra.mxu0 %v995
      %1293 = vmatprep.subr.bf16.mxu0 0
      %1294 = vmatpush1.bf16.msra.mxu0 %v996
      %1295 = vmatprep.subr.bf16.mxu0 0
      %1296 = vmatpush1.bf16.msra.mxu0 %v997
      %1297 = vmatprep.subr.bf16.mxu0 0
      %1298 = vmatpush1.bf16.msra.mxu0 %v998
      %1299 = vmatprep.subr.bf16.mxu0 0
      %1300 = vmatpush1.bf16.msra.mxu0 %v999
      %1301 = vmatprep.subr.bf16.mxu0 0
      %1302 = vmatpush1.bf16.msra.mxu0 %v1000
      %1303 = vmatprep.subr.bf16.mxu0 0
      %1304 = vmatpush1.bf16.msra.mxu0 %v1001
      %1305 = vmatprep.subr.bf16.mxu0 0
      %1306 = vmatpush1.bf16.msra.mxu0 %v1002
      %1307 = vmatprep.subr.bf16.mxu0 0
      %1308 = vmatpush1.bf16.msra.mxu0 %v1003
      %1309 = vmatprep.subr.bf16.mxu0 0
      %1310 = vmatpush1.bf16.msra.mxu0 %v1004
      %1311 = vmatprep.mubr.bf16.mxu0 %v578
      %1312 = vmatmul.mubr.bf16.gmra.mrb[0].mxu0 %v577
      %v1313 = vpop.f32.mrb[0].mxu0
      %v1314 = vadd.f32 %v1217, %v1313
      %v1315 = vpop.f32.mrb[0].mxu0
      %v1316 = vpop.f32.mrb[0].mxu0
      %v1317 = vadd.f32 %v1220, %v1316
      %v1318 = vpop.f32.mrb[0].mxu0
      %1319 = vmatprep.mubr.bf16.mxu0 %v586
      %1320 = vmatmul.mubr.bf16.gmra.mrb[0].mxu0 %v585
      %v1321 = vpop.f32.mrb[0].mxu0
      %v1322 = vadd.f32 %v1225, %v1321
      %v1323 = vpop.f32.mrb[0].mxu0
      %v1324 = vpop.f32.mrb[0].mxu0
      %v1325 = vadd.f32 %v1228, %v1324
      %v1326 = vpop.f32.mrb[0].mxu0
      %1327 = vmatprep.mubr.bf16.mxu0 %v594
      %1328 = vmatmul.mubr.bf16.gmra.mrb[0].mxu0 %v593
      %v1329 = vpop.f32.mrb[0].mxu0
      %v1330 = vadd.f32 %v1233, %v1329
      %v1331 = vpop.f32.mrb[0].mxu0
      %v1332 = vpop.f32.mrb[0].mxu0
      %v1333 = vadd.f32 %v1236, %v1332
      %v1334 = vpop.f32.mrb[0].mxu0
      %1335 = vmatprep.mubr.bf16.mxu0 %v602
      %1336 = vmatmul.mubr.bf16.gmra.mrb[0].mxu0 %v601
      %v1337 = vpop.f32.mrb[0].mxu0
      %v1338 = vadd.f32 %v1241, %v1337
      %v1339 = vpop.f32.mrb[0].mxu0
      %v1340 = vpop.f32.mrb[0].mxu0
      %v1341 = vadd.f32 %v1244, %v1340
      %v1342 = vpop.f32.mrb[0].mxu0
      %1343 = vmatprep.mubr.bf16.mxu0 %v610
      %1344 = vmatmul.mubr.bf16.gmra.mrb[0].mxu0 %v609
      %v1345 = vpop.f32.mrb[0].mxu0
      %v1346 = vadd.f32 %v1249, %v1345
      %v1347 = vpop.f32.mrb[0].mxu0
      %v1348 = vpop.f32.mrb[0].mxu0
      %v1349 = vadd.f32 %v1252, %v1348
      %v1350 = vpop.f32.mrb[0].mxu0
      %1351 = vmatprep.mubr.bf16.mxu0 %v618
      %1352 = vmatmul.mubr.bf16.gmra.mrb[0].mxu0 %v617
      %v1353 = vpop.f32.mrb[0].mxu0
      %v1354 = vadd.f32 %v1257, %v1353
      %v1355 = vpop.f32.mrb[0].mxu0
      %v1356 = vpop.f32.mrb[0].mxu0
      %v1357 = vadd.f32 %v1260, %v1356
      %v1358 = vpop.f32.mrb[0].mxu0
      %1359 = vmatprep.mubr.bf16.mxu0 %v626
      %1360 = vmatmul.mubr.bf16.gmra.mrb[0].mxu0 %v625
      %v1361 = vpop.f32.mrb[0].mxu0
      %v1362 = vadd.f32 %v1265, %v1361
      %v1363 = vpop.f32.mrb[0].mxu0
      %v1364 = vpop.f32.mrb[0].mxu0
      %v1365 = vadd.f32 %v1268, %v1364
      %v1366 = vpop.f32.mrb[0].mxu0
      %1367 = vmatprep.mubr.bf16.mxu0 %v634
      %1368 = vmatmul.mubr.bf16.gmra.mrb[0].mxu0 %v633
      %v1369 = vpop.f32.mrb[0].mxu0
      %v1370 = vadd.f32 %v1273, %v1369
      %v1371 = vpop.f32.mrb[0].mxu0
      %v1372 = vpop.f32.mrb[0].mxu0
      %v1373 = vadd.f32 %v1276, %v1372
      %v1374 = vpop.f32.mrb[0].mxu0
      %1375 = vdwg.mxu0
      %1376 = vmatprep.subr.bf16.mxu0 0
      %1377 = vmatpush1.bf16.msra.mxu0 %v1005
      %1378 = vmatprep.subr.bf16.mxu0 0
      %1379 = vmatpush1.bf16.msra.mxu0 %v1006
      %1380 = vmatprep.subr.bf16.mxu0 0
      %1381 = vmatpush1.bf16.msra.mxu0 %v1007
      %1382 = vmatprep.subr.bf16.mxu0 0
      %1383 = vmatpush1.bf16.msra.mxu0 %v1008
      %1384 = vmatprep.subr.bf16.mxu0 0
      %1385 = vmatpush1.bf16.msra.mxu0 %v1009
      %1386 = vmatprep.subr.bf16.mxu0 0
      %1387 = vmatpush1.bf16.msra.mxu0 %v1010
      %1388 = vmatprep.subr.bf16.mxu0 0
      %1389 = vmatpush1.bf16.msra.mxu0 %v1011
      %1390 = vmatprep.subr.bf16.mxu0 0
      %1391 = vmatpush1.bf16.msra.mxu0 %v1012
      %1392 = vmatprep.subr.bf16.mxu0 0
      %1393 = vmatpush1.bf16.msra.mxu0 %v1013
      %1394 = vmatprep.subr.bf16.mxu0 0
      %1395 = vmatpush1.bf16.msra.mxu0 %v1014
      %1396 = vmatprep.subr.bf16.mxu0 0
      %1397 = vmatpush1.bf16.msra.mxu0 %v1015
      %1398 = vmatprep.subr.bf16.mxu0 0
      %1399 = vmatpush1.bf16.msra.mxu0 %v1016
      %1400 = vmatprep.subr.bf16.mxu0 0
      %1401 = vmatpush1.bf16.msra.mxu0 %v1017
      %1402 = vmatprep.subr.bf16.mxu0 0
      %1403 = vmatpush1.bf16.msra.mxu0 %v1018
      %1404 = vmatprep.subr.bf16.mxu0 0
      %1405 = vmatpush1.bf16.msra.mxu0 %v1019
      %1406 = vmatprep.subr.bf16.mxu0 0
      %1407 = vmatpush1.bf16.msra.mxu0 %v1020
      %1408 = vmatprep.mubr.bf16.mxu0 %v580
      %1409 = vmatmul.mubr.bf16.gmra.mrb[0].mxu0 %v579
      %v1410 = vpop.f32.mrb[0].mxu0
      %v1411 = vadd.f32 %v1314, %v1410
      %v1412 = vpop.f32.mrb[0].mxu0
      %v1413 = vpop.f32.mrb[0].mxu0
      %v1414 = vadd.f32 %v1317, %v1413
      %v1415 = vpop.f32.mrb[0].mxu0
      %1416 = vmatprep.mubr.bf16.mxu0 %v588
      %1417 = vmatmul.mubr.bf16.gmra.mrb[0].mxu0 %v587
      %v1418 = vpop.f32.mrb[0].mxu0
      %v1419 = vadd.f32 %v1322, %v1418
      %v1420 = vpop.f32.mrb[0].mxu0
      %v1421 = vpop.f32.mrb[0].mxu0
      %v1422 = vadd.f32 %v1325, %v1421
      %v1423 = vpop.f32.mrb[0].mxu0
      %1424 = vmatprep.mubr.bf16.mxu0 %v596
      %1425 = vmatmul.mubr.bf16.gmra.mrb[0].mxu0 %v595
      %v1426 = vpop.f32.mrb[0].mxu0
      %v1427 = vadd.f32 %v1330, %v1426
      %v1428 = vpop.f32.mrb[0].mxu0
      %v1429 = vpop.f32.mrb[0].mxu0
      %v1430 = vadd.f32 %v1333, %v1429
      %v1431 = vpop.f32.mrb[0].mxu0
      %1432 = vmatprep.mubr.bf16.mxu0 %v604
      %1433 = vmatmul.mubr.bf16.gmra.mrb[0].mxu0 %v603
      %v1434 = vpop.f32.mrb[0].mxu0
      %v1435 = vadd.f32 %v1338, %v1434
      %v1436 = vpop.f32.mrb[0].mxu0
      %v1437 = vpop.f32.mrb[0].mxu0
      %v1438 = vadd.f32 %v1341, %v1437
      %v1439 = vpop.f32.mrb[0].mxu0
      %1440 = vmatprep.mubr.bf16.mxu0 %v612
      %1441 = vmatmul.mubr.bf16.gmra.mrb[0].mxu0 %v611
      %v1442 = vpop.f32.mrb[0].mxu0
      %v1443 = vadd.f32 %v1346, %v1442
      %v1444 = vpop.f32.mrb[0].mxu0
      %v1445 = vpop.f32.mrb[0].mxu0
      %v1446 = vadd.f32 %v1349, %v1445
      %v1447 = vpop.f32.mrb[0].mxu0
      %1448 = vmatprep.mubr.bf16.mxu0 %v620
      %1449 = vmatmul.mubr.bf16.gmra.mrb[0].mxu0 %v619
      %v1450 = vpop.f32.mrb[0].mxu0
      %v1451 = vadd.f32 %v1354, %v1450
      %v1452 = vpop.f32.mrb[0].mxu0
      %v1453 = vpop.f32.mrb[0].mxu0
      %v1454 = vadd.f32 %v1357, %v1453
      %v1455 = vpop.f32.mrb[0].mxu0
      %1456 = vmatprep.mubr.bf16.mxu0 %v628
      %1457 = vmatmul.mubr.bf16.gmra.mrb[0].mxu0 %v627
      %v1458 = vpop.f32.mrb[0].mxu0
      %v1459 = vadd.f32 %v1362, %v1458
      %v1460 = vpop.f32.mrb[0].mxu0
      %v1461 = vpop.f32.mrb[0].mxu0
      %v1462 = vadd.f32 %v1365, %v1461
      %v1463 = vpop.f32.mrb[0].mxu0
      %1464 = vmatprep.mubr.bf16.mxu0 %v636
      %1465 = vmatmul.mubr.bf16.gmra.mrb[0].mxu0 %v635
      %v1466 = vpop.f32.mrb[0].mxu0
      %v1467 = vadd.f32 %v1370, %v1466
      %v1468 = vpop.f32.mrb[0].mxu0
      %v1469 = vpop.f32.mrb[0].mxu0
      %v1470 = vadd.f32 %v1373, %v1469
      %v1471 = vpop.f32.mrb[0].mxu0
      %1472 = vdwg.mxu0
      %v1473 = vpack.c.bf16 %v1414, %v1411
      %v1474 = vpack.c.bf16 %v1422, %v1419
      %v1475 = vpack.c.bf16 %v1430, %v1427
      %v1476 = vpack.c.bf16 %v1438, %v1435
      %v1477 = vpack.c.bf16 %v1446, %v1443
      %v1478 = vpack.c.bf16 %v1454, %v1451
      %v1479 = vpack.c.bf16 %v1462, %v1459
      %v1480 = vpack.c.bf16 %v1470, %v1467
      %v1489 = vunpack.c.l.b16 %v1473
      %v1490 = vunpack.c.h.b16 %v1473
      %v1491 = vunpack.c.l.b16 %v1474
      %v1492 = vunpack.c.h.b16 %v1474
      %v1493 = vunpack.c.l.b16 %v1475
      %v1494 = vunpack.c.h.b16 %v1475
      %v1495 = vunpack.c.l.b16 %v1476
      %v1496 = vunpack.c.h.b16 %v1476
      %v1497 = vunpack.c.l.b16 %v1477
      %v1498 = vunpack.c.h.b16 %v1477
      %v1499 = vunpack.c.l.b16 %v1478
      %v1500 = vunpack.c.h.b16 %v1478
      %v1501 = vunpack.c.l.b16 %v1479
      %v1502 = vunpack.c.h.b16 %v1479
      %v1503 = vunpack.c.l.b16 %v1480
      %v1504 = vunpack.c.h.b16 %v1480
      %v1505 = vpack.c.b16 %v1489, %v1489
      %v1506 = vpack.c.b16 %v1490, %v1490
      %v1507 = vpack.c.b16 %v1491, %v1491
      %v1508 = vpack.c.b16 %v1492, %v1492
      %v1509 = vpack.c.b16 %v1493, %v1493
      %v1510 = vpack.c.b16 %v1494, %v1494
      %v1511 = vpack.c.b16 %v1495, %v1495
      %v1512 = vpack.c.b16 %v1496, %v1496
      %v1513 = vpack.c.b16 %v1497, %v1497
      %v1514 = vpack.c.b16 %v1498, %v1498
      %v1515 = vpack.c.b16 %v1499, %v1499
      %v1516 = vpack.c.b16 %v1500, %v1500
      %v1517 = vpack.c.b16 %v1501, %v1501
      %v1518 = vpack.c.b16 %v1502, %v1502
      %v1519 = vpack.c.b16 %v1503, %v1503
      %v1520 = vpack.c.b16 %v1504, %v1504
      %1537 = vst [vmem:[%s182] sm:$0xf] %v1505
      %1538 = vst [vmem:[%s182 + $0x4] sm:$0xf] %v1506
      %1539 = vst [vmem:[%s182 + $0x8] sm:$0xf] %v1507
      %1540 = vst [vmem:[%s182 + $0xc] sm:$0xf] %v1508
      %1541 = vst [vmem:[%s182 + $0x10] sm:$0xf] %v1509
      %1542 = vst [vmem:[%s182 + $0x14] sm:$0xf] %v1510
      %1543 = vst [vmem:[%s182 + $0x18] sm:$0xf] %v1511
      %1544 = vst [vmem:[%s182 + $0x1c] sm:$0xf] %v1512
      %1545 = vst [vmem:[%s182 + $0x20] sm:$0xf] %v1513
      %1546 = vst [vmem:[%s182 + $0x24] sm:$0xf] %v1514
      %1547 = vst [vmem:[%s182 + $0x28] sm:$0xf] %v1515
      %1548 = vst [vmem:[%s182 + $0x2c] sm:$0xf] %v1516
      %1549 = vst [vmem:[%s182 + $0x30] sm:$0xf] %v1517
      %1550 = vst [vmem:[%s182 + $0x34] sm:$0xf] %v1518
      %1551 = vst [vmem:[%s182 + $0x38] sm:$0xf] %v1519
      %1552 = vst [vmem:[%s182 + $0x3c] sm:$0xf] %v1520
      %1553 = vmatprep.subr.mxu0 0.0
      %1554 = vmatpush1.msra.mxu0 %v1411
      %1555 = vmatprep.subr.mxu0 0.0
      %1556 = vmatpush1.msra.mxu0 %v1414
      %1557 = vmatprep.subr.mxu0 0.0
      %1558 = vmatpush1.msra.mxu0 %v1419
      %1559 = vmatprep.subr.mxu0 0.0
      %1560 = vmatpush1.msra.mxu0 %v1422
      %1561 = vmatprep.subr.mxu0 0.0
      %1562 = vmatpush1.msra.mxu0 %v1427
      %1563 = vmatprep.subr.mxu0 0.0
      %1564 = vmatpush1.msra.mxu0 %v1430
      %1565 = vmatprep.subr.mxu0 0.0
      %1566 = vmatpush1.msra.mxu0 %v1435
      %1567 = vmatprep.subr.mxu0 0.0
      %1568 = vmatpush1.msra.mxu0 %v1438
      %1569 = vmatprep.subr.mxu0 0.0
      %1570 = vmatpush1.msra.mxu0 %v1443
      %1571 = vmatprep.subr.mxu0 0.0
      %1572 = vmatpush1.msra.mxu0 %v1446
      %1573 = vmatprep.subr.mxu0 0.0
      %1574 = vmatpush1.msra.mxu0 %v1451
      %1575 = vmatprep.subr.mxu0 0.0
      %1576 = vmatpush1.msra.mxu0 %v1454
      %1577 = vmatprep.subr.mxu0 0.0
      %1578 = vmatpush1.msra.mxu0 %v1459
      %1579 = vmatprep.subr.mxu0 0.0
      %1580 = vmatpush1.msra.mxu0 %v1462
      %1581 = vmatprep.subr.mxu0 0.0
      %1582 = vmatpush1.msra.mxu0 %v1467
      %1583 = vmatprep.subr.mxu0 0.0
      %1584 = vmatpush1.msra.mxu0 %v1470
      %1585 = vmatprep.subr.mxu0 0.0
      %1586 = vmatpush1.msra.mxu0 0.0
      %1587 = vmatprep.subr.mxu0 0.0
      %1588 = vmatpush1.msra.mxu0 0.0
      %1589 = vmatprep.subr.mxu0 0.0
      %1590 = vmatpush1.msra.mxu0 0.0
      %1591 = vmatprep.subr.mxu0 0.0
      %1592 = vmatpush1.msra.mxu0 0.0
      %1593 = vmatprep.subr.mxu0 0.0
      %1594 = vmatpush1.msra.mxu0 0.0
      %1595 = vmatprep.subr.mxu0 0.0
      %1596 = vmatpush1.msra.mxu0 0.0
      %1597 = vmatprep.subr.mxu0 0.0
      %1598 = vmatpush1.msra.mxu0 0.0
      %1599 = vmatprep.subr.mxu0 0.0
      %1600 = vmatpush1.msra.mxu0 0.0
      %1601 = vmatprep.subr.mxu0 0.0
      %1602 = vmatpush1.msra.mxu0 0.0
      %1603 = vmatprep.subr.mxu0 0.0
      %1604 = vmatpush1.msra.mxu0 0.0
      %1605 = vmatprep.subr.mxu0 0.0
      %1606 = vmatpush1.msra.mxu0 0.0
      %1607 = vmatprep.subr.mxu0 0.0
      %1608 = vmatpush1.msra.mxu0 0.0
      %1609 = vmatprep.subr.mxu0 0.0
      %1610 = vmatpush1.msra.mxu0 0.0
      %1611 = vmatprep.subr.mxu0 0.0
      %1612 = vmatpush1.msra.mxu0 0.0
      %1613 = vmatprep.subr.mxu0 0.0
      %1614 = vmatpush1.msra.mxu0 0.0
      %1615 = vmatprep.subr.mxu0 0.0
      %1616 = vmatpush1.msra.mxu0 0.0
      %1617 = vmatprep.mubr.f32.mxu0 0.0
      %1618 = vmatmul.mubr.f32.gmra.mrb[0].mxu0 1.0
      %v1619 = vpop.f32.mrb[0].mxu0
      %v1620 = vadd.f32 0.0, %v1619
      %v1621 = vpop.f32.mrb[0].mxu0
      %1622 = vdwg.mxu0
      %v1623 = vmul.f32 %v1411, %v1411
      %v1624 = vmul.f32 %v1414, %v1414
      %v1625 = vmul.f32 %v1419, %v1419
      %v1626 = vmul.f32 %v1422, %v1422
      %v1627 = vmul.f32 %v1427, %v1427
      %v1628 = vmul.f32 %v1430, %v1430
      %v1629 = vmul.f32 %v1435, %v1435
      %v1630 = vmul.f32 %v1438, %v1438
      %v1631 = vmul.f32 %v1443, %v1443
      %v1632 = vmul.f32 %v1446, %v1446
      %v1633 = vmul.f32 %v1451, %v1451
      %v1634 = vmul.f32 %v1454, %v1454
      %v1635 = vmul.f32 %v1459, %v1459
      %v1636 = vmul.f32 %v1462, %v1462
      %v1637 = vmul.f32 %v1467, %v1467
      %v1638 = vmul.f32 %v1470, %v1470
      %1639 = vmatprep.subr.mxu0 0.0
      %1640 = vmatpush1.msra.mxu0 %v1623
      %1641 = vmatprep.subr.mxu0 0.0
      %1642 = vmatpush1.msra.mxu0 %v1624
      %1643 = vmatprep.subr.mxu0 0.0
      %1644 = vmatpush1.msra.mxu0 %v1625
      %1645 = vmatprep.subr.mxu0 0.0
      %1646 = vmatpush1.msra.mxu0 %v1626
      %1647 = vmatprep.subr.mxu0 0.0
      %1648 = vmatpush1.msra.mxu0 %v1627
      %1649 = vmatprep.subr.mxu0 0.0
      %1650 = vmatpush1.msra.mxu0 %v1628
      %1651 = vmatprep.subr.mxu0 0.0
      %1652 = vmatpush1.msra.mxu0 %v1629
      %1653 = vmatprep.subr.mxu0 0.0
      %1654 = vmatpush1.msra.mxu0 %v1630
      %1655 = vmatprep.subr.mxu0 0.0
      %1656 = vmatpush1.msra.mxu0 %v1631
      %1657 = vmatprep.subr.mxu0 0.0
      %1658 = vmatpush1.msra.mxu0 %v1632
      %1659 = vmatprep.subr.mxu0 0.0
      %1660 = vmatpush1.msra.mxu0 %v1633
      %1661 = vmatprep.subr.mxu0 0.0
      %1662 = vmatpush1.msra.mxu0 %v1634
      %1663 = vmatprep.subr.mxu0 0.0
      %1664 = vmatpush1.msra.mxu0 %v1635
      %1665 = vmatprep.subr.mxu0 0.0
      %1666 = vmatpush1.msra.mxu0 %v1636
      %1667 = vmatprep.subr.mxu0 0.0
      %1668 = vmatpush1.msra.mxu0 %v1637
      %1669 = vmatprep.subr.mxu0 0.0
      %1670 = vmatpush1.msra.mxu0 %v1638
      %1671 = vmatprep.subr.mxu0 0.0
      %1672 = vmatpush1.msra.mxu0 0.0
      %1673 = vmatprep.subr.mxu0 0.0
      %1674 = vmatpush1.msra.mxu0 0.0
      %1675 = vmatprep.subr.mxu0 0.0
      %1676 = vmatpush1.msra.mxu0 0.0
      %1677 = vmatprep.subr.mxu0 0.0
      %1678 = vmatpush1.msra.mxu0 0.0
      %1679 = vmatprep.subr.mxu0 0.0
      %1680 = vmatpush1.msra.mxu0 0.0
      %1681 = vmatprep.subr.mxu0 0.0
      %1682 = vmatpush1.msra.mxu0 0.0
      %1683 = vmatprep.subr.mxu0 0.0
      %1684 = vmatpush1.msra.mxu0 0.0
      %1685 = vmatprep.subr.mxu0 0.0
      %1686 = vmatpush1.msra.mxu0 0.0
      %1687 = vmatprep.subr.mxu0 0.0
      %1688 = vmatpush1.msra.mxu0 0.0
      %1689 = vmatprep.subr.mxu0 0.0
      %1690 = vmatpush1.msra.mxu0 0.0
      %1691 = vmatprep.subr.mxu0 0.0
      %1692 = vmatpush1.msra.mxu0 0.0
      %1693 = vmatprep.subr.mxu0 0.0
      %1694 = vmatpush1.msra.mxu0 0.0
      %1695 = vmatprep.subr.mxu0 0.0
      %1696 = vmatpush1.msra.mxu0 0.0
      %1697 = vmatprep.subr.mxu0 0.0
      %1698 = vmatpush1.msra.mxu0 0.0
      %1699 = vmatprep.subr.mxu0 0.0
      %1700 = vmatpush1.msra.mxu0 0.0
      %1701 = vmatprep.subr.mxu0 0.0
      %1702 = vmatpush1.msra.mxu0 0.0
      %1703 = vmatprep.mubr.f32.mxu0 0.0
      %1704 = vmatmul.mubr.f32.gmra.mrb[0].mxu0 1.0
      %v1705 = vpop.f32.mrb[0].mxu0
      %v1706 = vadd.f32 0.0, %v1705
      %v1707 = vpop.f32.mrb[0].mxu0
      %1708 = vdwg.mxu0
      %1709 = vst [vmem:[%s187] sm:$0x1] %v1620
      %1710 = vst [vmem:[%s187 + $0x1] sm:$0x1] %v1706
      %s1711 = smul.u32 16, %s15
      %p1712 = scmp.lt.s32.totalorder %s1711, 31
      %s1713 = scalar_select %p1712, %s1711, 31
      %s1714 = smul.addr %s1713, 4
      %s1715 = scalar_lea.vmem %s2, %s1714
      %p1716 = scmp.lt.s32.totalorder %s15, 1
      %s1717 = scalar_select %p1716, %s15, 1
      %s1718 = smul.addr %s1717, 2
      %s1719 = scalar_lea.vmem %s3, %s1718
      // Predicated region
      $region29: #{encoder_layer1_forward.4} parent=27 // pred_check
        %p1720 = pneg %p80
      $region30: #{encoder_layer1_forward.4} parent=27 // pred_check_branch
        %1722 = sbr.rel (%p1720) target = $region32
      $region31: #{encoder_layer1_forward.4} parent=27 // pred_region
        %s1723 = smul.u32 16, %s15
      $region32: #{encoder_layer1_forward.4} parent=27 // pred_fallthru
        _
      // Predicated region
      $region33: #{encoder_layer1_forward.4} parent=27 // pred_check
        %p1724 = pneg %p106
      $region34: #{encoder_layer1_forward.4} parent=27 // pred_check_branch
        %1726 = sbr.rel (%p1724) target = $region36
      $region35: #{encoder_layer1_forward.4} parent=27 // pred_region
        _
      $region36: #{encoder_layer1_forward.4} parent=27 // pred_fallthru
        _
    $region28: #{encoder_layer1_forward.4} parent=5 // pred_fallthru
      _
    %p1727 = scmp.le.s32.totalorder 2, %s10
    // Predicated region
    $region37: #{encoder_layer1_forward.4} parent=5 // pred_check
      %p1728 = pneg %p1727
    $region38: #{encoder_layer1_forward.4} parent=5 // pred_check_branch
      %1730 = sbr.rel (%p1728) target = $region40
    $region39: #{encoder_layer1_forward.4} parent=5 // pred_region
      %s1731 = ssub.s32 %s10, 2
      // Predicated region
      $region41: #{encoder_layer1_forward.4} parent=39 // pred_check
        %p1732 = pneg %p86
      $region42: #{encoder_layer1_forward.4} parent=39 // pred_check_branch
        %1734 = sbr.rel (%p1732) target = $region44
      $region43: #{encoder_layer1_forward.4} parent=39 // pred_region
        %s1735 = smul.u32 16, %s16
        %p1736 = scmp.lt.s32.totalorder %s1735, 31
        %s1737 = scalar_select %p1736, %s1735, 31
        %s1738 = smul.addr %s1737, 4
        %s1739 = scalar_lea.vmem %s2, %s1738
      $region44: #{encoder_layer1_forward.4} parent=39 // pred_fallthru
        _
      // Predicated region
      $region45: #{encoder_layer1_forward.4} parent=39 // pred_check
        %p1740 = pneg %p112
      $region46: #{encoder_layer1_forward.4} parent=39 // pred_check_branch
        %1742 = sbr.rel (%p1740) target = $region48
      $region47: #{encoder_layer1_forward.4} parent=39 // pred_region
        %p1743 = scmp.lt.s32.totalorder %s16, 1
        %s1744 = scalar_select %p1743, %s16, 1
        %s1745 = smul.addr %s1744, 2
        %s1746 = scalar_lea.vmem %s3, %s1745
      $region48: #{encoder_layer1_forward.4} parent=39 // pred_fallthru
        _
    $region40: #{encoder_layer1_forward.4} parent=5 // pred_fallthru
      _
  $region6: #{encoder_layer1_forward.4} parent=0 // loop_footer
    %s14 = sadd.s32 1, %s10
  $region7: #{encoder_layer1_forward.4} parent=0 // loop_footer_branch
    %9 = sbr.rel target = $region3
  $region8: #{encoder_layer1_forward.4} parent=0 // loop_exit
    _

</llo_original>
